<compile_context>
chip_gen: v6e
topology: v6e:2x2x1
jax: 0.10.0
libtpu: 0.0.40
codegen_flags: <defaults>
</compile_context>

<pallas_src>
import functools
import math

import jax
import jax.numpy as jnp
from jax.experimental import pallas as pl
from jax.experimental.pallas import tpu as pltpu

# ---- model hyper-parameters (small, consistent with the module) -------------
N_LAYERS = 2
HIDDEN = 32
NUM_HEADS = 4
INPUT_DIM = 2
OUTPUT_DIM = 1
DEPTH = (HIDDEN * 2) // NUM_HEADS          # per-head depth (= 16)
SCALE = DEPTH ** (-0.5)

PAD_IN = 8     # concat(x, y) feature dim zero-padded to 8 (exact: weights padded too)
OUT_PAD = 8    # eps head stored with 8 sublane rows; row 0 is the real output channel

INV_SQRT2 = 1.0 / math.sqrt(2.0)
INV_SQRT_L = 1.0 / math.sqrt(float(N_LAYERS))


# ---- exact (erf-based) GELU, matching torch.nn.GELU() default ---------------
def _erf(x):
    # Abramowitz & Stegun 7.1.26 polynomial, |abs err| < 1.5e-7 (close to f32 eps).
    # TODO(synk): lax.erf has no guaranteed Mosaic lowering; polynomial used instead.
    a1, a2, a3, a4, a5 = 0.254829592, -0.284496736, 1.421413741, -1.453152027, 1.061405429
    p = 0.3275911
    ax = jnp.abs(x)
    t = 1.0 / (1.0 + p * ax)
    poly = ((((a5 * t + a4) * t + a3) * t + a2) * t + a1) * t
    y = 1.0 - poly * jnp.exp(-ax * ax)
    return jnp.where(x < 0, -y, y)


def _gelu(x):
    return 0.5 * x * (1.0 + _erf(x * 0.7071067811865476))


# ---- timestep embedding (parameter-free glue, plain JAX) ---------------------
def timestep_embedding(t, embedding_dim, max_positions=10000):
    half_dim = embedding_dim // 2
    emb = jnp.log(jnp.float32(max_positions)) / (half_dim - 1)
    emb = jnp.exp(jnp.arange(half_dim, dtype=jnp.float32) * -emb)
    emb = t[:, None] * emb[None, :]
    emb = jnp.concatenate([jnp.sin(emb), jnp.cos(emb)], axis=1)
    if embedding_dim % 2 == 1:
        emb = jnp.pad(emb, ((0, 0), (0, 1)))
    return emb


# ---- the Pallas kernel: full forward pass for TB batch elements ---------------
def _attention_model_kernel(xcat_ref, temb_ref, Wx_ref, bx_ref, Wt_ref, bt_ref,
                            Wqkv_ref, bqkv_ref, Wf_ref, bf_ref,
                            We1_ref, be1_ref, We2t_ref, be2t_ref, out_ref,
                            *, n_real):
    f32 = jnp.float32
    TB, Np, _ = xcat_ref.shape
    M = TB * Np
    H2 = 2 * HIDDEN

    # x_dense + GELU on the flattened [TB*Np, *] slab (fills the MXU M dimension).
    x = xcat_ref[...].reshape(M, PAD_IN)
    s = _gelu(jnp.dot(x, Wx_ref[...], preferred_element_type=f32) + bx_ref[...])      # [M, H]
    temb = temb_ref[...].reshape(TB, HIDDEN)                                           # [TB, H]

    # t_dense for ALL layers in one matmul (hoisted out of the layer loop).
    tall = jnp.dot(temb, Wt_ref[...], preferred_element_type=f32) + bt_ref[...]        # [TB, L*H]

    skip = jnp.zeros((M, HIDDEN), f32)
    for l in range(N_LAYERS):
        tvec = tall[:, l * HIDDEN:(l + 1) * HIDDEN]                                    # [TB, H]
        yy = (s.reshape(TB, Np, HIDDEN) + tvec[:, None, :]).reshape(M, HIDDEN)         # [M, H]

        # fused QKV projection: one matmul + one full-width bias add
        qkv = jnp.dot(yy, Wqkv_ref[l], preferred_element_type=f32) + bqkv_ref[l]       # [M, 6H]
        q = qkv[:, 0:H2].reshape(TB, Np, H2)
        k = qkv[:, H2:2 * H2].reshape(TB, Np, H2)
        v = qkv[:, 2 * H2:3 * H2].reshape(TB, Np, H2)

        # multi-head attention; heads are contiguous column chunks of the 2H proj
        head_outs = []
        for h in range(NUM_HEADS):
            lo = h * DEPTH
            qh = q[:, :, lo:lo + DEPTH]
            kh = k[:, :, lo:lo + DEPTH]
            vh = v[:, :, lo:lo + DEPTH]
            sc = jnp.einsum('bnd,bmd->bnm', qh, kh, preferred_element_type=f32) * SCALE
            if n_real != Np:   # mask padded key positions (trace-time branch)
                key_id = jax.lax.broadcasted_iota(jnp.int32, sc.shape, 2)
                sc = jnp.where(key_id < n_real, sc, -1e30)
            sc = sc - jnp.max(sc, axis=-1, keepdims=True)
            e = jnp.exp(sc)
            # approximate reciprocal -> EUP slot (VALU is busy with the GELU poly)
            attn = e * pl.reciprocal(jnp.sum(e, axis=-1, keepdims=True), approx=True)
            head_outs.append(jnp.einsum('bnm,bmd->bnd', attn, vh,
                                        preferred_element_type=f32))                  # [TB,Np,D]
        oh = jnp.concatenate(head_outs, axis=-1).reshape(M, H2)                        # [M, 2H]

        # single full-width final projection, then split residual | skip columns
        proj = jnp.dot(oh, Wf_ref[l], preferred_element_type=f32) + bf_ref[l]          # [M, 2H]
        s = (s + _gelu(proj[:, 0:HIDDEN])) * INV_SQRT2
        skip = skip + _gelu(proj[:, HIDDEN:H2])

    eps = _gelu(jnp.dot(skip * INV_SQRT_L, We1_ref[...],
                        preferred_element_type=f32) + be1_ref[...])                    # [M, H]

    # lane-dense eps head: one [OUT_PAD, H] x [M, H]^T matmul; TB*Np stays on lanes
    et = jax.lax.dot_general(We2t_ref[...], eps, (((1,), (1,)), ((), ())),
                             preferred_element_type=f32) + be2t_ref[...]               # [OUT_PAD, M]
    out_ref[0] = et


# ---- parameter construction (deterministic, nn.Linear-style init) ------------
def _linear_init(key, fan_in, fan_out):
    kw, kb = jax.random.split(key)
    bound = 1.0 / math.sqrt(fan_in)
    W = jax.random.uniform(kw, (fan_in, fan_out), jnp.float32, -bound, bound)
    b = jax.random.uniform(kb, (1, fan_out), jnp.float32, -bound, bound)
    return W, b


def init_params(key):
    keys = iter(jax.random.split(key, 3 + 5 * N_LAYERS))
    p = {}
    p["Wx"], p["bx"] = _linear_init(next(keys), INPUT_DIM + OUTPUT_DIM, HIDDEN)
    stacks = {name: [] for name in ("Wt", "bt", "Wq", "bq", "Wk", "bk", "Wv", "bv", "Wf", "bf")}
    for _ in range(N_LAYERS):
        w, b = _linear_init(next(keys), HIDDEN, HIDDEN); stacks["Wt"].append(w); stacks["bt"].append(b)
        w, b = _linear_init(next(keys), HIDDEN, 2 * HIDDEN); stacks["Wq"].append(w); stacks["bq"].append(b)
        w, b = _linear_init(next(keys), HIDDEN, 2 * HIDDEN); stacks["Wk"].append(w); stacks["bk"].append(b)
        w, b = _linear_init(next(keys), HIDDEN, 2 * HIDDEN); stacks["Wv"].append(w); stacks["bv"].append(b)
        w, b = _linear_init(next(keys), 2 * HIDDEN, 2 * HIDDEN); stacks["Wf"].append(w); stacks["bf"].append(b)
    for name, lst in stacks.items():
        p[name] = jnp.stack(lst, axis=0)
    p["We1"], p["be1"] = _linear_init(next(keys), HIDDEN, HIDDEN)
    p["We2"], p["be2"] = _linear_init(next(keys), HIDDEN, OUTPUT_DIM)
    return p


def pack_params(p):
    """One-time packing of nn.Linear-style params into the kernel layout
    (hoisted out of the forward so it is not re-done on every step)."""
    packed = {}
    packed["Wx"] = jnp.pad(p["Wx"], ((0, PAD_IN - (INPUT_DIM + OUTPUT_DIM)), (0, 0)))   # [PAD_IN, H]
    packed["bx"] = p["bx"]                                                               # [1, H]
    packed["Wt"] = jnp.concatenate([p["Wt"][l] for l in range(N_LAYERS)], axis=-1)       # [H, L*H]
    packed["bt"] = jnp.concatenate([p["bt"][l] for l in range(N_LAYERS)], axis=-1)       # [1, L*H]
    packed["Wqkv"] = jnp.concatenate([p["Wq"], p["Wk"], p["Wv"]], axis=-1)               # [L, H, 6H]
    packed["bqkv"] = jnp.concatenate([p["bq"], p["bk"], p["bv"]], axis=-1)               # [L, 1, 6H]
    packed["Wf"], packed["bf"] = p["Wf"], p["bf"]                                        # [L,2H,2H],[L,1,2H]
    packed["We1"], packed["be1"] = p["We1"], p["be1"]                                    # [H,H],[1,H]
    packed["We2t"] = jnp.pad(p["We2"].T, ((0, OUT_PAD - OUTPUT_DIM), (0, 0)))            # [OUT_PAD, H]
    packed["be2t"] = jnp.pad(p["be2"].T, ((0, OUT_PAD - OUTPUT_DIM), (0, 0)))            # [OUT_PAD, 1]
    return packed


# ---- batch-tile selection ------------------------------------------------------
def _num_tensorcores_per_chip():
    # v5e / v6e expose 1 TensorCore per chip; only v7-class chips have 2.
    try:
        kind = jax.devices()[0].device_kind.lower()
    except Exception:  # pragma: no cover - defensive default
        return 1
    return 2 if "v7" in kind else 1


def _pick_tb(B, N):
    """TB batch elements per grid step.  Single-TC chips (v5e/v6e): as few grid
    steps as possible (ideally grid=(1,)), bounded by an MXU-M target and a VMEM
    cap on the live [N,N] score tensors.  2-TC chips: keep an even >=2-way split
    so both TensorCores get equal work."""
    ncores = _num_tensorcores_per_chip()
    rows_cap = max(1, 512 // max(N, 1))                       # TB*N ~ 256-512 rows
    vmem_cap = max(1, (8 << 20) // max(16 * N * N, 1))        # ~8 MiB of live score f32s
    tb_max = max(1, min(B, rows_cap, vmem_cap))
    if ncores > 1 and B >= 2:
        tb_max = min(tb_max, max(1, B // ncores))             # >= ncores grid steps
    divisors = [c for c in range(1, tb_max + 1) if B % c == 0]
    if ncores > 1:
        even = [c for c in divisors if (B // c) % ncores == 0]
        if even:
            return max(even)
    return max(divisors)


# ---- wrapper ------------------------------------------------------------------
def new_attention_model_forward(packed, x, y, t, mask=None):
    del mask                                           # reference model deletes mask too
    B, N, _ = x.shape
    Np = ((N + 7) // 8) * 8                            # keep reshapes inside (8,128) tiles
    xcat = jnp.concatenate([x, y], axis=-1).astype(jnp.float32)        # [B, N, din+dout]
    din = xcat.shape[-1]
    xcat = jnp.pad(xcat, ((0, 0), (0, Np - N), (0, PAD_IN - din)))      # zero-pad tokens+features
    temb = timestep_embedding(t.astype(jnp.float32), HIDDEN)[:, None, :]  # [B, 1, H]

    TB = _pick_tb(B, Np)
    G = B // TB
    M = TB * Np

    kernel = functools.partial(_attention_model_kernel, n_real=N)
    args = (xcat, temb, packed["Wx"], packed["bx"], packed["Wt"], packed["bt"],
            packed["Wqkv"], packed["bqkv"], packed["Wf"], packed["bf"],
            packed["We1"], packed["be1"], packed["We2t"], packed["be2t"])

    def full_spec(a):
        nd = a.ndim
        return pl.BlockSpec(a.shape, lambda b, nd=nd: (0,) * nd)

    in_specs = [
        pl.BlockSpec((TB, Np, PAD_IN), lambda b: (b, 0, 0)),
        pl.BlockSpec((TB, 1, HIDDEN), lambda b: (b, 0, 0)),
    ] + [full_spec(a) for a in args[2:]]

    out = pl.pallas_call(
        kernel,
        out_shape=jax.ShapeDtypeStruct((G, OUT_PAD, M), jnp.float32),
        grid=(G,),
        in_specs=in_specs,
        out_specs=pl.BlockSpec((1, OUT_PAD, M), lambda b: (b, 0, 0)),
        compiler_params=pltpu.CompilerParams(dimension_semantics=("parallel",)),
    )(*args)

    # row 0 holds the real OUTPUT_DIM=1 channel; back to [B, N, OUTPUT_DIM]
    eps = out[:, 0, :].reshape(G, TB, Np)[:, :, :N].reshape(B, N, OUTPUT_DIM)
    return eps


# ---- pure-JAX reference (same math, used only for the correctness check) ------
def _reference_forward(params, x, y, t):
    xcat = jnp.concatenate([x, y], axis=-1).astype(jnp.float32)
    s = _gelu(xcat @ params["Wx"] + params["bx"])
    temb = timestep_embedding(t, HIDDEN)
    skip = jnp.zeros(s.shape[:2] + (HIDDEN,), jnp.float32)
    for l in range(N_LAYERS):
        tv = temb @ params["Wt"][l] + params["bt"][l]
        yy = s + tv[:, None, :]
        q = yy @ params["Wq"][l] + params["bq"][l]
        k = yy @ params["Wk"][l] + params["bk"][l]
        v = yy @ params["Wv"][l] + params["bv"][l]
        B_, N_, _ = q.shape
        split = lambda a: a.reshape(B_, N_, NUM_HEADS, DEPTH).transpose(0, 2, 1, 3)
        qh, kh, vh = split(q), split(k), split(v)
        sc = jnp.einsum('bhnd,bhmd->bhnm', qh, kh) * SCALE
        attn = jax.nn.softmax(sc, axis=-1)
        oh = jnp.einsum('bhnm,bhmd->bhnd', attn, vh)
        oh = oh.transpose(0, 2, 1, 3).reshape(B_, N_, NUM_HEADS * DEPTH)
        proj = oh @ params["Wf"][l] + params["bf"][l]
        s = (s + _gelu(proj[..., :HIDDEN])) * INV_SQRT2
        skip = skip + _gelu(proj[..., HIDDEN:])
    eps = skip * INV_SQRT_L
    eps = _gelu(eps @ params["We1"] + params["be1"])
    return eps @ params["We2"] + params["be2"]


if __name__ == "__main__":
    key = jax.random.PRNGKey(0)
    kp, kx, ky, kt = jax.random.split(key, 4)
    params = init_params(kp)
    packed = pack_params(params)

    B, N = 2, 8
    x = jax.random.normal(kx, (B, N, INPUT_DIM), dtype=jnp.float32)
    y = jax.random.normal(ky, (B, N, OUTPUT_DIM), dtype=jnp.float32)
    t = jax.random.uniform(kt, (B,), dtype=jnp.float32, minval=0.0, maxval=1.0)

    fwd = jax.jit(new_attention_model_forward)
    eps = jax.block_until_ready(fwd(packed, x, y, t, mask=None))
    assert eps.shape == (B, N, OUTPUT_DIM), eps.shape
    assert bool(jnp.all(jnp.isfinite(eps)))

    ref = _reference_forward(params, x, y, t)
    err = float(jnp.max(jnp.abs(eps - ref)))
    # approx-reciprocal softmax denominator (rel err ~2e-4) -> allow 3e-3 abs
    assert err < 3e-3, err

    print("KERNEL_OK")
</pallas_src>

<mosaic_0001>
module attributes {stable_mosaic.version = 11 : i64} {
  func.func @_attention_model_kernel(%arg0: i32, %arg1: memref<2x8x8xf32, #tpu.memory_space<vmem>>, %arg2: memref<2x1x32xf32, #tpu.memory_space<vmem>>, %arg3: memref<8x32xf32, #tpu.memory_space<vmem>>, %arg4: memref<1x32xf32, #tpu.memory_space<vmem>>, %arg5: memref<32x64xf32, #tpu.memory_space<vmem>>, %arg6: memref<1x64xf32, #tpu.memory_space<vmem>>, %arg7: memref<2x32x192xf32, #tpu.memory_space<vmem>>, %arg8: memref<2x1x192xf32, #tpu.memory_space<vmem>>, %arg9: memref<2x64x64xf32, #tpu.memory_space<vmem>>, %arg10: memref<2x1x64xf32, #tpu.memory_space<vmem>>, %arg11: memref<32x32xf32, #tpu.memory_space<vmem>>, %arg12: memref<1x32xf32, #tpu.memory_space<vmem>>, %arg13: memref<8x32xf32, #tpu.memory_space<vmem>>, %arg14: memref<8x1xf32, #tpu.memory_space<vmem>>, %arg15: memref<1x8x16xf32, #tpu.memory_space<vmem>>) attributes {dimension_semantics = [#tpu.dimension_semantics<parallel>], iteration_bounds = array<i64: 1>, scalar_prefetch = 0 : i64, scratch_operands = 0 : i64, tpu.core_type = #tpu.core_type<tc>, window_params = [{transform_indices = @transform_0, window_bounds = array<i64: 2, 8, 8>}, {transform_indices = @transform_1, window_bounds = array<i64: 2, 1, 32>}, {pipeline_mode = #tpu.pipeline_mode<synchronous>, transform_indices = @transform_2, window_bounds = array<i64: 8, 32>}, {pipeline_mode = #tpu.pipeline_mode<synchronous>, transform_indices = @transform_3, window_bounds = array<i64: 1, 32>}, {pipeline_mode = #tpu.pipeline_mode<synchronous>, transform_indices = @transform_4, window_bounds = array<i64: 32, 64>}, {pipeline_mode = #tpu.pipeline_mode<synchronous>, transform_indices = @transform_5, window_bounds = array<i64: 1, 64>}, {pipeline_mode = #tpu.pipeline_mode<synchronous>, transform_indices = @transform_6, window_bounds = array<i64: 2, 32, 192>}, {pipeline_mode = #tpu.pipeline_mode<synchronous>, transform_indices = @transform_7, window_bounds = array<i64: 2, 1, 192>}, {pipeline_mode = #tpu.pipeline_mode<synchronous>, transform_indices = @transform_8, window_bounds = array<i64: 2, 64, 64>}, {pipeline_mode = #tpu.pipeline_mode<synchronous>, transform_indices = @transform_9, window_bounds = array<i64: 2, 1, 64>}, {pipeline_mode = #tpu.pipeline_mode<synchronous>, transform_indices = @transform_10, window_bounds = array<i64: 32, 32>}, {pipeline_mode = #tpu.pipeline_mode<synchronous>, transform_indices = @transform_11, window_bounds = array<i64: 1, 32>}, {pipeline_mode = #tpu.pipeline_mode<synchronous>, transform_indices = @transform_12, window_bounds = array<i64: 8, 32>}, {pipeline_mode = #tpu.pipeline_mode<synchronous>, transform_indices = @transform_13, window_bounds = array<i64: 8, 1>}, {transform_indices = @transform_14, window_bounds = array<i64: 1, 8, 16>}]} {
    %c0 = arith.constant 0 : index
    %c0_0 = arith.constant 0 : index
    %c0_1 = arith.constant 0 : index
    %0 = vector.load %arg1[%c0, %c0_0, %c0_1] : memref<2x8x8xf32, #tpu.memory_space<vmem>>, vector<2x8x8xf32>
    %1 = vector.shape_cast %0 : vector<2x8x8xf32> to vector<16x8xf32>
    %c0_2 = arith.constant 0 : index
    %c0_3 = arith.constant 0 : index
    %2 = vector.load %arg3[%c0_2, %c0_3] : memref<8x32xf32, #tpu.memory_space<vmem>>, vector<8x32xf32>
    %cst = arith.constant dense<0.000000e+00> : vector<16x32xf32>
    %3 = tpu.matmul %1, %2, %cst {dimension_numbers = #tpu.dot_dimension_numbers<[1], [0], [0], [1], [0, 0, 1, 1], [], []>} : vector<16x8xf32>, vector<8x32xf32>, vector<16x32xf32> -> vector<16x32xf32>
    %c0_4 = arith.constant 0 : index
    %c0_5 = arith.constant 0 : index
    %4 = vector.load %arg4[%c0_4, %c0_5] : memref<1x32xf32, #tpu.memory_space<vmem>>, vector<1x32xf32>
    %5 = vector.broadcast %4 : vector<1x32xf32> to vector<16x32xf32>
    %6 = arith.addf %3, %5 : vector<16x32xf32>
    %cst_6 = arith.constant 5.000000e-01 : f32
    %7 = vector.broadcast %cst_6 : f32 to vector<16x32xf32>
    %8 = arith.mulf %7, %6 : vector<16x32xf32>
    %cst_7 = arith.constant 0.707106769 : f32
    %9 = vector.broadcast %cst_7 : f32 to vector<16x32xf32>
    %10 = arith.mulf %6, %9 : vector<16x32xf32>
    %11 = math.absf %10 : vector<16x32xf32>
    %cst_8 = arith.constant 0.327591091 : f32
    %12 = vector.broadcast %cst_8 : f32 to vector<16x32xf32>
    %13 = arith.mulf %12, %11 : vector<16x32xf32>
    %cst_9 = arith.constant 1.000000e+00 : f32
    %14 = vector.broadcast %cst_9 : f32 to vector<16x32xf32>
    %15 = arith.addf %14, %13 : vector<16x32xf32>
    %cst_10 = arith.constant 1.000000e+00 : f32
    %16 = vector.broadcast %cst_10 : f32 to vector<16x32xf32>
    %17 = arith.divf %16, %15 : vector<16x32xf32>
    %cst_11 = arith.constant 1.06140542 : f32
    %18 = vector.broadcast %cst_11 : f32 to vector<16x32xf32>
    %19 = arith.mulf %18, %17 : vector<16x32xf32>
    %cst_12 = arith.constant -1.45315206 : f32
    %20 = vector.broadcast %cst_12 : f32 to vector<16x32xf32>
    %21 = arith.addf %19, %20 : vector<16x32xf32>
    %22 = arith.mulf %21, %17 : vector<16x32xf32>
    %cst_13 = arith.constant 1.42141378 : f32
    %23 = vector.broadcast %cst_13 : f32 to vector<16x32xf32>
    %24 = arith.addf %22, %23 : vector<16x32xf32>
    %25 = arith.mulf %24, %17 : vector<16x32xf32>
    %cst_14 = arith.constant -0.284496725 : f32
    %26 = vector.broadcast %cst_14 : f32 to vector<16x32xf32>
    %27 = arith.addf %25, %26 : vector<16x32xf32>
    %28 = arith.mulf %27, %17 : vector<16x32xf32>
    %cst_15 = arith.constant 0.254829586 : f32
    %29 = vector.broadcast %cst_15 : f32 to vector<16x32xf32>
    %30 = arith.addf %28, %29 : vector<16x32xf32>
    %31 = arith.mulf %30, %17 : vector<16x32xf32>
    %cst_16 = arith.constant 0.000000e+00 : f32
    %32 = vector.broadcast %cst_16 : f32 to vector<16x32xf32>
    %33 = arith.subf %32, %11 : vector<16x32xf32>
    %34 = arith.mulf %33, %11 : vector<16x32xf32>
    %35 = math.exp %34 : vector<16x32xf32>
    %36 = arith.mulf %31, %35 : vector<16x32xf32>
    %cst_17 = arith.constant 1.000000e+00 : f32
    %37 = vector.broadcast %cst_17 : f32 to vector<16x32xf32>
    %38 = arith.subf %37, %36 : vector<16x32xf32>
    %cst_18 = arith.constant 0.000000e+00 : f32
    %39 = vector.broadcast %cst_18 : f32 to vector<16x32xf32>
    %40 = arith.cmpf olt, %10, %39 : vector<16x32xf32>
    %cst_19 = arith.constant 0.000000e+00 : f32
    %41 = vector.broadcast %cst_19 : f32 to vector<16x32xf32>
    %42 = arith.subf %41, %38 : vector<16x32xf32>
    %43 = arith.select %40, %42, %38 : vector<16x32xi1>, vector<16x32xf32>
    %cst_20 = arith.constant 1.000000e+00 : f32
    %44 = vector.broadcast %cst_20 : f32 to vector<16x32xf32>
    %45 = arith.addf %44, %43 : vector<16x32xf32>
    %46 = arith.mulf %8, %45 : vector<16x32xf32>
    %c0_21 = arith.constant 0 : index
    %c0_22 = arith.constant 0 : index
    %c0_23 = arith.constant 0 : index
    %47 = vector.load %arg2[%c0_21, %c0_22, %c0_23] : memref<2x1x32xf32, #tpu.memory_space<vmem>>, vector<2x1x32xf32>
    %48 = vector.shape_cast %47 : vector<2x1x32xf32> to vector<2x32xf32>
    %c0_24 = arith.constant 0 : index
    %c0_25 = arith.constant 0 : index
    %49 = vector.load %arg5[%c0_24, %c0_25] : memref<32x64xf32, #tpu.memory_space<vmem>>, vector<32x64xf32>
    %cst_26 = arith.constant dense<0.000000e+00> : vector<2x64xf32>
    %50 = tpu.matmul %48, %49, %cst_26 {dimension_numbers = #tpu.dot_dimension_numbers<[1], [0], [0], [1], [0, 0, 1, 1], [], []>} : vector<2x32xf32>, vector<32x64xf32>, vector<2x64xf32> -> vector<2x64xf32>
    %c0_27 = arith.constant 0 : index
    %c0_28 = arith.constant 0 : index
    %51 = vector.load %arg6[%c0_27, %c0_28] : memref<1x64xf32, #tpu.memory_space<vmem>>, vector<1x64xf32>
    %52 = vector.broadcast %51 : vector<1x64xf32> to vector<2x64xf32>
    %53 = arith.addf %50, %52 : vector<2x64xf32>
    %cst_29 = arith.constant 0.000000e+00 : f32
    %54 = vector.broadcast %cst_29 : f32 to vector<16x32xf32>
    %55 = vector.extract_strided_slice %53 {offsets = [0, 0], sizes = [2, 32], strides = [1, 1]} : vector<2x64xf32> to vector<2x32xf32>
    %56 = vector.shape_cast %46 : vector<16x32xf32> to vector<2x8x32xf32>
    %57 = vector.shape_cast %55 : vector<2x32xf32> to vector<2x1x32xf32>
    %58 = vector.broadcast %57 : vector<2x1x32xf32> to vector<2x8x32xf32>
    %59 = arith.addf %56, %58 : vector<2x8x32xf32>
    %60 = vector.shape_cast %59 : vector<2x8x32xf32> to vector<16x32xf32>
    %c0_30 = arith.constant 0 : index
    %c0_31 = arith.constant 0 : index
    %c0_32 = arith.constant 0 : index
    %61 = vector.load %arg7[%c0_30, %c0_31, %c0_32] : memref<2x32x192xf32, #tpu.memory_space<vmem>>, vector<1x32x192xf32>
    %62 = vector.shape_cast %61 : vector<1x32x192xf32> to vector<32x192xf32>
    %cst_33 = arith.constant dense<0.000000e+00> : vector<16x192xf32>
    %63 = tpu.matmul %60, %62, %cst_33 {dimension_numbers = #tpu.dot_dimension_numbers<[1], [0], [0], [1], [0, 0, 1, 1], [], []>} : vector<16x32xf32>, vector<32x192xf32>, vector<16x192xf32> -> vector<16x192xf32>
    %c0_34 = arith.constant 0 : index
    %c0_35 = arith.constant 0 : index
    %c0_36 = arith.constant 0 : index
    %64 = vector.load %arg8[%c0_34, %c0_35, %c0_36] : memref<2x1x192xf32, #tpu.memory_space<vmem>>, vector<1x1x192xf32>
    %65 = vector.shape_cast %64 : vector<1x1x192xf32> to vector<1x192xf32>
    %66 = vector.broadcast %65 : vector<1x192xf32> to vector<16x192xf32>
    %67 = arith.addf %63, %66 : vector<16x192xf32>
    %68 = vector.extract_strided_slice %67 {offsets = [0, 0], sizes = [16, 64], strides = [1, 1]} : vector<16x192xf32> to vector<16x64xf32>
    %69 = vector.shape_cast %68 : vector<16x64xf32> to vector<2x8x64xf32>
    %70 = vector.extract_strided_slice %67 {offsets = [0, 64], sizes = [16, 64], strides = [1, 1]} : vector<16x192xf32> to vector<16x64xf32>
    %71 = vector.shape_cast %70 : vector<16x64xf32> to vector<2x8x64xf32>
    %72 = vector.extract_strided_slice %67 {offsets = [0, 128], sizes = [16, 64], strides = [1, 1]} : vector<16x192xf32> to vector<16x64xf32>
    %73 = vector.shape_cast %72 : vector<16x64xf32> to vector<2x8x64xf32>
    %74 = vector.extract_strided_slice %69 {offsets = [0, 0, 0], sizes = [2, 8, 16], strides = [1, 1, 1]} : vector<2x8x64xf32> to vector<2x8x16xf32>
    %75 = vector.extract_strided_slice %71 {offsets = [0, 0, 0], sizes = [2, 8, 16], strides = [1, 1, 1]} : vector<2x8x64xf32> to vector<2x8x16xf32>
    %76 = vector.extract_strided_slice %73 {offsets = [0, 0, 0], sizes = [2, 8, 16], strides = [1, 1, 1]} : vector<2x8x64xf32> to vector<2x8x16xf32>
    "tpu.trace_start"() <{level = 10 : i32, message = "bnd,bmd->bnm"}> : () -> ()
    %cst_37 = arith.constant dense<0.000000e+00> : vector<2x8x8xf32>
    %77 = tpu.matmul %74, %75, %cst_37 {dimension_numbers = #tpu.dot_dimension_numbers<[2], [2], [1], [1], [0, 0, 0, 1, 1, 1], [0], [0]>} : vector<2x8x16xf32>, vector<2x8x16xf32>, vector<2x8x8xf32> -> vector<2x8x8xf32>
    "tpu.trace_stop"() : () -> ()
    %cst_38 = arith.constant 2.500000e-01 : f32
    %78 = vector.broadcast %cst_38 : f32 to vector<2x8x8xf32>
    %79 = arith.mulf %77, %78 : vector<2x8x8xf32>
    %cst_39 = arith.constant dense<0xFF800000> : vector<2x8xf32>
    %80 = vector.multi_reduction <maximumf>, %79, %cst_39 [2] : vector<2x8x8xf32> to vector<2x8xf32>
    %81 = vector.shape_cast %80 : vector<2x8xf32> to vector<2x8x1xf32>
    %82 = vector.broadcast %81 : vector<2x8x1xf32> to vector<2x8x8xf32>
    %83 = arith.subf %79, %82 : vector<2x8x8xf32>
    %84 = math.exp %83 : vector<2x8x8xf32>
    %cst_40 = arith.constant dense<0.000000e+00> : vector<2x8xf32>
    %85 = vector.multi_reduction <add>, %84, %cst_40 [2] : vector<2x8x8xf32> to vector<2x8xf32>
    %86 = vector.shape_cast %85 : vector<2x8xf32> to vector<2x8x1xf32>
    %87 = tpu.reciprocal %86 {approx = true} : vector<2x8x1xf32> -> vector<2x8x1xf32>
    %88 = vector.broadcast %87 : vector<2x8x1xf32> to vector<2x8x8xf32>
    %89 = arith.mulf %84, %88 : vector<2x8x8xf32>
    "tpu.trace_start"() <{level = 10 : i32, message = "bnm,bmd->bnd"}> : () -> ()
    %cst_41 = arith.constant dense<0.000000e+00> : vector<2x8x16xf32>
    %90 = tpu.matmul %89, %76, %cst_41 {dimension_numbers = #tpu.dot_dimension_numbers<[2], [1], [1], [2], [0, 0, 0, 1, 1, 2], [0], [0]>} : vector<2x8x8xf32>, vector<2x8x16xf32>, vector<2x8x16xf32> -> vector<2x8x16xf32>
    "tpu.trace_stop"() : () -> ()
    %91 = vector.extract_strided_slice %69 {offsets = [0, 0, 16], sizes = [2, 8, 16], strides = [1, 1, 1]} : vector<2x8x64xf32> to vector<2x8x16xf32>
    %92 = vector.extract_strided_slice %71 {offsets = [0, 0, 16], sizes = [2, 8, 16], strides = [1, 1, 1]} : vector<2x8x64xf32> to vector<2x8x16xf32>
    %93 = vector.extract_strided_slice %73 {offsets = [0, 0, 16], sizes = [2, 8, 16], strides = [1, 1, 1]} : vector<2x8x64xf32> to vector<2x8x16xf32>
    "tpu.trace_start"() <{level = 10 : i32, message = "bnd,bmd->bnm"}> : () -> ()
    %cst_42 = arith.constant dense<0.000000e+00> : vector<2x8x8xf32>
    %94 = tpu.matmul %91, %92, %cst_42 {dimension_numbers = #tpu.dot_dimension_numbers<[2], [2], [1], [1], [0, 0, 0, 1, 1, 1], [0], [0]>} : vector<2x8x16xf32>, vector<2x8x16xf32>, vector<2x8x8xf32> -> vector<2x8x8xf32>
    "tpu.trace_stop"() : () -> ()
    %cst_43 = arith.constant 2.500000e-01 : f32
    %95 = vector.broadcast %cst_43 : f32 to vector<2x8x8xf32>
    %96 = arith.mulf %94, %95 : vector<2x8x8xf32>
    %cst_44 = arith.constant dense<0xFF800000> : vector<2x8xf32>
    %97 = vector.multi_reduction <maximumf>, %96, %cst_44 [2] : vector<2x8x8xf32> to vector<2x8xf32>
    %98 = vector.shape_cast %97 : vector<2x8xf32> to vector<2x8x1xf32>
    %99 = vector.broadcast %98 : vector<2x8x1xf32> to vector<2x8x8xf32>
    %100 = arith.subf %96, %99 : vector<2x8x8xf32>
    %101 = math.exp %100 : vector<2x8x8xf32>
    %cst_45 = arith.constant dense<0.000000e+00> : vector<2x8xf32>
    %102 = vector.multi_reduction <add>, %101, %cst_45 [2] : vector<2x8x8xf32> to vector<2x8xf32>
    %103 = vector.shape_cast %102 : vector<2x8xf32> to vector<2x8x1xf32>
    %104 = tpu.reciprocal %103 {approx = true} : vector<2x8x1xf32> -> vector<2x8x1xf32>
    %105 = vector.broadcast %104 : vector<2x8x1xf32> to vector<2x8x8xf32>
    %106 = arith.mulf %101, %105 : vector<2x8x8xf32>
    "tpu.trace_start"() <{level = 10 : i32, message = "bnm,bmd->bnd"}> : () -> ()
    %cst_46 = arith.constant dense<0.000000e+00> : vector<2x8x16xf32>
    %107 = tpu.matmul %106, %93, %cst_46 {dimension_numbers = #tpu.dot_dimension_numbers<[2], [1], [1], [2], [0, 0, 0, 1, 1, 2], [0], [0]>} : vector<2x8x8xf32>, vector<2x8x16xf32>, vector<2x8x16xf32> -> vector<2x8x16xf32>
    "tpu.trace_stop"() : () -> ()
    %108 = vector.extract_strided_slice %69 {offsets = [0, 0, 32], sizes = [2, 8, 16], strides = [1, 1, 1]} : vector<2x8x64xf32> to vector<2x8x16xf32>
    %109 = vector.extract_strided_slice %71 {offsets = [0, 0, 32], sizes = [2, 8, 16], strides = [1, 1, 1]} : vector<2x8x64xf32> to vector<2x8x16xf32>
    %110 = vector.extract_strided_slice %73 {offsets = [0, 0, 32], sizes = [2, 8, 16], strides = [1, 1, 1]} : vector<2x8x64xf32> to vector<2x8x16xf32>
    "tpu.trace_start"() <{level = 10 : i32, message = "bnd,bmd->bnm"}> : () -> ()
    %cst_47 = arith.constant dense<0.000000e+00> : vector<2x8x8xf32>
    %111 = tpu.matmul %108, %109, %cst_47 {dimension_numbers = #tpu.dot_dimension_numbers<[2], [2], [1], [1], [0, 0, 0, 1, 1, 1], [0], [0]>} : vector<2x8x16xf32>, vector<2x8x16xf32>, vector<2x8x8xf32> -> vector<2x8x8xf32>
    "tpu.trace_stop"() : () -> ()
    %cst_48 = arith.constant 2.500000e-01 : f32
    %112 = vector.broadcast %cst_48 : f32 to vector<2x8x8xf32>
    %113 = arith.mulf %111, %112 : vector<2x8x8xf32>
    %cst_49 = arith.constant dense<0xFF800000> : vector<2x8xf32>
    %114 = vector.multi_reduction <maximumf>, %113, %cst_49 [2] : vector<2x8x8xf32> to vector<2x8xf32>
    %115 = vector.shape_cast %114 : vector<2x8xf32> to vector<2x8x1xf32>
    %116 = vector.broadcast %115 : vector<2x8x1xf32> to vector<2x8x8xf32>
    %117 = arith.subf %113, %116 : vector<2x8x8xf32>
    %118 = math.exp %117 : vector<2x8x8xf32>
    %cst_50 = arith.constant dense<0.000000e+00> : vector<2x8xf32>
    %119 = vector.multi_reduction <add>, %118, %cst_50 [2] : vector<2x8x8xf32> to vector<2x8xf32>
    %120 = vector.shape_cast %119 : vector<2x8xf32> to vector<2x8x1xf32>
    %121 = tpu.reciprocal %120 {approx = true} : vector<2x8x1xf32> -> vector<2x8x1xf32>
    %122 = vector.broadcast %121 : vector<2x8x1xf32> to vector<2x8x8xf32>
    %123 = arith.mulf %118, %122 : vector<2x8x8xf32>
    "tpu.trace_start"() <{level = 10 : i32, message = "bnm,bmd->bnd"}> : () -> ()
    %cst_51 = arith.constant dense<0.000000e+00> : vector<2x8x16xf32>
    %124 = tpu.matmul %123, %110, %cst_51 {dimension_numbers = #tpu.dot_dimension_numbers<[2], [1], [1], [2], [0, 0, 0, 1, 1, 2], [0], [0]>} : vector<2x8x8xf32>, vector<2x8x16xf32>, vector<2x8x16xf32> -> vector<2x8x16xf32>
    "tpu.trace_stop"() : () -> ()
    %125 = vector.extract_strided_slice %69 {offsets = [0, 0, 48], sizes = [2, 8, 16], strides = [1, 1, 1]} : vector<2x8x64xf32> to vector<2x8x16xf32>
    %126 = vector.extract_strided_slice %71 {offsets = [0, 0, 48], sizes = [2, 8, 16], strides = [1, 1, 1]} : vector<2x8x64xf32> to vector<2x8x16xf32>
    %127 = vector.extract_strided_slice %73 {offsets = [0, 0, 48], sizes = [2, 8, 16], strides = [1, 1, 1]} : vector<2x8x64xf32> to vector<2x8x16xf32>
    "tpu.trace_start"() <{level = 10 : i32, message = "bnd,bmd->bnm"}> : () -> ()
    %cst_52 = arith.constant dense<0.000000e+00> : vector<2x8x8xf32>
    %128 = tpu.matmul %125, %126, %cst_52 {dimension_numbers = #tpu.dot_dimension_numbers<[2], [2], [1], [1], [0, 0, 0, 1, 1, 1], [0], [0]>} : vector<2x8x16xf32>, vector<2x8x16xf32>, vector<2x8x8xf32> -> vector<2x8x8xf32>
    "tpu.trace_stop"() : () -> ()
    %cst_53 = arith.constant 2.500000e-01 : f32
    %129 = vector.broadcast %cst_53 : f32 to vector<2x8x8xf32>
    %130 = arith.mulf %128, %129 : vector<2x8x8xf32>
    %cst_54 = arith.constant dense<0xFF800000> : vector<2x8xf32>
    %131 = vector.multi_reduction <maximumf>, %130, %cst_54 [2] : vector<2x8x8xf32> to vector<2x8xf32>
    %132 = vector.shape_cast %131 : vector<2x8xf32> to vector<2x8x1xf32>
    %133 = vector.broadcast %132 : vector<2x8x1xf32> to vector<2x8x8xf32>
    %134 = arith.subf %130, %133 : vector<2x8x8xf32>
    %135 = math.exp %134 : vector<2x8x8xf32>
    %cst_55 = arith.constant dense<0.000000e+00> : vector<2x8xf32>
    %136 = vector.multi_reduction <add>, %135, %cst_55 [2] : vector<2x8x8xf32> to vector<2x8xf32>
    %137 = vector.shape_cast %136 : vector<2x8xf32> to vector<2x8x1xf32>
    %138 = tpu.reciprocal %137 {approx = true} : vector<2x8x1xf32> -> vector<2x8x1xf32>
    %139 = vector.broadcast %138 : vector<2x8x1xf32> to vector<2x8x8xf32>
    %140 = arith.mulf %135, %139 : vector<2x8x8xf32>
    "tpu.trace_start"() <{level = 10 : i32, message = "bnm,bmd->bnd"}> : () -> ()
    %cst_56 = arith.constant dense<0.000000e+00> : vector<2x8x16xf32>
    %141 = tpu.matmul %140, %127, %cst_56 {dimension_numbers = #tpu.dot_dimension_numbers<[2], [1], [1], [2], [0, 0, 0, 1, 1, 2], [0], [0]>} : vector<2x8x8xf32>, vector<2x8x16xf32>, vector<2x8x16xf32> -> vector<2x8x16xf32>
    "tpu.trace_stop"() : () -> ()
    %142 = tpu.concatenate %90, %107, %124, %141 in 2 : vector<2x8x16xf32>, vector<2x8x16xf32>, vector<2x8x16xf32>, vector<2x8x16xf32> -> vector<2x8x64xf32>
    %143 = vector.shape_cast %142 : vector<2x8x64xf32> to vector<16x64xf32>
    %c0_57 = arith.constant 0 : index
    %c0_58 = arith.constant 0 : index
    %c0_59 = arith.constant 0 : index
    %144 = vector.load %arg9[%c0_57, %c0_58, %c0_59] : memref<2x64x64xf32, #tpu.memory_space<vmem>>, vector<1x64x64xf32>
    %145 = vector.shape_cast %144 : vector<1x64x64xf32> to vector<64x64xf32>
    %cst_60 = arith.constant dense<0.000000e+00> : vector<16x64xf32>
    %146 = tpu.matmul %143, %145, %cst_60 {dimension_numbers = #tpu.dot_dimension_numbers<[1], [0], [0], [1], [0, 0, 1, 1], [], []>} : vector<16x64xf32>, vector<64x64xf32>, vector<16x64xf32> -> vector<16x64xf32>
    %c0_61 = arith.constant 0 : index
    %c0_62 = arith.constant 0 : index
    %c0_63 = arith.constant 0 : index
    %147 = vector.load %arg10[%c0_61, %c0_62, %c0_63] : memref<2x1x64xf32, #tpu.memory_space<vmem>>, vector<1x1x64xf32>
    %148 = vector.shape_cast %147 : vector<1x1x64xf32> to vector<1x64xf32>
    %149 = vector.broadcast %148 : vector<1x64xf32> to vector<16x64xf32>
    %150 = arith.addf %146, %149 : vector<16x64xf32>
    %151 = vector.extract_strided_slice %150 {offsets = [0, 0], sizes = [16, 32], strides = [1, 1]} : vector<16x64xf32> to vector<16x32xf32>
    %cst_64 = arith.constant 5.000000e-01 : f32
    %152 = vector.broadcast %cst_64 : f32 to vector<16x32xf32>
    %153 = arith.mulf %152, %151 : vector<16x32xf32>
    %cst_65 = arith.constant 0.707106769 : f32
    %154 = vector.broadcast %cst_65 : f32 to vector<16x32xf32>
    %155 = arith.mulf %151, %154 : vector<16x32xf32>
    %156 = math.absf %155 : vector<16x32xf32>
    %cst_66 = arith.constant 0.327591091 : f32
    %157 = vector.broadcast %cst_66 : f32 to vector<16x32xf32>
    %158 = arith.mulf %157, %156 : vector<16x32xf32>
    %cst_67 = arith.constant 1.000000e+00 : f32
    %159 = vector.broadcast %cst_67 : f32 to vector<16x32xf32>
    %160 = arith.addf %159, %158 : vector<16x32xf32>
    %cst_68 = arith.constant 1.000000e+00 : f32
    %161 = vector.broadcast %cst_68 : f32 to vector<16x32xf32>
    %162 = arith.divf %161, %160 : vector<16x32xf32>
    %cst_69 = arith.constant 1.06140542 : f32
    %163 = vector.broadcast %cst_69 : f32 to vector<16x32xf32>
    %164 = arith.mulf %163, %162 : vector<16x32xf32>
    %cst_70 = arith.constant -1.45315206 : f32
    %165 = vector.broadcast %cst_70 : f32 to vector<16x32xf32>
    %166 = arith.addf %164, %165 : vector<16x32xf32>
    %167 = arith.mulf %166, %162 : vector<16x32xf32>
    %cst_71 = arith.constant 1.42141378 : f32
    %168 = vector.broadcast %cst_71 : f32 to vector<16x32xf32>
    %169 = arith.addf %167, %168 : vector<16x32xf32>
    %170 = arith.mulf %169, %162 : vector<16x32xf32>
    %cst_72 = arith.constant -0.284496725 : f32
    %171 = vector.broadcast %cst_72 : f32 to vector<16x32xf32>
    %172 = arith.addf %170, %171 : vector<16x32xf32>
    %173 = arith.mulf %172, %162 : vector<16x32xf32>
    %cst_73 = arith.constant 0.254829586 : f32
    %174 = vector.broadcast %cst_73 : f32 to vector<16x32xf32>
    %175 = arith.addf %173, %174 : vector<16x32xf32>
    %176 = arith.mulf %175, %162 : vector<16x32xf32>
    %cst_74 = arith.constant 0.000000e+00 : f32
    %177 = vector.broadcast %cst_74 : f32 to vector<16x32xf32>
    %178 = arith.subf %177, %156 : vector<16x32xf32>
    %179 = arith.mulf %178, %156 : vector<16x32xf32>
    %180 = math.exp %179 : vector<16x32xf32>
    %181 = arith.mulf %176, %180 : vector<16x32xf32>
    %cst_75 = arith.constant 1.000000e+00 : f32
    %182 = vector.broadcast %cst_75 : f32 to vector<16x32xf32>
    %183 = arith.subf %182, %181 : vector<16x32xf32>
    %cst_76 = arith.constant 0.000000e+00 : f32
    %184 = vector.broadcast %cst_76 : f32 to vector<16x32xf32>
    %185 = arith.cmpf olt, %155, %184 : vector<16x32xf32>
    %cst_77 = arith.constant 0.000000e+00 : f32
    %186 = vector.broadcast %cst_77 : f32 to vector<16x32xf32>
    %187 = arith.subf %186, %183 : vector<16x32xf32>
    %188 = arith.select %185, %187, %183 : vector<16x32xi1>, vector<16x32xf32>
    %cst_78 = arith.constant 1.000000e+00 : f32
    %189 = vector.broadcast %cst_78 : f32 to vector<16x32xf32>
    %190 = arith.addf %189, %188 : vector<16x32xf32>
    %191 = arith.mulf %153, %190 : vector<16x32xf32>
    %192 = arith.addf %46, %191 : vector<16x32xf32>
    %cst_79 = arith.constant 0.707106769 : f32
    %193 = vector.broadcast %cst_79 : f32 to vector<16x32xf32>
    %194 = arith.mulf %192, %193 : vector<16x32xf32>
    %195 = vector.extract_strided_slice %150 {offsets = [0, 32], sizes = [16, 32], strides = [1, 1]} : vector<16x64xf32> to vector<16x32xf32>
    %cst_80 = arith.constant 5.000000e-01 : f32
    %196 = vector.broadcast %cst_80 : f32 to vector<16x32xf32>
    %197 = arith.mulf %196, %195 : vector<16x32xf32>
    %cst_81 = arith.constant 0.707106769 : f32
    %198 = vector.broadcast %cst_81 : f32 to vector<16x32xf32>
    %199 = arith.mulf %195, %198 : vector<16x32xf32>
    %200 = math.absf %199 : vector<16x32xf32>
    %cst_82 = arith.constant 0.327591091 : f32
    %201 = vector.broadcast %cst_82 : f32 to vector<16x32xf32>
    %202 = arith.mulf %201, %200 : vector<16x32xf32>
    %cst_83 = arith.constant 1.000000e+00 : f32
    %203 = vector.broadcast %cst_83 : f32 to vector<16x32xf32>
    %204 = arith.addf %203, %202 : vector<16x32xf32>
    %cst_84 = arith.constant 1.000000e+00 : f32
    %205 = vector.broadcast %cst_84 : f32 to vector<16x32xf32>
    %206 = arith.divf %205, %204 : vector<16x32xf32>
    %cst_85 = arith.constant 1.06140542 : f32
    %207 = vector.broadcast %cst_85 : f32 to vector<16x32xf32>
    %208 = arith.mulf %207, %206 : vector<16x32xf32>
    %cst_86 = arith.constant -1.45315206 : f32
    %209 = vector.broadcast %cst_86 : f32 to vector<16x32xf32>
    %210 = arith.addf %208, %209 : vector<16x32xf32>
    %211 = arith.mulf %210, %206 : vector<16x32xf32>
    %cst_87 = arith.constant 1.42141378 : f32
    %212 = vector.broadcast %cst_87 : f32 to vector<16x32xf32>
    %213 = arith.addf %211, %212 : vector<16x32xf32>
    %214 = arith.mulf %213, %206 : vector<16x32xf32>
    %cst_88 = arith.constant -0.284496725 : f32
    %215 = vector.broadcast %cst_88 : f32 to vector<16x32xf32>
    %216 = arith.addf %214, %215 : vector<16x32xf32>
    %217 = arith.mulf %216, %206 : vector<16x32xf32>
    %cst_89 = arith.constant 0.254829586 : f32
    %218 = vector.broadcast %cst_89 : f32 to vector<16x32xf32>
    %219 = arith.addf %217, %218 : vector<16x32xf32>
    %220 = arith.mulf %219, %206 : vector<16x32xf32>
    %cst_90 = arith.constant 0.000000e+00 : f32
    %221 = vector.broadcast %cst_90 : f32 to vector<16x32xf32>
    %222 = arith.subf %221, %200 : vector<16x32xf32>
    %223 = arith.mulf %222, %200 : vector<16x32xf32>
    %224 = math.exp %223 : vector<16x32xf32>
    %225 = arith.mulf %220, %224 : vector<16x32xf32>
    %cst_91 = arith.constant 1.000000e+00 : f32
    %226 = vector.broadcast %cst_91 : f32 to vector<16x32xf32>
    %227 = arith.subf %226, %225 : vector<16x32xf32>
    %cst_92 = arith.constant 0.000000e+00 : f32
    %228 = vector.broadcast %cst_92 : f32 to vector<16x32xf32>
    %229 = arith.cmpf olt, %199, %228 : vector<16x32xf32>
    %cst_93 = arith.constant 0.000000e+00 : f32
    %230 = vector.broadcast %cst_93 : f32 to vector<16x32xf32>
    %231 = arith.subf %230, %227 : vector<16x32xf32>
    %232 = arith.select %229, %231, %227 : vector<16x32xi1>, vector<16x32xf32>
    %cst_94 = arith.constant 1.000000e+00 : f32
    %233 = vector.broadcast %cst_94 : f32 to vector<16x32xf32>
    %234 = arith.addf %233, %232 : vector<16x32xf32>
    %235 = arith.mulf %197, %234 : vector<16x32xf32>
    %236 = arith.addf %54, %235 : vector<16x32xf32>
    %237 = vector.extract_strided_slice %53 {offsets = [0, 32], sizes = [2, 32], strides = [1, 1]} : vector<2x64xf32> to vector<2x32xf32>
    %238 = vector.shape_cast %194 : vector<16x32xf32> to vector<2x8x32xf32>
    %239 = vector.shape_cast %237 : vector<2x32xf32> to vector<2x1x32xf32>
    %240 = vector.broadcast %239 : vector<2x1x32xf32> to vector<2x8x32xf32>
    %241 = arith.addf %238, %240 : vector<2x8x32xf32>
    %242 = vector.shape_cast %241 : vector<2x8x32xf32> to vector<16x32xf32>
    %c1 = arith.constant 1 : index
    %c0_95 = arith.constant 0 : index
    %c0_96 = arith.constant 0 : index
    %243 = vector.load %arg7[%c1, %c0_95, %c0_96] : memref<2x32x192xf32, #tpu.memory_space<vmem>>, vector<1x32x192xf32>
    %244 = vector.shape_cast %243 : vector<1x32x192xf32> to vector<32x192xf32>
    %cst_97 = arith.constant dense<0.000000e+00> : vector<16x192xf32>
    %245 = tpu.matmul %242, %244, %cst_97 {dimension_numbers = #tpu.dot_dimension_numbers<[1], [0], [0], [1], [0, 0, 1, 1], [], []>} : vector<16x32xf32>, vector<32x192xf32>, vector<16x192xf32> -> vector<16x192xf32>
    %c1_98 = arith.constant 1 : index
    %c0_99 = arith.constant 0 : index
    %c0_100 = arith.constant 0 : index
    %246 = vector.load %arg8[%c1_98, %c0_99, %c0_100] : memref<2x1x192xf32, #tpu.memory_space<vmem>>, vector<1x1x192xf32>
    %247 = vector.shape_cast %246 : vector<1x1x192xf32> to vector<1x192xf32>
    %248 = vector.broadcast %247 : vector<1x192xf32> to vector<16x192xf32>
    %249 = arith.addf %245, %248 : vector<16x192xf32>
    %250 = vector.extract_strided_slice %249 {offsets = [0, 0], sizes = [16, 64], strides = [1, 1]} : vector<16x192xf32> to vector<16x64xf32>
    %251 = vector.shape_cast %250 : vector<16x64xf32> to vector<2x8x64xf32>
    %252 = vector.extract_strided_slice %249 {offsets = [0, 64], sizes = [16, 64], strides = [1, 1]} : vector<16x192xf32> to vector<16x64xf32>
    %253 = vector.shape_cast %252 : vector<16x64xf32> to vector<2x8x64xf32>
    %254 = vector.extract_strided_slice %249 {offsets = [0, 128], sizes = [16, 64], strides = [1, 1]} : vector<16x192xf32> to vector<16x64xf32>
    %255 = vector.shape_cast %254 : vector<16x64xf32> to vector<2x8x64xf32>
    %256 = vector.extract_strided_slice %251 {offsets = [0, 0, 0], sizes = [2, 8, 16], strides = [1, 1, 1]} : vector<2x8x64xf32> to vector<2x8x16xf32>
    %257 = vector.extract_strided_slice %253 {offsets = [0, 0, 0], sizes = [2, 8, 16], strides = [1, 1, 1]} : vector<2x8x64xf32> to vector<2x8x16xf32>
    %258 = vector.extract_strided_slice %255 {offsets = [0, 0, 0], sizes = [2, 8, 16], strides = [1, 1, 1]} : vector<2x8x64xf32> to vector<2x8x16xf32>
    "tpu.trace_start"() <{level = 10 : i32, message = "bnd,bmd->bnm"}> : () -> ()
    %cst_101 = arith.constant dense<0.000000e+00> : vector<2x8x8xf32>
    %259 = tpu.matmul %256, %257, %cst_101 {dimension_numbers = #tpu.dot_dimension_numbers<[2], [2], [1], [1], [0, 0, 0, 1, 1, 1], [0], [0]>} : vector<2x8x16xf32>, vector<2x8x16xf32>, vector<2x8x8xf32> -> vector<2x8x8xf32>
    "tpu.trace_stop"() : () -> ()
    %cst_102 = arith.constant 2.500000e-01 : f32
    %260 = vector.broadcast %cst_102 : f32 to vector<2x8x8xf32>
    %261 = arith.mulf %259, %260 : vector<2x8x8xf32>
    %cst_103 = arith.constant dense<0xFF800000> : vector<2x8xf32>
    %262 = vector.multi_reduction <maximumf>, %261, %cst_103 [2] : vector<2x8x8xf32> to vector<2x8xf32>
    %263 = vector.shape_cast %262 : vector<2x8xf32> to vector<2x8x1xf32>
    %264 = vector.broadcast %263 : vector<2x8x1xf32> to vector<2x8x8xf32>
    %265 = arith.subf %261, %264 : vector<2x8x8xf32>
    %266 = math.exp %265 : vector<2x8x8xf32>
    %cst_104 = arith.constant dense<0.000000e+00> : vector<2x8xf32>
    %267 = vector.multi_reduction <add>, %266, %cst_104 [2] : vector<2x8x8xf32> to vector<2x8xf32>
    %268 = vector.shape_cast %267 : vector<2x8xf32> to vector<2x8x1xf32>
    %269 = tpu.reciprocal %268 {approx = true} : vector<2x8x1xf32> -> vector<2x8x1xf32>
    %270 = vector.broadcast %269 : vector<2x8x1xf32> to vector<2x8x8xf32>
    %271 = arith.mulf %266, %270 : vector<2x8x8xf32>
    "tpu.trace_start"() <{level = 10 : i32, message = "bnm,bmd->bnd"}> : () -> ()
    %cst_105 = arith.constant dense<0.000000e+00> : vector<2x8x16xf32>
    %272 = tpu.matmul %271, %258, %cst_105 {dimension_numbers = #tpu.dot_dimension_numbers<[2], [1], [1], [2], [0, 0, 0, 1, 1, 2], [0], [0]>} : vector<2x8x8xf32>, vector<2x8x16xf32>, vector<2x8x16xf32> -> vector<2x8x16xf32>
    "tpu.trace_stop"() : () -> ()
    %273 = vector.extract_strided_slice %251 {offsets = [0, 0, 16], sizes = [2, 8, 16], strides = [1, 1, 1]} : vector<2x8x64xf32> to vector<2x8x16xf32>
    %274 = vector.extract_strided_slice %253 {offsets = [0, 0, 16], sizes = [2, 8, 16], strides = [1, 1, 1]} : vector<2x8x64xf32> to vector<2x8x16xf32>
    %275 = vector.extract_strided_slice %255 {offsets = [0, 0, 16], sizes = [2, 8, 16], strides = [1, 1, 1]} : vector<2x8x64xf32> to vector<2x8x16xf32>
    "tpu.trace_start"() <{level = 10 : i32, message = "bnd,bmd->bnm"}> : () -> ()
    %cst_106 = arith.constant dense<0.000000e+00> : vector<2x8x8xf32>
    %276 = tpu.matmul %273, %274, %cst_106 {dimension_numbers = #tpu.dot_dimension_numbers<[2], [2], [1], [1], [0, 0, 0, 1, 1, 1], [0], [0]>} : vector<2x8x16xf32>, vector<2x8x16xf32>, vector<2x8x8xf32> -> vector<2x8x8xf32>
    "tpu.trace_stop"() : () -> ()
    %cst_107 = arith.constant 2.500000e-01 : f32
    %277 = vector.broadcast %cst_107 : f32 to vector<2x8x8xf32>
    %278 = arith.mulf %276, %277 : vector<2x8x8xf32>
    %cst_108 = arith.constant dense<0xFF800000> : vector<2x8xf32>
    %279 = vector.multi_reduction <maximumf>, %278, %cst_108 [2] : vector<2x8x8xf32> to vector<2x8xf32>
    %280 = vector.shape_cast %279 : vector<2x8xf32> to vector<2x8x1xf32>
    %281 = vector.broadcast %280 : vector<2x8x1xf32> to vector<2x8x8xf32>
    %282 = arith.subf %278, %281 : vector<2x8x8xf32>
    %283 = math.exp %282 : vector<2x8x8xf32>
    %cst_109 = arith.constant dense<0.000000e+00> : vector<2x8xf32>
    %284 = vector.multi_reduction <add>, %283, %cst_109 [2] : vector<2x8x8xf32> to vector<2x8xf32>
    %285 = vector.shape_cast %284 : vector<2x8xf32> to vector<2x8x1xf32>
    %286 = tpu.reciprocal %285 {approx = true} : vector<2x8x1xf32> -> vector<2x8x1xf32>
    %287 = vector.broadcast %286 : vector<2x8x1xf32> to vector<2x8x8xf32>
    %288 = arith.mulf %283, %287 : vector<2x8x8xf32>
    "tpu.trace_start"() <{level = 10 : i32, message = "bnm,bmd->bnd"}> : () -> ()
    %cst_110 = arith.constant dense<0.000000e+00> : vector<2x8x16xf32>
    %289 = tpu.matmul %288, %275, %cst_110 {dimension_numbers = #tpu.dot_dimension_numbers<[2], [1], [1], [2], [0, 0, 0, 1, 1, 2], [0], [0]>} : vector<2x8x8xf32>, vector<2x8x16xf32>, vector<2x8x16xf32> -> vector<2x8x16xf32>
    "tpu.trace_stop"() : () -> ()
    %290 = vector.extract_strided_slice %251 {offsets = [0, 0, 32], sizes = [2, 8, 16], strides = [1, 1, 1]} : vector<2x8x64xf32> to vector<2x8x16xf32>
    %291 = vector.extract_strided_slice %253 {offsets = [0, 0, 32], sizes = [2, 8, 16], strides = [1, 1, 1]} : vector<2x8x64xf32> to vector<2x8x16xf32>
    %292 = vector.extract_strided_slice %255 {offsets = [0, 0, 32], sizes = [2, 8, 16], strides = [1, 1, 1]} : vector<2x8x64xf32> to vector<2x8x16xf32>
    "tpu.trace_start"() <{level = 10 : i32, message = "bnd,bmd->bnm"}> : () -> ()
    %cst_111 = arith.constant dense<0.000000e+00> : vector<2x8x8xf32>
    %293 = tpu.matmul %290, %291, %cst_111 {dimension_numbers = #tpu.dot_dimension_numbers<[2], [2], [1], [1], [0, 0, 0, 1, 1, 1], [0], [0]>} : vector<2x8x16xf32>, vector<2x8x16xf32>, vector<2x8x8xf32> -> vector<2x8x8xf32>
    "tpu.trace_stop"() : () -> ()
    %cst_112 = arith.constant 2.500000e-01 : f32
    %294 = vector.broadcast %cst_112 : f32 to vector<2x8x8xf32>
    %295 = arith.mulf %293, %294 : vector<2x8x8xf32>
    %cst_113 = arith.constant dense<0xFF800000> : vector<2x8xf32>
    %296 = vector.multi_reduction <maximumf>, %295, %cst_113 [2] : vector<2x8x8xf32> to vector<2x8xf32>
    %297 = vector.shape_cast %296 : vector<2x8xf32> to vector<2x8x1xf32>
    %298 = vector.broadcast %297 : vector<2x8x1xf32> to vector<2x8x8xf32>
    %299 = arith.subf %295, %298 : vector<2x8x8xf32>
    %300 = math.exp %299 : vector<2x8x8xf32>
    %cst_114 = arith.constant dense<0.000000e+00> : vector<2x8xf32>
    %301 = vector.multi_reduction <add>, %300, %cst_114 [2] : vector<2x8x8xf32> to vector<2x8xf32>
    %302 = vector.shape_cast %301 : vector<2x8xf32> to vector<2x8x1xf32>
    %303 = tpu.reciprocal %302 {approx = true} : vector<2x8x1xf32> -> vector<2x8x1xf32>
    %304 = vector.broadcast %303 : vector<2x8x1xf32> to vector<2x8x8xf32>
    %305 = arith.mulf %300, %304 : vector<2x8x8xf32>
    "tpu.trace_start"() <{level = 10 : i32, message = "bnm,bmd->bnd"}> : () -> ()
    %cst_115 = arith.constant dense<0.000000e+00> : vector<2x8x16xf32>
    %306 = tpu.matmul %305, %292, %cst_115 {dimension_numbers = #tpu.dot_dimension_numbers<[2], [1], [1], [2], [0, 0, 0, 1, 1, 2], [0], [0]>} : vector<2x8x8xf32>, vector<2x8x16xf32>, vector<2x8x16xf32> -> vector<2x8x16xf32>
    "tpu.trace_stop"() : () -> ()
    %307 = vector.extract_strided_slice %251 {offsets = [0, 0, 48], sizes = [2, 8, 16], strides = [1, 1, 1]} : vector<2x8x64xf32> to vector<2x8x16xf32>
    %308 = vector.extract_strided_slice %253 {offsets = [0, 0, 48], sizes = [2, 8, 16], strides = [1, 1, 1]} : vector<2x8x64xf32> to vector<2x8x16xf32>
    %309 = vector.extract_strided_slice %255 {offsets = [0, 0, 48], sizes = [2, 8, 16], strides = [1, 1, 1]} : vector<2x8x64xf32> to vector<2x8x16xf32>
    "tpu.trace_start"() <{level = 10 : i32, message = "bnd,bmd->bnm"}> : () -> ()
    %cst_116 = arith.constant dense<0.000000e+00> : vector<2x8x8xf32>
    %310 = tpu.matmul %307, %308, %cst_116 {dimension_numbers = #tpu.dot_dimension_numbers<[2], [2], [1], [1], [0, 0, 0, 1, 1, 1], [0], [0]>} : vector<2x8x16xf32>, vector<2x8x16xf32>, vector<2x8x8xf32> -> vector<2x8x8xf32>
    "tpu.trace_stop"() : () -> ()
    %cst_117 = arith.constant 2.500000e-01 : f32
    %311 = vector.broadcast %cst_117 : f32 to vector<2x8x8xf32>
    %312 = arith.mulf %310, %311 : vector<2x8x8xf32>
    %cst_118 = arith.constant dense<0xFF800000> : vector<2x8xf32>
    %313 = vector.multi_reduction <maximumf>, %312, %cst_118 [2] : vector<2x8x8xf32> to vector<2x8xf32>
    %314 = vector.shape_cast %313 : vector<2x8xf32> to vector<2x8x1xf32>
    %315 = vector.broadcast %314 : vector<2x8x1xf32> to vector<2x8x8xf32>
    %316 = arith.subf %312, %315 : vector<2x8x8xf32>
    %317 = math.exp %316 : vector<2x8x8xf32>
    %cst_119 = arith.constant dense<0.000000e+00> : vector<2x8xf32>
    %318 = vector.multi_reduction <add>, %317, %cst_119 [2] : vector<2x8x8xf32> to vector<2x8xf32>
    %319 = vector.shape_cast %318 : vector<2x8xf32> to vector<2x8x1xf32>
    %320 = tpu.reciprocal %319 {approx = true} : vector<2x8x1xf32> -> vector<2x8x1xf32>
    %321 = vector.broadcast %320 : vector<2x8x1xf32> to vector<2x8x8xf32>
    %322 = arith.mulf %317, %321 : vector<2x8x8xf32>
    "tpu.trace_start"() <{level = 10 : i32, message = "bnm,bmd->bnd"}> : () -> ()
    %cst_120 = arith.constant dense<0.000000e+00> : vector<2x8x16xf32>
    %323 = tpu.matmul %322, %309, %cst_120 {dimension_numbers = #tpu.dot_dimension_numbers<[2], [1], [1], [2], [0, 0, 0, 1, 1, 2], [0], [0]>} : vector<2x8x8xf32>, vector<2x8x16xf32>, vector<2x8x16xf32> -> vector<2x8x16xf32>
    "tpu.trace_stop"() : () -> ()
    %324 = tpu.concatenate %272, %289, %306, %323 in 2 : vector<2x8x16xf32>, vector<2x8x16xf32>, vector<2x8x16xf32>, vector<2x8x16xf32> -> vector<2x8x64xf32>
    %325 = vector.shape_cast %324 : vector<2x8x64xf32> to vector<16x64xf32>
    %c1_121 = arith.constant 1 : index
    %c0_122 = arith.constant 0 : index
    %c0_123 = arith.constant 0 : index
    %326 = vector.load %arg9[%c1_121, %c0_122, %c0_123] : memref<2x64x64xf32, #tpu.memory_space<vmem>>, vector<1x64x64xf32>
    %327 = vector.shape_cast %326 : vector<1x64x64xf32> to vector<64x64xf32>
    %cst_124 = arith.constant dense<0.000000e+00> : vector<16x64xf32>
    %328 = tpu.matmul %325, %327, %cst_124 {dimension_numbers = #tpu.dot_dimension_numbers<[1], [0], [0], [1], [0, 0, 1, 1], [], []>} : vector<16x64xf32>, vector<64x64xf32>, vector<16x64xf32> -> vector<16x64xf32>
    %c1_125 = arith.constant 1 : index
    %c0_126 = arith.constant 0 : index
    %c0_127 = arith.constant 0 : index
    %329 = vector.load %arg10[%c1_125, %c0_126, %c0_127] : memref<2x1x64xf32, #tpu.memory_space<vmem>>, vector<1x1x64xf32>
    %330 = vector.shape_cast %329 : vector<1x1x64xf32> to vector<1x64xf32>
    %331 = vector.broadcast %330 : vector<1x64xf32> to vector<16x64xf32>
    %332 = arith.addf %328, %331 : vector<16x64xf32>
    %333 = vector.extract_strided_slice %332 {offsets = [0, 32], sizes = [16, 32], strides = [1, 1]} : vector<16x64xf32> to vector<16x32xf32>
    %cst_128 = arith.constant 5.000000e-01 : f32
    %334 = vector.broadcast %cst_128 : f32 to vector<16x32xf32>
    %335 = arith.mulf %334, %333 : vector<16x32xf32>
    %cst_129 = arith.constant 0.707106769 : f32
    %336 = vector.broadcast %cst_129 : f32 to vector<16x32xf32>
    %337 = arith.mulf %333, %336 : vector<16x32xf32>
    %338 = math.absf %337 : vector<16x32xf32>
    %cst_130 = arith.constant 0.327591091 : f32
    %339 = vector.broadcast %cst_130 : f32 to vector<16x32xf32>
    %340 = arith.mulf %339, %338 : vector<16x32xf32>
    %cst_131 = arith.constant 1.000000e+00 : f32
    %341 = vector.broadcast %cst_131 : f32 to vector<16x32xf32>
    %342 = arith.addf %341, %340 : vector<16x32xf32>
    %cst_132 = arith.constant 1.000000e+00 : f32
    %343 = vector.broadcast %cst_132 : f32 to vector<16x32xf32>
    %344 = arith.divf %343, %342 : vector<16x32xf32>
    %cst_133 = arith.constant 1.06140542 : f32
    %345 = vector.broadcast %cst_133 : f32 to vector<16x32xf32>
    %346 = arith.mulf %345, %344 : vector<16x32xf32>
    %cst_134 = arith.constant -1.45315206 : f32
    %347 = vector.broadcast %cst_134 : f32 to vector<16x32xf32>
    %348 = arith.addf %346, %347 : vector<16x32xf32>
    %349 = arith.mulf %348, %344 : vector<16x32xf32>
    %cst_135 = arith.constant 1.42141378 : f32
    %350 = vector.broadcast %cst_135 : f32 to vector<16x32xf32>
    %351 = arith.addf %349, %350 : vector<16x32xf32>
    %352 = arith.mulf %351, %344 : vector<16x32xf32>
    %cst_136 = arith.constant -0.284496725 : f32
    %353 = vector.broadcast %cst_136 : f32 to vector<16x32xf32>
    %354 = arith.addf %352, %353 : vector<16x32xf32>
    %355 = arith.mulf %354, %344 : vector<16x32xf32>
    %cst_137 = arith.constant 0.254829586 : f32
    %356 = vector.broadcast %cst_137 : f32 to vector<16x32xf32>
    %357 = arith.addf %355, %356 : vector<16x32xf32>
    %358 = arith.mulf %357, %344 : vector<16x32xf32>
    %cst_138 = arith.constant 0.000000e+00 : f32
    %359 = vector.broadcast %cst_138 : f32 to vector<16x32xf32>
    %360 = arith.subf %359, %338 : vector<16x32xf32>
    %361 = arith.mulf %360, %338 : vector<16x32xf32>
    %362 = math.exp %361 : vector<16x32xf32>
    %363 = arith.mulf %358, %362 : vector<16x32xf32>
    %cst_139 = arith.constant 1.000000e+00 : f32
    %364 = vector.broadcast %cst_139 : f32 to vector<16x32xf32>
    %365 = arith.subf %364, %363 : vector<16x32xf32>
    %cst_140 = arith.constant 0.000000e+00 : f32
    %366 = vector.broadcast %cst_140 : f32 to vector<16x32xf32>
    %367 = arith.cmpf olt, %337, %366 : vector<16x32xf32>
    %cst_141 = arith.constant 0.000000e+00 : f32
    %368 = vector.broadcast %cst_141 : f32 to vector<16x32xf32>
    %369 = arith.subf %368, %365 : vector<16x32xf32>
    %370 = arith.select %367, %369, %365 : vector<16x32xi1>, vector<16x32xf32>
    %cst_142 = arith.constant 1.000000e+00 : f32
    %371 = vector.broadcast %cst_142 : f32 to vector<16x32xf32>
    %372 = arith.addf %371, %370 : vector<16x32xf32>
    %373 = arith.mulf %335, %372 : vector<16x32xf32>
    %374 = arith.addf %236, %373 : vector<16x32xf32>
    %cst_143 = arith.constant 0.707106769 : f32
    %375 = vector.broadcast %cst_143 : f32 to vector<16x32xf32>
    %376 = arith.mulf %374, %375 : vector<16x32xf32>
    %c0_144 = arith.constant 0 : index
    %c0_145 = arith.constant 0 : index
    %377 = vector.load %arg11[%c0_144, %c0_145] : memref<32x32xf32, #tpu.memory_space<vmem>>, vector<32x32xf32>
    %cst_146 = arith.constant dense<0.000000e+00> : vector<16x32xf32>
    %378 = tpu.matmul %376, %377, %cst_146 {dimension_numbers = #tpu.dot_dimension_numbers<[1], [0], [0], [1], [0, 0, 1, 1], [], []>} : vector<16x32xf32>, vector<32x32xf32>, vector<16x32xf32> -> vector<16x32xf32>
    %c0_147 = arith.constant 0 : index
    %c0_148 = arith.constant 0 : index
    %379 = vector.load %arg12[%c0_147, %c0_148] : memref<1x32xf32, #tpu.memory_space<vmem>>, vector<1x32xf32>
    %380 = vector.broadcast %379 : vector<1x32xf32> to vector<16x32xf32>
    %381 = arith.addf %378, %380 : vector<16x32xf32>
    %cst_149 = arith.constant 5.000000e-01 : f32
    %382 = vector.broadcast %cst_149 : f32 to vector<16x32xf32>
    %383 = arith.mulf %382, %381 : vector<16x32xf32>
    %cst_150 = arith.constant 0.707106769 : f32
    %384 = vector.broadcast %cst_150 : f32 to vector<16x32xf32>
    %385 = arith.mulf %381, %384 : vector<16x32xf32>
    %386 = math.absf %385 : vector<16x32xf32>
    %cst_151 = arith.constant 0.327591091 : f32
    %387 = vector.broadcast %cst_151 : f32 to vector<16x32xf32>
    %388 = arith.mulf %387, %386 : vector<16x32xf32>
    %cst_152 = arith.constant 1.000000e+00 : f32
    %389 = vector.broadcast %cst_152 : f32 to vector<16x32xf32>
    %390 = arith.addf %389, %388 : vector<16x32xf32>
    %cst_153 = arith.constant 1.000000e+00 : f32
    %391 = vector.broadcast %cst_153 : f32 to vector<16x32xf32>
    %392 = arith.divf %391, %390 : vector<16x32xf32>
    %cst_154 = arith.constant 1.06140542 : f32
    %393 = vector.broadcast %cst_154 : f32 to vector<16x32xf32>
    %394 = arith.mulf %393, %392 : vector<16x32xf32>
    %cst_155 = arith.constant -1.45315206 : f32
    %395 = vector.broadcast %cst_155 : f32 to vector<16x32xf32>
    %396 = arith.addf %394, %395 : vector<16x32xf32>
    %397 = arith.mulf %396, %392 : vector<16x32xf32>
    %cst_156 = arith.constant 1.42141378 : f32
    %398 = vector.broadcast %cst_156 : f32 to vector<16x32xf32>
    %399 = arith.addf %397, %398 : vector<16x32xf32>
    %400 = arith.mulf %399, %392 : vector<16x32xf32>
    %cst_157 = arith.constant -0.284496725 : f32
    %401 = vector.broadcast %cst_157 : f32 to vector<16x32xf32>
    %402 = arith.addf %400, %401 : vector<16x32xf32>
    %403 = arith.mulf %402, %392 : vector<16x32xf32>
    %cst_158 = arith.constant 0.254829586 : f32
    %404 = vector.broadcast %cst_158 : f32 to vector<16x32xf32>
    %405 = arith.addf %403, %404 : vector<16x32xf32>
    %406 = arith.mulf %405, %392 : vector<16x32xf32>
    %cst_159 = arith.constant 0.000000e+00 : f32
    %407 = vector.broadcast %cst_159 : f32 to vector<16x32xf32>
    %408 = arith.subf %407, %386 : vector<16x32xf32>
    %409 = arith.mulf %408, %386 : vector<16x32xf32>
    %410 = math.exp %409 : vector<16x32xf32>
    %411 = arith.mulf %406, %410 : vector<16x32xf32>
    %cst_160 = arith.constant 1.000000e+00 : f32
    %412 = vector.broadcast %cst_160 : f32 to vector<16x32xf32>
    %413 = arith.subf %412, %411 : vector<16x32xf32>
    %cst_161 = arith.constant 0.000000e+00 : f32
    %414 = vector.broadcast %cst_161 : f32 to vector<16x32xf32>
    %415 = arith.cmpf olt, %385, %414 : vector<16x32xf32>
    %cst_162 = arith.constant 0.000000e+00 : f32
    %416 = vector.broadcast %cst_162 : f32 to vector<16x32xf32>
    %417 = arith.subf %416, %413 : vector<16x32xf32>
    %418 = arith.select %415, %417, %413 : vector<16x32xi1>, vector<16x32xf32>
    %cst_163 = arith.constant 1.000000e+00 : f32
    %419 = vector.broadcast %cst_163 : f32 to vector<16x32xf32>
    %420 = arith.addf %419, %418 : vector<16x32xf32>
    %421 = arith.mulf %383, %420 : vector<16x32xf32>
    %c0_164 = arith.constant 0 : index
    %c0_165 = arith.constant 0 : index
    %422 = vector.load %arg13[%c0_164, %c0_165] : memref<8x32xf32, #tpu.memory_space<vmem>>, vector<8x32xf32>
    %cst_166 = arith.constant dense<0.000000e+00> : vector<8x16xf32>
    %423 = tpu.matmul %422, %421, %cst_166 {dimension_numbers = #tpu.dot_dimension_numbers<[1], [1], [0], [0], [0, 0, 1, 0], [], []>} : vector<8x32xf32>, vector<16x32xf32>, vector<8x16xf32> -> vector<8x16xf32>
    %c0_167 = arith.constant 0 : index
    %c0_168 = arith.constant 0 : index
    %424 = vector.load %arg14[%c0_167, %c0_168] : memref<8x1xf32, #tpu.memory_space<vmem>>, vector<8x1xf32>
    %425 = vector.broadcast %424 : vector<8x1xf32> to vector<8x16xf32>
    %426 = arith.addf %423, %425 : vector<8x16xf32>
    %c0_169 = arith.constant 0 : index
    %c0_170 = arith.constant 0 : index
    %c0_171 = arith.constant 0 : index
    %427 = vector.load %arg15[%c0_169, %c0_170, %c0_171] : memref<1x8x16xf32, #tpu.memory_space<vmem>>, vector<1x8x16xf32>
    %428 = vector.shape_cast %427 : vector<1x8x16xf32> to vector<8x16xf32>
    %429 = vector.shape_cast %426 : vector<8x16xf32> to vector<1x8x16xf32>
    tpu.vector_store %arg15[%c0_169, %c0_170, %c0_171], %429 {strides = array<i32>} : memref<1x8x16xf32, #tpu.memory_space<vmem>>, vector<1x8x16xf32>,
    return
  }
  func.func @transform_0(%arg0: i32) -> (i32, i32, i32) {
    %c0_i32 = arith.constant 0 : i32
    %c0_i32_0 = arith.constant 0 : i32
    %c0_i32_1 = arith.constant 0 : i32
    return %arg0, %c0_i32, %c0_i32_0 : i32, i32, i32
  }
  func.func @transform_1(%arg0: i32) -> (i32, i32, i32) {
    %c0_i32 = arith.constant 0 : i32
    %c0_i32_0 = arith.constant 0 : i32
    %c0_i32_1 = arith.constant 0 : i32
    return %arg0, %c0_i32, %c0_i32_0 : i32, i32, i32
  }
  func.func @transform_2(%arg0: i32) -> (i32, i32) {
    %c0_i32 = arith.constant 0 : i32
    %c0_i32_0 = arith.constant 0 : i32
    %c0_i32_1 = arith.constant 0 : i32
    return %c0_i32, %c0_i32_0 : i32, i32
  }
  func.func @transform_3(%arg0: i32) -> (i32, i32) {
    %c0_i32 = arith.constant 0 : i32
    %c0_i32_0 = arith.constant 0 : i32
    %c0_i32_1 = arith.constant 0 : i32
    return %c0_i32, %c0_i32_0 : i32, i32
  }
  func.func @transform_4(%arg0: i32) -> (i32, i32) {
    %c0_i32 = arith.constant 0 : i32
    %c0_i32_0 = arith.constant 0 : i32
    %c0_i32_1 = arith.constant 0 : i32
    return %c0_i32, %c0_i32_0 : i32, i32
  }
  func.func @transform_5(%arg0: i32) -> (i32, i32) {
    %c0_i32 = arith.constant 0 : i32
    %c0_i32_0 = arith.constant 0 : i32
    %c0_i32_1 = arith.constant 0 : i32
    return %c0_i32, %c0_i32_0 : i32, i32
  }
  func.func @transform_6(%arg0: i32) -> (i32, i32, i32) {
    %c0_i32 = arith.constant 0 : i32
    %c0_i32_0 = arith.constant 0 : i32
    %c0_i32_1 = arith.constant 0 : i32
    %c0_i32_2 = arith.constant 0 : i32
    return %c0_i32, %c0_i32_0, %c0_i32_1 : i32, i32, i32
  }
  func.func @transform_7(%arg0: i32) -> (i32, i32, i32) {
    %c0_i32 = arith.constant 0 : i32
    %c0_i32_0 = arith.constant 0 : i32
    %c0_i32_1 = arith.constant 0 : i32
    %c0_i32_2 = arith.constant 0 : i32
    return %c0_i32, %c0_i32_0, %c0_i32_1 : i32, i32, i32
  }
  func.func @transform_8(%arg0: i32) -> (i32, i32, i32) {
    %c0_i32 = arith.constant 0 : i32
    %c0_i32_0 = arith.constant 0 : i32
    %c0_i32_1 = arith.constant 0 : i32
    %c0_i32_2 = arith.constant 0 : i32
    return %c0_i32, %c0_i32_0, %c0_i32_1 : i32, i32, i32
  }
  func.func @transform_9(%arg0: i32) -> (i32, i32, i32) {
    %c0_i32 = arith.constant 0 : i32
    %c0_i32_0 = arith.constant 0 : i32
    %c0_i32_1 = arith.constant 0 : i32
    %c0_i32_2 = arith.constant 0 : i32
    return %c0_i32, %c0_i32_0, %c0_i32_1 : i32, i32, i32
  }
  func.func @transform_10(%arg0: i32) -> (i32, i32) {
    %c0_i32 = arith.constant 0 : i32
    %c0_i32_0 = arith.constant 0 : i32
    %c0_i32_1 = arith.constant 0 : i32
    return %c0_i32, %c0_i32_0 : i32, i32
  }
  func.func @transform_11(%arg0: i32) -> (i32, i32) {
    %c0_i32 = arith.constant 0 : i32
    %c0_i32_0 = arith.constant 0 : i32
    %c0_i32_1 = arith.constant 0 : i32
    return %c0_i32, %c0_i32_0 : i32, i32
  }
  func.func @transform_12(%arg0: i32) -> (i32, i32) {
    %c0_i32 = arith.constant 0 : i32
    %c0_i32_0 = arith.constant 0 : i32
    %c0_i32_1 = arith.constant 0 : i32
    return %c0_i32, %c0_i32_0 : i32, i32
  }
  func.func @transform_13(%arg0: i32) -> (i32, i32) {
    %c0_i32 = arith.constant 0 : i32
    %c0_i32_0 = arith.constant 0 : i32
    %c0_i32_1 = arith.constant 0 : i32
    return %c0_i32, %c0_i32_0 : i32, i32
  }
  func.func @transform_14(%arg0: i32) -> (i32, i32, i32) {
    %c0_i32 = arith.constant 0 : i32
    %c0_i32_0 = arith.constant 0 : i32
    %c0_i32_1 = arith.constant 0 : i32
    return %arg0, %c0_i32, %c0_i32_0 : i32, i32, i32
  }
}

</mosaic_0001>

<llo_original>
// kernel: squeeze.1
$region0: #{squeeze.1}
  %s0 = inlined_call_operand.vmem [shape: f32[16], index: 0, kind: input, shape index: {}]
  %s1 = inlined_call_operand.hbm [shape: f32[2,8,1], index: 1, kind: output, shape index: {}]
  $region1: #{squeeze.1} parent=0
    #allocation0 [shape = 'u8[1024]{0}', space=vmem, size = 0x400, scoped, tag = 'operand span for operand 1']
    #allocation1 [shape = 's32[1]{0}', space=sflag, size = 0x4, scoped, tag = 'scoped memory for squeeze.1']
    #allocation2 [shape = 'u8[4096]{0}', space=vmem, size = 0x1000, scoped, tag = 'scoped mem for output reshape']
    #allocation3 [shape = 'u8[4096]{0}', space=vmem, size = 0x1000, scoped, tag = 'scoped mem for input reshape']
    %2 = vsyncpa [#allocation1], 0
    %s4 = sshll.u32 1, 1
    %s5 = ssub.s32 %s4, 1
    %v6 = vld [vmem:[%s0] sm:%s5]
    %7 = vst [vmem:[#allocation3] sm:%s5] %v6
    %v8 = vld [vmem:[#allocation3] sm:$0x1]
    %vm9 = vcmask 64512
    %10 = vst.msk [vmem:[#allocation2] sm:$0x1] %vm9, %v8
    %v11 = vld [vmem:[#allocation3] sm:$0x1]
    %12 = vrot.lane.b32.xlu0 %v11, 120
    %v13 = vpop.permute.xlu0 %12
    %vm14 = vcmask 64512
    %s15 = scalar_lea.vmem [#allocation2], 1
    %16 = vst.msk [vmem:[%s15] sm:$0x1] %vm14, %v13
    %s18 = sshll.u32 1, 2
    %s19 = ssub.s32 %s18, 1
    %v21 = vld [vmem:[#allocation2] sm:%s19]
    %s22 = sshll.u32 1, 2
    %s23 = ssub.s32 %s22, 1
    %24 = vst [vmem:[#allocation0] sm:%s23] %v21
    %s26 = ssub.s32 32, 32
    %27 = vsyncadd [#allocation1], %s26
    %s29 = sshll.u32 [#allocation0], 4
    %s30 = int_to_ptr.vmem [resolvable:$true] %s29
    %32 = dma.vmem_to_hbm [thread:$0]  %s30, 32, %s1, [#allocation1]
    %33 = dma.done [#allocation1], 32
    %34 = vsyncpa [#allocation1], 1

// kernel: new_attention_model_forward.1
$region0: #{new_attention_model_forward.1}
  #allocation0 [shape = 'u32[]', space=smem, size = 0x4, offset = 0x4, fixed_abs, tag = 'smem constant byte address 0x4 - core index']
  #allocation1 [shape = 'u32[144,128]{1,0:T(1,128)}', space=vmem, size = 0x12000, scoped, tag = 'internal scratch']
  %s0 = inlined_call_operand.vmem [shape: f32[2,8,8], index: 0, kind: input, shape index: {}]
  %s1 = inlined_call_operand.vmem [shape: f32[2,1,32], index: 1, kind: input, shape index: {}]
  %s2 = inlined_call_operand.vmem [shape: f32[8,32], index: 2, kind: input, shape index: {}]
  %s3 = inlined_call_operand.vmem [shape: f32[1,32], index: 3, kind: input, shape index: {}]
  %s4 = inlined_call_operand.vmem [shape: f32[32,64], index: 4, kind: input, shape index: {}]
  %s5 = inlined_call_operand.vmem [shape: f32[1,64], index: 5, kind: input, shape index: {}]
  %s6 = inlined_call_operand.hbm [shape: f32[2,32,192], index: 6, kind: input, shape index: {}]
  %s7 = inlined_call_operand.vmem [shape: f32[2,1,192], index: 7, kind: input, shape index: {}]
  %s8 = inlined_call_operand.hbm [shape: f32[2,64,64], index: 8, kind: input, shape index: {}]
  %s9 = inlined_call_operand.vmem [shape: f32[2,1,64], index: 9, kind: input, shape index: {}]
  %s10 = inlined_call_operand.vmem [shape: f32[32,32], index: 10, kind: input, shape index: {}]
  %s11 = inlined_call_operand.vmem [shape: f32[1,32], index: 11, kind: input, shape index: {}]
  %s12 = inlined_call_operand.vmem [shape: f32[8,32], index: 12, kind: input, shape index: {}]
  %s13 = inlined_call_operand.vmem [shape: f32[8,1], index: 13, kind: input, shape index: {}]
  %s14 = inlined_call_operand.vmem [shape: f32[1,8,16], index: 14, kind: output, shape index: {}]
  %s15 = sld [smem:[#allocation0]]
  $region74: #{new_attention_model_forward.1} parent=0
    _
  %s17 = ssub.s32 1, %s15
  %s18 = scalar_select 0, %s17, %s15
  $region1: #{new_attention_model_forward.1} parent=0
    #allocation2 [shape = 'u8[65536]{0}', space=vmem, size = 0x10000, scoped, tag = 'input window, operand 6, single buffered']
    #allocation3 [shape = 's32[1]{0}', space=sflag, size = 0x4, scoped, tag = 'scoped memory for new_attention_model_forward.1']
    #allocation4 [shape = 'u8[65536]{0}', space=vmem, size = 0x10000, scoped, tag = 'input window, operand 8, single buffered']
    #allocation5 [shape = 's32[1]{0}', space=sflag, size = 0x4, scoped, tag = 'scoped memory for new_attention_model_forward.1']
    %19 = vsyncpa [#allocation3], 0
    %20 = vsyncpa [#allocation5], 0
    // Predicated region
    $region2: #{new_attention_model_forward.1} parent=1 // pred_check
      _
    $region3: #{new_attention_model_forward.1} parent=1 // pred_check_branch
      %22 = sbr.rel (0) target = $region5
    $region4: #{new_attention_model_forward.1} parent=1 // pred_region
      _
    $region5: #{new_attention_model_forward.1} parent=1 // pred_fallthru
      _
    // Predicated region
    $region6: #{new_attention_model_forward.1} parent=1 // pred_check
      _
    $region7: #{new_attention_model_forward.1} parent=1 // pred_check_branch
      %24 = sbr.rel (0) target = $region9
    $region8: #{new_attention_model_forward.1} parent=1 // pred_region
      _
    $region9: #{new_attention_model_forward.1} parent=1 // pred_fallthru
      _
    // Predicated region
    $region10: #{new_attention_model_forward.1} parent=1 // pred_check
      _
    $region11: #{new_attention_model_forward.1} parent=1 // pred_check_branch
      %26 = sbr.rel (0) target = $region13
    $region12: #{new_attention_model_forward.1} parent=1 // pred_region
      _
    $region13: #{new_attention_model_forward.1} parent=1 // pred_fallthru
      _
    // Predicated region
    $region14: #{new_attention_model_forward.1} parent=1 // pred_check
      _
    $region15: #{new_attention_model_forward.1} parent=1 // pred_check_branch
      %28 = sbr.rel (0) target = $region17
    $region16: #{new_attention_model_forward.1} parent=1 // pred_region
      _
    $region17: #{new_attention_model_forward.1} parent=1 // pred_fallthru
      _
    // Predicated region
    $region18: #{new_attention_model_forward.1} parent=1 // pred_check
      _
    $region19: #{new_attention_model_forward.1} parent=1 // pred_check_branch
      %30 = sbr.rel (0) target = $region21
    $region20: #{new_attention_model_forward.1} parent=1 // pred_region
      _
    $region21: #{new_attention_model_forward.1} parent=1 // pred_fallthru
      _
    // Predicated region
    $region22: #{new_attention_model_forward.1} parent=1 // pred_check
      _
    $region23: #{new_attention_model_forward.1} parent=1 // pred_check_branch
      %32 = sbr.rel (0) target = $region25
    $region24: #{new_attention_model_forward.1} parent=1 // pred_region
      _
    $region25: #{new_attention_model_forward.1} parent=1 // pred_fallthru
      _
    // Predicated region
    $region26: #{new_attention_model_forward.1} parent=1 // pred_check
      _
    $region27: #{new_attention_model_forward.1} parent=1 // pred_check_branch
      %34 = sbr.rel (0) target = $region29
    $region28: #{new_attention_model_forward.1} parent=1 // pred_region
      %s36 = ssub.s32 2048, 2048
      %37 = vsyncadd [#allocation3], %s36
      %s38 = sshll.u32 [#allocation2], 4
      %s39 = int_to_ptr.vmem [resolvable:$true] %s38
      %44 = dma.hbm_to_vmem [thread:$0]  %s6, 2048, %s39, [#allocation3], 256, 256, 16
    $region29: #{new_attention_model_forward.1} parent=1 // pred_fallthru
      _
    // Predicated region
    $region30: #{new_attention_model_forward.1} parent=1 // pred_check
      _
    $region31: #{new_attention_model_forward.1} parent=1 // pred_check_branch
      %46 = sbr.rel (0) target = $region33
    $region32: #{new_attention_model_forward.1} parent=1 // pred_region
      _
    $region33: #{new_attention_model_forward.1} parent=1 // pred_fallthru
      _
    // Predicated region
    $region34: #{new_attention_model_forward.1} parent=1 // pred_check
      _
    $region35: #{new_attention_model_forward.1} parent=1 // pred_check_branch
      %48 = sbr.rel (0) target = $region37
    $region36: #{new_attention_model_forward.1} parent=1 // pred_region
      %s50 = ssub.s32 2048, 2048
      %51 = vsyncadd [#allocation5], %s50
      %s52 = sshll.u32 [#allocation4], 4
      %s53 = int_to_ptr.vmem [resolvable:$true] %s52
      %58 = dma.hbm_to_vmem [thread:$0]  %s8, 2048, %s53, [#allocation5], 128, 128, 8
    $region37: #{new_attention_model_forward.1} parent=1 // pred_fallthru
      _
    // Predicated region
    $region38: #{new_attention_model_forward.1} parent=1 // pred_check
      _
    $region39: #{new_attention_model_forward.1} parent=1 // pred_check_branch
      %60 = sbr.rel (0) target = $region41
    $region40: #{new_attention_model_forward.1} parent=1 // pred_region
      _
    $region41: #{new_attention_model_forward.1} parent=1 // pred_fallthru
      _
    // Predicated region
    $region42: #{new_attention_model_forward.1} parent=1 // pred_check
      _
    $region43: #{new_attention_model_forward.1} parent=1 // pred_check_branch
      %62 = sbr.rel (0) target = $region45
    $region44: #{new_attention_model_forward.1} parent=1 // pred_region
      _
    $region45: #{new_attention_model_forward.1} parent=1 // pred_fallthru
      _
    // Predicated region
    $region46: #{new_attention_model_forward.1} parent=1 // pred_check
      _
    $region47: #{new_attention_model_forward.1} parent=1 // pred_check_branch
      %64 = sbr.rel (0) target = $region49
    $region48: #{new_attention_model_forward.1} parent=1 // pred_region
      _
    $region49: #{new_attention_model_forward.1} parent=1 // pred_fallthru
      _
    // Predicated region
    $region50: #{new_attention_model_forward.1} parent=1 // pred_check
      _
    $region51: #{new_attention_model_forward.1} parent=1 // pred_check_branch
      %66 = sbr.rel (0) target = $region53
    $region52: #{new_attention_model_forward.1} parent=1 // pred_region
      _
    $region53: #{new_attention_model_forward.1} parent=1 // pred_fallthru
      _
    // Predicated region
    $region54: #{new_attention_model_forward.1} parent=1 // pred_check
      _
    $region55: #{new_attention_model_forward.1} parent=1 // pred_check_branch
      %68 = sbr.rel (0) target = $region57
    $region56: #{new_attention_model_forward.1} parent=1 // pred_region
      _
    $region57: #{new_attention_model_forward.1} parent=1 // pred_fallthru
      _
    // Predicated region
    $region58: #{new_attention_model_forward.1} parent=1 // pred_check
      _
    $region59: #{new_attention_model_forward.1} parent=1 // pred_check_branch
      %70 = sbr.rel (0) target = $region61
    $region60: #{new_attention_model_forward.1} parent=1 // pred_region
      %71 = dma.done [#allocation3], 2048
    $region61: #{new_attention_model_forward.1} parent=1 // pred_fallthru
      _
    // Predicated region
    $region62: #{new_attention_model_forward.1} parent=1 // pred_check
      _
    $region63: #{new_attention_model_forward.1} parent=1 // pred_check_branch
      %73 = sbr.rel (0) target = $region65
    $region64: #{new_attention_model_forward.1} parent=1 // pred_region
      %74 = dma.done [#allocation5], 2048
    $region65: #{new_attention_model_forward.1} parent=1 // pred_fallthru
      _
    %v75 = vld [vmem:[%s0] sm:$0xff]
    %v76 = vld [vmem:[%s0 + $0x8] sm:$0xff]
    %v77 = vld [vmem:[%s2] sm:$0xff]
    %v78 = vld [vmem:[%s3] sm:$0x1]
    %v80 = vlaneseq
    %v81 = vshrl.u32 %v80, 7
    %v82 = vsub.s32 0, %v81
    %v83 = vrot.slane %v78, %v82
    %vm85 = vcmask 64512
    %v87 = vsel %vm85, %v75, 0
    %v90 = vsel %vm85, %v76, 0
    %92 = vmatprep.subr.mxu0 0.0
    %93 = vmatpush1.msra.mxu0 0.0
    %94 = vmatprep.subr.mxu0 0.0
    %95 = vmatpush1.msra.mxu0 0.0
    %96 = vmatprep.subr.mxu0 0.0
    %97 = vmatpush1.msra.mxu0 0.0
    %98 = vmatprep.subr.mxu0 0.0
    %99 = vmatpush1.msra.mxu0 0.0
    %100 = vmatprep.subr.mxu0 0.0
    %101 = vmatpush1.msra.mxu0 0.0
    %102 = vmatprep.subr.mxu0 0.0
    %103 = vmatpush1.msra.mxu0 0.0
    %104 = vmatprep.subr.mxu0 0.0
    %105 = vmatpush1.msra.mxu0 0.0
    %106 = vmatprep.subr.mxu0 0.0
    %107 = vmatpush1.msra.mxu0 0.0
    %108 = vmatprep.subr.mxu0 0.0
    %109 = vmatpush1.msra.mxu0 0.0
    %110 = vmatprep.subr.mxu0 0.0
    %111 = vmatpush1.msra.mxu0 0.0
    %112 = vmatprep.subr.mxu0 0.0
    %113 = vmatpush1.msra.mxu0 0.0
    %114 = vmatprep.subr.mxu0 0.0
    %115 = vmatpush1.msra.mxu0 0.0
    %116 = vmatprep.subr.mxu0 0.0
    %117 = vmatpush1.msra.mxu0 0.0
    %118 = vmatprep.subr.mxu0 0.0
    %119 = vmatpush1.msra.mxu0 0.0
    %120 = vmatprep.subr.mxu0 0.0
    %121 = vmatpush1.msra.mxu0 0.0
    %122 = vmatprep.subr.mxu0 0.0
    %123 = vmatpush1.msra.mxu0 %v77
    %124 = vmatprep.subr.mxu0 0.0
    %125 = vmatpush2.msra.mxu0 0.0
    %126 = vmatprep.subr.mxu0 0.0
    %127 = vmatpush2.msra.mxu0 0.0
    %128 = vmatprep.subr.mxu0 0.0
    %129 = vmatpush2.msra.mxu0 0.0
    %130 = vmatprep.subr.mxu0 0.0
    %131 = vmatpush2.msra.mxu0 0.0
    %132 = vmatprep.subr.mxu0 0.0
    %133 = vmatpush2.msra.mxu0 0.0
    %134 = vmatprep.subr.mxu0 0.0
    %135 = vmatpush2.msra.mxu0 0.0
    %136 = vmatprep.subr.mxu0 0.0
    %137 = vmatpush2.msra.mxu0 0.0
    %138 = vmatprep.subr.mxu0 0.0
    %139 = vmatpush2.msra.mxu0 0.0
    %140 = vmatprep.subr.mxu0 0.0
    %141 = vmatpush2.msra.mxu0 0.0
    %142 = vmatprep.subr.mxu0 0.0
    %143 = vmatpush2.msra.mxu0 0.0
    %144 = vmatprep.subr.mxu0 0.0
    %145 = vmatpush2.msra.mxu0 0.0
    %146 = vmatprep.subr.mxu0 0.0
    %147 = vmatpush2.msra.mxu0 0.0
    %148 = vmatprep.subr.mxu0 0.0
    %149 = vmatpush2.msra.mxu0 0.0
    %150 = vmatprep.subr.mxu0 0.0
    %151 = vmatpush2.msra.mxu0 0.0
    %152 = vmatprep.subr.mxu0 0.0
    %153 = vmatpush2.msra.mxu0 0.0
    %154 = vmatprep.subr.mxu0 0.0
    %155 = vmatpush2.msra.mxu0 0.0
    %156 = vmatprep.mubr.f32.mxu0 0.0
    %157 = vmatmul.mubr.f32.gmra.mxu0 %v87
    %v158 = vpop.f32.mrf.mxu0
    %v159 = vadd.f32 %v83, %v158
    %v160 = vpop.f32.mrf.mxu0
    %161 = vmatprep.mubr.f32.mxu0 0.0
    %162 = vmatmul.mubr.f32.gmra.mxu0 %v90
    %v163 = vpop.f32.mrf.mxu0
    %v164 = vadd.f32 %v83, %v163
    %v165 = vpop.f32.mrf.mxu0
    %166 = vdwg.mxu0
    %v167 = vmul.f32 %v159, 0.5
    %v168 = vmul.f32 %v164, 0.5
    %v169 = vmul.f32 %v159, 0.70710677
    %v170 = vmul.f32 %v164, 0.70710677
    %v171 = vand.u32 2147483647, %v169
    %v172 = vand.u32 2147483647, %v170
    %v173 = vmul.f32 %v171, 0.3275911
    %v174 = vmul.f32 %v172, 0.3275911
    %v175 = vadd.f32 %v173, 1.0
    %v176 = vadd.f32 %v174, 1.0
    %v177 = vrcp.pop %v175
    %v178 = vmul.f32 1.0, %v177
    %v179 = vrcp.pop %v176
    %v180 = vmul.f32 1.0, %v179
    %v181 = vmul.f32 %v178, 1.0614054
    %v182 = vmul.f32 %v180, 1.0614054
    %v183 = vadd.f32 %v181, -1.4531521
    %v184 = vadd.f32 %v182, -1.4531521
    %v185 = vmul.f32 %v183, %v178
    %v186 = vmul.f32 %v184, %v180
    %v187 = vadd.f32 %v185, 1.4214138
    %v188 = vadd.f32 %v186, 1.4214138
    %v189 = vmul.f32 %v187, %v178
    %v190 = vmul.f32 %v188, %v180
    %v191 = vadd.f32 %v189, -0.28449672
    %v192 = vadd.f32 %v190, -0.28449672
    %v193 = vmul.f32 %v191, %v178
    %v194 = vmul.f32 %v192, %v180
    %v195 = vadd.f32 %v193, 0.2548296
    %v196 = vadd.f32 %v194, 0.2548296
    %v197 = vmul.f32 %v195, %v178
    %v198 = vmul.f32 %v196, %v180
    %v199 = vsub.f32 0.0, %v171
    %v200 = vsub.f32 0.0, %v172
    %v201 = vmul.f32 %v199, %v171
    %v202 = vmul.f32 %v200, %v172
    %v203 = vmul.f32 %v201, 1.442695
    %v204 = vpow.pop %v203
    %v205 = vmul.f32 %v202, 1.442695
    %v206 = vpow.pop %v205
    %v207 = vmul.f32 %v197, %v204
    %v208 = vmul.f32 %v198, %v206
    %v209 = vsub.f32 1.0, %v207
    %v210 = vsub.f32 1.0, %v208
    %vm211 = vcmp.lt.f32.partialorder %v169, 0.0
    %vm212 = vcmp.lt.f32.partialorder %v170, 0.0
    %v213 = vsub.f32 0.0, %v209
    %v214 = vsub.f32 0.0, %v210
    %v215 = vsel %vm211, %v213, %v209
    %v216 = vsel %vm212, %v214, %v210
    %v217 = vadd.f32 %v215, 1.0
    %v218 = vadd.f32 %v216, 1.0
    %v219 = vmul.f32 %v167, %v217
    %v220 = vmul.f32 %v168, %v218
    %v221 = vld [vmem:[%s1] sm:$0x1]
    %v222 = vld [vmem:[%s1 + $0x1] sm:$0x1]
    %v223 = vld [vmem:[%s4] sm:$0xff]
    %v224 = vld [vmem:[%s4 + $0x8] sm:$0xff]
    %v225 = vld [vmem:[%s4 + $0x10] sm:$0xff]
    %v226 = vld [vmem:[%s4 + $0x18] sm:$0xff]
    %v227 = vld [vmem:[%s5] sm:$0x1]
    %v229 = vlaneseq
    %v230 = vshrl.u32 %v229, 7
    %v231 = vsub.s32 0, %v230
    %v232 = vrot.slane %v227, %v231
    %v236 = vcombine.low %v221, %v222
    %v238 = vunpack.c.l.s4 1966171168
    %v239 = vunpack.c.0.s8 %v238
    %v240 = vlaneseq
    %v241 = vshrl.u32 %v240, 7
    %v242 = vsub.s32 %v239, %v241
    %v243 = vrot.slane %v236, %v242
    %v245 = vunpack.c.l.s4 1966171168
    %v246 = vunpack.c.0.s8 %v245
    %v247 = vlaneseq
    %v248 = vshrl.u32 %v247, 7
    %v249 = vsub.s32 %v246, %v248
    %v250 = vrot.slane %v243, %v249
    %vm251 = vcmask 261120
    %v252 = vsel %vm251, %v250, 0
    %254 = vmatprep.subr.mxu0 0.0
    %255 = vmatpush1.msra.mxu0 0.0
    %256 = vmatprep.subr.mxu0 0.0
    %257 = vmatpush1.msra.mxu0 0.0
    %258 = vmatprep.subr.mxu0 0.0
    %259 = vmatpush1.msra.mxu0 0.0
    %260 = vmatprep.subr.mxu0 0.0
    %261 = vmatpush1.msra.mxu0 0.0
    %262 = vmatprep.subr.mxu0 0.0
    %263 = vmatpush1.msra.mxu0 0.0
    %264 = vmatprep.subr.mxu0 0.0
    %265 = vmatpush1.msra.mxu0 0.0
    %266 = vmatprep.subr.mxu0 0.0
    %267 = vmatpush1.msra.mxu0 0.0
    %268 = vmatprep.subr.mxu0 0.0
    %269 = vmatpush1.msra.mxu0 0.0
    %270 = vmatprep.subr.mxu0 0.0
    %271 = vmatpush1.msra.mxu0 0.0
    %272 = vmatprep.subr.mxu0 0.0
    %273 = vmatpush1.msra.mxu0 0.0
    %274 = vmatprep.subr.mxu0 0.0
    %275 = vmatpush1.msra.mxu0 0.0
    %276 = vmatprep.subr.mxu0 0.0
    %277 = vmatpush1.msra.mxu0 0.0
    %278 = vmatprep.subr.mxu0 0.0
    %279 = vmatpush1.msra.mxu0 %v226
    %280 = vmatprep.subr.mxu0 0.0
    %281 = vmatpush1.msra.mxu0 %v225
    %282 = vmatprep.subr.mxu0 0.0
    %283 = vmatpush1.msra.mxu0 %v224
    %284 = vmatprep.subr.mxu0 0.0
    %285 = vmatpush1.msra.mxu0 %v223
    %286 = vmatprep.subr.mxu0 0.0
    %287 = vmatpush2.msra.mxu0 0.0
    %288 = vmatprep.subr.mxu0 0.0
    %289 = vmatpush2.msra.mxu0 0.0
    %290 = vmatprep.subr.mxu0 0.0
    %291 = vmatpush2.msra.mxu0 0.0
    %292 = vmatprep.subr.mxu0 0.0
    %293 = vmatpush2.msra.mxu0 0.0
    %294 = vmatprep.subr.mxu0 0.0
    %295 = vmatpush2.msra.mxu0 0.0
    %296 = vmatprep.subr.mxu0 0.0
    %297 = vmatpush2.msra.mxu0 0.0
    %298 = vmatprep.subr.mxu0 0.0
    %299 = vmatpush2.msra.mxu0 0.0
    %300 = vmatprep.subr.mxu0 0.0
    %301 = vmatpush2.msra.mxu0 0.0
    %302 = vmatprep.subr.mxu0 0.0
    %303 = vmatpush2.msra.mxu0 0.0
    %304 = vmatprep.subr.mxu0 0.0
    %305 = vmatpush2.msra.mxu0 0.0
    %306 = vmatprep.subr.mxu0 0.0
    %307 = vmatpush2.msra.mxu0 0.0
    %308 = vmatprep.subr.mxu0 0.0
    %309 = vmatpush2.msra.mxu0 0.0
    %310 = vmatprep.subr.mxu0 0.0
    %311 = vmatpush2.msra.mxu0 0.0
    %312 = vmatprep.subr.mxu0 0.0
    %313 = vmatpush2.msra.mxu0 0.0
    %314 = vmatprep.subr.mxu0 0.0
    %315 = vmatpush2.msra.mxu0 0.0
    %316 = vmatprep.subr.mxu0 0.0
    %317 = vmatpush2.msra.mxu0 0.0
    %318 = vmatprep.mubr.f32.mxu0 0.0
    %319 = vmatmul.mubr.f32.gmra.mxu0 %v252
    %v320 = vpop.f32.mrf.mxu0
    %v321 = vadd.f32 %v232, %v320
    %v322 = vpop.f32.mrf.mxu0
    %323 = vdwg.mxu0
    %v326 = vunpack.c.l.s4 1966171168
    %v327 = vunpack.c.0.s8 %v326
    %v328 = vlaneseq
    %v329 = vshrl.u32 %v328, 7
    %v330 = vsub.s32 %v327, %v329
    %v331 = vrot.slane %v321, %v330
    %v332 = vcombine.high %v331, %v331
    %v334 = vunpack.c.l.s4 1966171168
    %v335 = vunpack.c.0.s8 %v334
    %v336 = vlaneseq
    %v337 = vshrl.u32 %v336, 7
    %v338 = vsub.s32 %v335, %v337
    %v339 = vrot.slane %v331, %v338
    %v341 = vunpack.c.l.s4 1966171168
    %v342 = vunpack.c.0.s8 %v341
    %v343 = vlaneseq
    %v344 = vshrl.u32 %v343, 7
    %v345 = vsub.s32 %v342, %v344
    %v346 = vrot.slane %v332, %v345
    %v347 = vlaneseq
    %v348 = vshrl.u32 %v347, 7
    %v349 = vsub.s32 0, %v348
    %v350 = vrot.slane %v339, %v349
    %v351 = vlaneseq
    %v352 = vshrl.u32 %v351, 7
    %v353 = vsub.s32 0, %v352
    %v354 = vrot.slane %v346, %v353
    %v357 = vadd.f32 %v219, %v350
    %v358 = vadd.f32 %v220, %v354
    %v359 = vld [vmem:[#allocation2] sm:$0xff]
    %v360 = vld [vmem:[#allocation2 + $0x8] sm:$0xff]
    %v361 = vld [vmem:[#allocation2 + $0x10] sm:$0xff]
    %v362 = vld [vmem:[#allocation2 + $0x18] sm:$0xff]
    %v363 = vld [vmem:[#allocation2 + $0x20] sm:$0xff]
    %v364 = vld [vmem:[#allocation2 + $0x28] sm:$0xff]
    %v365 = vld [vmem:[#allocation2 + $0x30] sm:$0xff]
    %v366 = vld [vmem:[#allocation2 + $0x38] sm:$0xff]
    %v367 = vld [vmem:[%s7] sm:$0x3]
    %v369 = vlaneseq
    %v370 = vshrl.u32 %v369, 7
    %v371 = vsub.s32 0, %v370
    %v372 = vrot.slane %v367, %v371
    %v373 = vlaneseq
    %v374 = vshrl.u32 %v373, 7
    %v375 = vsub.s32 1, %v374
    %v376 = vrot.slane %v367, %v375
    %v380 = vsel %vm251, %v357, 0
    %v383 = vsel %vm251, %v358, 0
    %385 = vmatprep.subr.mxu0 0.0
    %386 = vmatpush1.msra.mxu0 0.0
    %387 = vmatprep.subr.mxu0 0.0
    %388 = vmatpush1.msra.mxu0 0.0
    %389 = vmatprep.subr.mxu0 0.0
    %390 = vmatpush1.msra.mxu0 0.0
    %391 = vmatprep.subr.mxu0 0.0
    %392 = vmatpush1.msra.mxu0 0.0
    %393 = vmatprep.subr.mxu0 0.0
    %394 = vmatpush1.msra.mxu0 0.0
    %395 = vmatprep.subr.mxu0 0.0
    %396 = vmatpush1.msra.mxu0 0.0
    %397 = vmatprep.subr.mxu0 0.0
    %398 = vmatpush1.msra.mxu0 0.0
    %399 = vmatprep.subr.mxu0 0.0
    %400 = vmatpush1.msra.mxu0 0.0
    %401 = vmatprep.subr.mxu0 0.0
    %402 = vmatpush1.msra.mxu0 0.0
    %403 = vmatprep.subr.mxu0 0.0
    %404 = vmatpush1.msra.mxu0 0.0
    %405 = vmatprep.subr.mxu0 0.0
    %406 = vmatpush1.msra.mxu0 0.0
    %407 = vmatprep.subr.mxu0 0.0
    %408 = vmatpush1.msra.mxu0 0.0
    %409 = vmatprep.subr.mxu0 %v366
    %410 = vmatpush1.msra.mxu0 %v365
    %411 = vmatprep.subr.mxu0 %v364
    %412 = vmatpush1.msra.mxu0 %v363
    %413 = vmatprep.subr.mxu0 %v362
    %414 = vmatpush1.msra.mxu0 %v361
    %415 = vmatprep.subr.mxu0 %v360
    %416 = vmatpush1.msra.mxu0 %v359
    %417 = vmatprep.subr.mxu0 0.0
    %418 = vmatpush2.msra.mxu0 0.0
    %419 = vmatprep.subr.mxu0 0.0
    %420 = vmatpush2.msra.mxu0 0.0
    %421 = vmatprep.subr.mxu0 0.0
    %422 = vmatpush2.msra.mxu0 0.0
    %423 = vmatprep.subr.mxu0 0.0
    %424 = vmatpush2.msra.mxu0 0.0
    %425 = vmatprep.subr.mxu0 0.0
    %426 = vmatpush2.msra.mxu0 0.0
    %427 = vmatprep.subr.mxu0 0.0
    %428 = vmatpush2.msra.mxu0 0.0
    %429 = vmatprep.subr.mxu0 0.0
    %430 = vmatpush2.msra.mxu0 0.0
    %431 = vmatprep.subr.mxu0 0.0
    %432 = vmatpush2.msra.mxu0 0.0
    %433 = vmatprep.subr.mxu0 0.0
    %434 = vmatpush2.msra.mxu0 0.0
    %435 = vmatprep.subr.mxu0 0.0
    %436 = vmatpush2.msra.mxu0 0.0
    %437 = vmatprep.subr.mxu0 0.0
    %438 = vmatpush2.msra.mxu0 0.0
    %439 = vmatprep.subr.mxu0 0.0
    %440 = vmatpush2.msra.mxu0 0.0
    %441 = vmatprep.subr.mxu0 0.0
    %442 = vmatpush2.msra.mxu0 0.0
    %443 = vmatprep.subr.mxu0 0.0
    %444 = vmatpush2.msra.mxu0 0.0
    %445 = vmatprep.subr.mxu0 0.0
    %446 = vmatpush2.msra.mxu0 0.0
    %447 = vmatprep.subr.mxu0 0.0
    %448 = vmatpush2.msra.mxu0 0.0
    %449 = vmatprep.mubr.f32.mxu0 0.0
    %450 = vmatmul.mubr.f32.gmra.mxu0 %v380
    %v451 = vpop.f32.mrf.mxu0
    %v452 = vadd.f32 %v372, %v451
    %v453 = vpop.f32.mrf.mxu0
    %v454 = vadd.f32 %v376, %v453
    %455 = vmatprep.mubr.f32.mxu0 0.0
    %456 = vmatmul.mubr.f32.gmra.mxu0 %v383
    %v457 = vpop.f32.mrf.mxu0
    %v458 = vadd.f32 %v372, %v457
    %v459 = vpop.f32.mrf.mxu0
    %v460 = vadd.f32 %v376, %v459
    %461 = vdwg.mxu0
    %463 = vrot.lane.b32.xlu0 %v452, 64
    %v464 = vpop.permute.xlu0 %463
    %vm465 = vcmask 130048
    %v466 = vsel %vm465, %v452, 0
    %v468 = vsel %vm465, %v464, 0
    %470 = vmatprep.subr.mxu0 0.0
    %471 = vmatpush1.xpose.msra.mxu0 0.0
    %472 = vmatprep.subr.mxu0 0.0
    %473 = vmatpush1.xpose.msra.mxu0 0.0
    %474 = vmatprep.subr.mxu0 0.0
    %475 = vmatpush1.xpose.msra.mxu0 0.0
    %476 = vmatprep.subr.mxu0 0.0
    %477 = vmatpush1.xpose.msra.mxu0 0.0
    %478 = vmatprep.subr.mxu0 0.0
    %479 = vmatpush1.xpose.msra.mxu0 0.0
    %480 = vmatprep.subr.mxu0 0.0
    %481 = vmatpush1.xpose.msra.mxu0 0.0
    %482 = vmatprep.subr.mxu0 0.0
    %483 = vmatpush1.xpose.msra.mxu0 0.0
    %484 = vmatprep.subr.mxu0 0.0
    %485 = vmatpush1.xpose.msra.mxu0 0.0
    %486 = vmatprep.subr.mxu0 0.0
    %487 = vmatpush1.xpose.msra.mxu0 0.0
    %488 = vmatprep.subr.mxu0 0.0
    %489 = vmatpush1.xpose.msra.mxu0 0.0
    %490 = vmatprep.subr.mxu0 0.0
    %491 = vmatpush1.xpose.msra.mxu0 0.0
    %492 = vmatprep.subr.mxu0 0.0
    %493 = vmatpush1.xpose.msra.mxu0 0.0
    %494 = vmatprep.subr.mxu0 0.0
    %495 = vmatpush1.xpose.msra.mxu0 0.0
    %496 = vmatprep.subr.mxu0 0.0
    %497 = vmatpush1.xpose.msra.mxu0 0.0
    %498 = vmatprep.subr.mxu0 0.0
    %499 = vmatpush1.xpose.msra.mxu0 0.0
    %500 = vmatprep.subr.mxu0 0.0
    %501 = vmatpush1.xpose.msra.mxu0 %v468
    %502 = vmatprep.subr.mxu0 0.0
    %503 = vmatpush2.xpose.msra.mxu0 0.0
    %504 = vmatprep.subr.mxu0 0.0
    %505 = vmatpush2.xpose.msra.mxu0 0.0
    %506 = vmatprep.subr.mxu0 0.0
    %507 = vmatpush2.xpose.msra.mxu0 0.0
    %508 = vmatprep.subr.mxu0 0.0
    %509 = vmatpush2.xpose.msra.mxu0 0.0
    %510 = vmatprep.subr.mxu0 0.0
    %511 = vmatpush2.xpose.msra.mxu0 0.0
    %512 = vmatprep.subr.mxu0 0.0
    %513 = vmatpush2.xpose.msra.mxu0 0.0
    %514 = vmatprep.subr.mxu0 0.0
    %515 = vmatpush2.xpose.msra.mxu0 0.0
    %516 = vmatprep.subr.mxu0 0.0
    %517 = vmatpush2.xpose.msra.mxu0 0.0
    %518 = vmatprep.subr.mxu0 0.0
    %519 = vmatpush2.xpose.msra.mxu0 0.0
    %520 = vmatprep.subr.mxu0 0.0
    %521 = vmatpush2.xpose.msra.mxu0 0.0
    %522 = vmatprep.subr.mxu0 0.0
    %523 = vmatpush2.xpose.msra.mxu0 0.0
    %524 = vmatprep.subr.mxu0 0.0
    %525 = vmatpush2.xpose.msra.mxu0 0.0
    %526 = vmatprep.subr.mxu0 0.0
    %527 = vmatpush2.xpose.msra.mxu0 0.0
    %528 = vmatprep.subr.mxu0 0.0
    %529 = vmatpush2.xpose.msra.mxu0 0.0
    %530 = vmatprep.subr.mxu0 0.0
    %531 = vmatpush2.xpose.msra.mxu0 0.0
    %532 = vmatprep.subr.mxu0 0.0
    %533 = vmatpush2.xpose.msra.mxu0 0.0
    %534 = vmatprep.mubr.f32.mxu0 0.0
    %535 = vmatmul.mubr.f32.gmra.mxu0 %v466
    %v536 = vpop.f32.mrf.mxu0
    %v537 = vadd.f32 0.0, %v536
    %v538 = vpop.f32.mrf.mxu0
    %539 = vdwg.mxu0
    %541 = vrot.lane.b32.xlu0 %v458, 64
    %v542 = vpop.permute.xlu0 %541
    %v543 = vsel %vm465, %v458, 0
    %v545 = vsel %vm465, %v542, 0
    %547 = vmatprep.subr.mxu0 0.0
    %548 = vmatpush1.xpose.msra.mxu0 0.0
    %549 = vmatprep.subr.mxu0 0.0
    %550 = vmatpush1.xpose.msra.mxu0 0.0
    %551 = vmatprep.subr.mxu0 0.0
    %552 = vmatpush1.xpose.msra.mxu0 0.0
    %553 = vmatprep.subr.mxu0 0.0
    %554 = vmatpush1.xpose.msra.mxu0 0.0
    %555 = vmatprep.subr.mxu0 0.0
    %556 = vmatpush1.xpose.msra.mxu0 0.0
    %557 = vmatprep.subr.mxu0 0.0
    %558 = vmatpush1.xpose.msra.mxu0 0.0
    %559 = vmatprep.subr.mxu0 0.0
    %560 = vmatpush1.xpose.msra.mxu0 0.0
    %561 = vmatprep.subr.mxu0 0.0
    %562 = vmatpush1.xpose.msra.mxu0 0.0
    %563 = vmatprep.subr.mxu0 0.0
    %564 = vmatpush1.xpose.msra.mxu0 0.0
    %565 = vmatprep.subr.mxu0 0.0
    %566 = vmatpush1.xpose.msra.mxu0 0.0
    %567 = vmatprep.subr.mxu0 0.0
    %568 = vmatpush1.xpose.msra.mxu0 0.0
    %569 = vmatprep.subr.mxu0 0.0
    %570 = vmatpush1.xpose.msra.mxu0 0.0
    %571 = vmatprep.subr.mxu0 0.0
    %572 = vmatpush1.xpose.msra.mxu0 0.0
    %573 = vmatprep.subr.mxu0 0.0
    %574 = vmatpush1.xpose.msra.mxu0 0.0
    %575 = vmatprep.subr.mxu0 0.0
    %576 = vmatpush1.xpose.msra.mxu0 0.0
    %577 = vmatprep.subr.mxu0 0.0
    %578 = vmatpush1.xpose.msra.mxu0 %v545
    %579 = vmatprep.subr.mxu0 0.0
    %580 = vmatpush2.xpose.msra.mxu0 0.0
    %581 = vmatprep.subr.mxu0 0.0
    %582 = vmatpush2.xpose.msra.mxu0 0.0
    %583 = vmatprep.subr.mxu0 0.0
    %584 = vmatpush2.xpose.msra.mxu0 0.0
    %585 = vmatprep.subr.mxu0 0.0
    %586 = vmatpush2.xpose.msra.mxu0 0.0
    %587 = vmatprep.subr.mxu0 0.0
    %588 = vmatpush2.xpose.msra.mxu0 0.0
    %589 = vmatprep.subr.mxu0 0.0
    %590 = vmatpush2.xpose.msra.mxu0 0.0
    %591 = vmatprep.subr.mxu0 0.0
    %592 = vmatpush2.xpose.msra.mxu0 0.0
    %593 = vmatprep.subr.mxu0 0.0
    %594 = vmatpush2.xpose.msra.mxu0 0.0
    %595 = vmatprep.subr.mxu0 0.0
    %596 = vmatpush2.xpose.msra.mxu0 0.0
    %597 = vmatprep.subr.mxu0 0.0
    %598 = vmatpush2.xpose.msra.mxu0 0.0
    %599 = vmatprep.subr.mxu0 0.0
    %600 = vmatpush2.xpose.msra.mxu0 0.0
    %601 = vmatprep.subr.mxu0 0.0
    %602 = vmatpush2.xpose.msra.mxu0 0.0
    %603 = vmatprep.subr.mxu0 0.0
    %604 = vmatpush2.xpose.msra.mxu0 0.0
    %605 = vmatprep.subr.mxu0 0.0
    %606 = vmatpush2.xpose.msra.mxu0 0.0
    %607 = vmatprep.subr.mxu0 0.0
    %608 = vmatpush2.xpose.msra.mxu0 0.0
    %609 = vmatprep.subr.mxu0 0.0
    %610 = vmatpush2.xpose.msra.mxu0 0.0
    %611 = vmatprep.mubr.f32.mxu0 0.0
    %612 = vmatmul.mubr.f32.gmra.mxu0 %v543
    %v613 = vpop.f32.mrf.mxu0
    %v614 = vadd.f32 0.0, %v613
    %v615 = vpop.f32.mrf.mxu0
    %616 = vdwg.mxu0
    %v617 = vmul.f32 %v537, 0.25
    %v618 = vmul.f32 %v614, 0.25
    %v619 = vsel %vm85, %v617, -inf
    %620 = vmax.xlane.f32.xlu0 %v619
    %v621 = vpop.xlane.xlu0 %620
    %v622 = vsel %vm85, %v618, -inf
    %623 = vmax.xlane.f32.xlu0 %v622
    %v624 = vpop.xlane.xlu0 %623
    %v625 = vsub.f32 %v617, %v621
    %v626 = vsub.f32 %v618, %v624
    %v627 = vmul.f32 %v625, 1.442695
    %v628 = vpow.pop %v627
    %v629 = vmul.f32 %v626, 1.442695
    %v630 = vpow.pop %v629
    %v631 = vsel %vm85, %v628, 0.0
    %632 = vadd.xlane.f32.xlu0 %v631
    %v633 = vpop.xlane.xlu0 %632
    %v634 = vsel %vm85, %v630, 0.0
    %635 = vadd.xlane.f32.xlu0 %v634
    %v636 = vpop.xlane.xlu0 %635
    %v637 = vrcp.pop %v633
    %v638 = vrcp.pop %v636
    %v639 = vmul.f32 %v628, %v637
    %v640 = vmul.f32 %v630, %v638
    %v642 = vsel %vm85, %v639, 0
    %644 = vmatprep.subr.mxu0 0.0
    %645 = vmatpush1.msra.mxu0 0.0
    %646 = vmatprep.subr.mxu0 0.0
    %647 = vmatpush1.msra.mxu0 0.0
    %648 = vmatprep.subr.mxu0 0.0
    %649 = vmatpush1.msra.mxu0 0.0
    %650 = vmatprep.subr.mxu0 0.0
    %651 = vmatpush1.msra.mxu0 0.0
    %652 = vmatprep.subr.mxu0 0.0
    %653 = vmatpush1.msra.mxu0 0.0
    %654 = vmatprep.subr.mxu0 0.0
    %655 = vmatpush1.msra.mxu0 0.0
    %656 = vmatprep.subr.mxu0 0.0
    %657 = vmatpush1.msra.mxu0 0.0
    %658 = vmatprep.subr.mxu0 0.0
    %659 = vmatpush1.msra.mxu0 0.0
    %660 = vmatprep.subr.mxu0 0.0
    %661 = vmatpush1.msra.mxu0 0.0
    %662 = vmatprep.subr.mxu0 0.0
    %663 = vmatpush1.msra.mxu0 0.0
    %664 = vmatprep.subr.mxu0 0.0
    %665 = vmatpush1.msra.mxu0 0.0
    %666 = vmatprep.subr.mxu0 0.0
    %667 = vmatpush1.msra.mxu0 0.0
    %668 = vmatprep.subr.mxu0 0.0
    %669 = vmatpush1.msra.mxu0 0.0
    %670 = vmatprep.subr.mxu0 0.0
    %671 = vmatpush1.msra.mxu0 0.0
    %672 = vmatprep.subr.mxu0 0.0
    %673 = vmatpush1.msra.mxu0 0.0
    %674 = vmatprep.subr.mxu0 0.0
    %675 = vmatpush1.msra.mxu0 %v454
    %676 = vmatprep.subr.mxu0 0.0
    %677 = vmatpush2.msra.mxu0 0.0
    %678 = vmatprep.subr.mxu0 0.0
    %679 = vmatpush2.msra.mxu0 0.0
    %680 = vmatprep.subr.mxu0 0.0
    %681 = vmatpush2.msra.mxu0 0.0
    %682 = vmatprep.subr.mxu0 0.0
    %683 = vmatpush2.msra.mxu0 0.0
    %684 = vmatprep.subr.mxu0 0.0
    %685 = vmatpush2.msra.mxu0 0.0
    %686 = vmatprep.subr.mxu0 0.0
    %687 = vmatpush2.msra.mxu0 0.0
    %688 = vmatprep.subr.mxu0 0.0
    %689 = vmatpush2.msra.mxu0 0.0
    %690 = vmatprep.subr.mxu0 0.0
    %691 = vmatpush2.msra.mxu0 0.0
    %692 = vmatprep.subr.mxu0 0.0
    %693 = vmatpush2.msra.mxu0 0.0
    %694 = vmatprep.subr.mxu0 0.0
    %695 = vmatpush2.msra.mxu0 0.0
    %696 = vmatprep.subr.mxu0 0.0
    %697 = vmatpush2.msra.mxu0 0.0
    %698 = vmatprep.subr.mxu0 0.0
    %699 = vmatpush2.msra.mxu0 0.0
    %700 = vmatprep.subr.mxu0 0.0
    %701 = vmatpush2.msra.mxu0 0.0
    %702 = vmatprep.subr.mxu0 0.0
    %703 = vmatpush2.msra.mxu0 0.0
    %704 = vmatprep.subr.mxu0 0.0
    %705 = vmatpush2.msra.mxu0 0.0
    %706 = vmatprep.subr.mxu0 0.0
    %707 = vmatpush2.msra.mxu0 0.0
    %708 = vmatprep.mubr.f32.mxu0 0.0
    %709 = vmatmul.mubr.f32.gmra.mxu0 %v642
    %v710 = vpop.f32.mrf.mxu0
    %v711 = vadd.f32 0.0, %v710
    %v712 = vpop.f32.mrf.mxu0
    %713 = vdwg.mxu0
    %v715 = vsel %vm85, %v640, 0
    %717 = vmatprep.subr.mxu0 0.0
    %718 = vmatpush1.msra.mxu0 0.0
    %719 = vmatprep.subr.mxu0 0.0
    %720 = vmatpush1.msra.mxu0 0.0
    %721 = vmatprep.subr.mxu0 0.0
    %722 = vmatpush1.msra.mxu0 0.0
    %723 = vmatprep.subr.mxu0 0.0
    %724 = vmatpush1.msra.mxu0 0.0
    %725 = vmatprep.subr.mxu0 0.0
    %726 = vmatpush1.msra.mxu0 0.0
    %727 = vmatprep.subr.mxu0 0.0
    %728 = vmatpush1.msra.mxu0 0.0
    %729 = vmatprep.subr.mxu0 0.0
    %730 = vmatpush1.msra.mxu0 0.0
    %731 = vmatprep.subr.mxu0 0.0
    %732 = vmatpush1.msra.mxu0 0.0
    %733 = vmatprep.subr.mxu0 0.0
    %734 = vmatpush1.msra.mxu0 0.0
    %735 = vmatprep.subr.mxu0 0.0
    %736 = vmatpush1.msra.mxu0 0.0
    %737 = vmatprep.subr.mxu0 0.0
    %738 = vmatpush1.msra.mxu0 0.0
    %739 = vmatprep.subr.mxu0 0.0
    %740 = vmatpush1.msra.mxu0 0.0
    %741 = vmatprep.subr.mxu0 0.0
    %742 = vmatpush1.msra.mxu0 0.0
    %743 = vmatprep.subr.mxu0 0.0
    %744 = vmatpush1.msra.mxu0 0.0
    %745 = vmatprep.subr.mxu0 0.0
    %746 = vmatpush1.msra.mxu0 0.0
    %747 = vmatprep.subr.mxu0 0.0
    %748 = vmatpush1.msra.mxu0 %v460
    %749 = vmatprep.subr.mxu0 0.0
    %750 = vmatpush2.msra.mxu0 0.0
    %751 = vmatprep.subr.mxu0 0.0
    %752 = vmatpush2.msra.mxu0 0.0
    %753 = vmatprep.subr.mxu0 0.0
    %754 = vmatpush2.msra.mxu0 0.0
    %755 = vmatprep.subr.mxu0 0.0
    %756 = vmatpush2.msra.mxu0 0.0
    %757 = vmatprep.subr.mxu0 0.0
    %758 = vmatpush2.msra.mxu0 0.0
    %759 = vmatprep.subr.mxu0 0.0
    %760 = vmatpush2.msra.mxu0 0.0
    %761 = vmatprep.subr.mxu0 0.0
    %762 = vmatpush2.msra.mxu0 0.0
    %763 = vmatprep.subr.mxu0 0.0
    %764 = vmatpush2.msra.mxu0 0.0
    %765 = vmatprep.subr.mxu0 0.0
    %766 = vmatpush2.msra.mxu0 0.0
    %767 = vmatprep.subr.mxu0 0.0
    %768 = vmatpush2.msra.mxu0 0.0
    %769 = vmatprep.subr.mxu0 0.0
    %770 = vmatpush2.msra.mxu0 0.0
    %771 = vmatprep.subr.mxu0 0.0
    %772 = vmatpush2.msra.mxu0 0.0
    %773 = vmatprep.subr.mxu0 0.0
    %774 = vmatpush2.msra.mxu0 0.0
    %775 = vmatprep.subr.mxu0 0.0
    %776 = vmatpush2.msra.mxu0 0.0
    %777 = vmatprep.subr.mxu0 0.0
    %778 = vmatpush2.msra.mxu0 0.0
    %779 = vmatprep.subr.mxu0 0.0
    %780 = vmatpush2.msra.mxu0 0.0
    %781 = vmatprep.mubr.f32.mxu0 0.0
    %782 = vmatmul.mubr.f32.gmra.mxu0 %v715
    %v783 = vpop.f32.mrf.mxu0
    %v784 = vadd.f32 0.0, %v783
    %v785 = vpop.f32.mrf.mxu0
    %786 = vdwg.mxu0
    %787 = vrot.lane.b32.xlu0 %v452, 112
    %v788 = vpop.permute.xlu0 %787
    %789 = vrot.lane.b32.xlu0 %v452, 48
    %v790 = vpop.permute.xlu0 %789
    %v791 = vsel %vm465, %v788, 0
    %v793 = vsel %vm465, %v790, 0
    %795 = vmatprep.subr.mxu0 0.0
    %796 = vmatpush1.xpose.msra.mxu0 0.0
    %797 = vmatprep.subr.mxu0 0.0
    %798 = vmatpush1.xpose.msra.mxu0 0.0
    %799 = vmatprep.subr.mxu0 0.0
    %800 = vmatpush1.xpose.msra.mxu0 0.0
    %801 = vmatprep.subr.mxu0 0.0
    %802 = vmatpush1.xpose.msra.mxu0 0.0
    %803 = vmatprep.subr.mxu0 0.0
    %804 = vmatpush1.xpose.msra.mxu0 0.0
    %805 = vmatprep.subr.mxu0 0.0
    %806 = vmatpush1.xpose.msra.mxu0 0.0
    %807 = vmatprep.subr.mxu0 0.0
    %808 = vmatpush1.xpose.msra.mxu0 0.0
    %809 = vmatprep.subr.mxu0 0.0
    %810 = vmatpush1.xpose.msra.mxu0 0.0
    %811 = vmatprep.subr.mxu0 0.0
    %812 = vmatpush1.xpose.msra.mxu0 0.0
    %813 = vmatprep.subr.mxu0 0.0
    %814 = vmatpush1.xpose.msra.mxu0 0.0
    %815 = vmatprep.subr.mxu0 0.0
    %816 = vmatpush1.xpose.msra.mxu0 0.0
    %817 = vmatprep.subr.mxu0 0.0
    %818 = vmatpush1.xpose.msra.mxu0 0.0
    %819 = vmatprep.subr.mxu0 0.0
    %820 = vmatpush1.xpose.msra.mxu0 0.0
    %821 = vmatprep.subr.mxu0 0.0
    %822 = vmatpush1.xpose.msra.mxu0 0.0
    %823 = vmatprep.subr.mxu0 0.0
    %824 = vmatpush1.xpose.msra.mxu0 0.0
    %825 = vmatprep.subr.mxu0 0.0
    %826 = vmatpush1.xpose.msra.mxu0 %v793
    %827 = vmatprep.subr.mxu0 0.0
    %828 = vmatpush2.xpose.msra.mxu0 0.0
    %829 = vmatprep.subr.mxu0 0.0
    %830 = vmatpush2.xpose.msra.mxu0 0.0
    %831 = vmatprep.subr.mxu0 0.0
    %832 = vmatpush2.xpose.msra.mxu0 0.0
    %833 = vmatprep.subr.mxu0 0.0
    %834 = vmatpush2.xpose.msra.mxu0 0.0
    %835 = vmatprep.subr.mxu0 0.0
    %836 = vmatpush2.xpose.msra.mxu0 0.0
    %837 = vmatprep.subr.mxu0 0.0
    %838 = vmatpush2.xpose.msra.mxu0 0.0
    %839 = vmatprep.subr.mxu0 0.0
    %840 = vmatpush2.xpose.msra.mxu0 0.0
    %841 = vmatprep.subr.mxu0 0.0
    %842 = vmatpush2.xpose.msra.mxu0 0.0
    %843 = vmatprep.subr.mxu0 0.0
    %844 = vmatpush2.xpose.msra.mxu0 0.0
    %845 = vmatprep.subr.mxu0 0.0
    %846 = vmatpush2.xpose.msra.mxu0 0.0
    %847 = vmatprep.subr.mxu0 0.0
    %848 = vmatpush2.xpose.msra.mxu0 0.0
    %849 = vmatprep.subr.mxu0 0.0
    %850 = vmatpush2.xpose.msra.mxu0 0.0
    %851 = vmatprep.subr.mxu0 0.0
    %852 = vmatpush2.xpose.msra.mxu0 0.0
    %853 = vmatprep.subr.mxu0 0.0
    %854 = vmatpush2.xpose.msra.mxu0 0.0
    %855 = vmatprep.subr.mxu0 0.0
    %856 = vmatpush2.xpose.msra.mxu0 0.0
    %857 = vmatprep.subr.mxu0 0.0
    %858 = vmatpush2.xpose.msra.mxu0 0.0
    %859 = vmatprep.mubr.f32.mxu0 0.0
    %860 = vmatmul.mubr.f32.gmra.mxu0 %v791
    %v861 = vpop.f32.mrf.mxu0
    %v862 = vadd.f32 0.0, %v861
    %v863 = vpop.f32.mrf.mxu0
    %864 = vdwg.mxu0
    %865 = vrot.lane.b32.xlu0 %v458, 112
    %v866 = vpop.permute.xlu0 %865
    %867 = vrot.lane.b32.xlu0 %v458, 48
    %v868 = vpop.permute.xlu0 %867
    %v869 = vsel %vm465, %v866, 0
    %v871 = vsel %vm465, %v868, 0
    %873 = vmatprep.subr.mxu0 0.0
    %874 = vmatpush1.xpose.msra.mxu0 0.0
    %875 = vmatprep.subr.mxu0 0.0
    %876 = vmatpush1.xpose.msra.mxu0 0.0
    %877 = vmatprep.subr.mxu0 0.0
    %878 = vmatpush1.xpose.msra.mxu0 0.0
    %879 = vmatprep.subr.mxu0 0.0
    %880 = vmatpush1.xpose.msra.mxu0 0.0
    %881 = vmatprep.subr.mxu0 0.0
    %882 = vmatpush1.xpose.msra.mxu0 0.0
    %883 = vmatprep.subr.mxu0 0.0
    %884 = vmatpush1.xpose.msra.mxu0 0.0
    %885 = vmatprep.subr.mxu0 0.0
    %886 = vmatpush1.xpose.msra.mxu0 0.0
    %887 = vmatprep.subr.mxu0 0.0
    %888 = vmatpush1.xpose.msra.mxu0 0.0
    %889 = vmatprep.subr.mxu0 0.0
    %890 = vmatpush1.xpose.msra.mxu0 0.0
    %891 = vmatprep.subr.mxu0 0.0
    %892 = vmatpush1.xpose.msra.mxu0 0.0
    %893 = vmatprep.subr.mxu0 0.0
    %894 = vmatpush1.xpose.msra.mxu0 0.0
    %895 = vmatprep.subr.mxu0 0.0
    %896 = vmatpush1.xpose.msra.mxu0 0.0
    %897 = vmatprep.subr.mxu0 0.0
    %898 = vmatpush1.xpose.msra.mxu0 0.0
    %899 = vmatprep.subr.mxu0 0.0
    %900 = vmatpush1.xpose.msra.mxu0 0.0
    %901 = vmatprep.subr.mxu0 0.0
    %902 = vmatpush1.xpose.msra.mxu0 0.0
    %903 = vmatprep.subr.mxu0 0.0
    %904 = vmatpush1.xpose.msra.mxu0 %v871
    %905 = vmatprep.subr.mxu0 0.0
    %906 = vmatpush2.xpose.msra.mxu0 0.0
    %907 = vmatprep.subr.mxu0 0.0
    %908 = vmatpush2.xpose.msra.mxu0 0.0
    %909 = vmatprep.subr.mxu0 0.0
    %910 = vmatpush2.xpose.msra.mxu0 0.0
    %911 = vmatprep.subr.mxu0 0.0
    %912 = vmatpush2.xpose.msra.mxu0 0.0
    %913 = vmatprep.subr.mxu0 0.0
    %914 = vmatpush2.xpose.msra.mxu0 0.0
    %915 = vmatprep.subr.mxu0 0.0
    %916 = vmatpush2.xpose.msra.mxu0 0.0
    %917 = vmatprep.subr.mxu0 0.0
    %918 = vmatpush2.xpose.msra.mxu0 0.0
    %919 = vmatprep.subr.mxu0 0.0
    %920 = vmatpush2.xpose.msra.mxu0 0.0
    %921 = vmatprep.subr.mxu0 0.0
    %922 = vmatpush2.xpose.msra.mxu0 0.0
    %923 = vmatprep.subr.mxu0 0.0
    %924 = vmatpush2.xpose.msra.mxu0 0.0
    %925 = vmatprep.subr.mxu0 0.0
    %926 = vmatpush2.xpose.msra.mxu0 0.0
    %927 = vmatprep.subr.mxu0 0.0
    %928 = vmatpush2.xpose.msra.mxu0 0.0
    %929 = vmatprep.subr.mxu0 0.0
    %930 = vmatpush2.xpose.msra.mxu0 0.0
    %931 = vmatprep.subr.mxu0 0.0
    %932 = vmatpush2.xpose.msra.mxu0 0.0
    %933 = vmatprep.subr.mxu0 0.0
    %934 = vmatpush2.xpose.msra.mxu0 0.0
    %935 = vmatprep.subr.mxu0 0.0
    %936 = vmatpush2.xpose.msra.mxu0 0.0
    %937 = vmatprep.mubr.f32.mxu0 0.0
    %938 = vmatmul.mubr.f32.gmra.mxu0 %v869
    %v939 = vpop.f32.mrf.mxu0
    %v940 = vadd.f32 0.0, %v939
    %v941 = vpop.f32.mrf.mxu0
    %942 = vdwg.mxu0
    %v943 = vmul.f32 %v862, 0.25
    %v944 = vmul.f32 %v940, 0.25
    %v945 = vsel %vm85, %v943, -inf
    %946 = vmax.xlane.f32.xlu0 %v945
    %v947 = vpop.xlane.xlu0 %946
    %v948 = vsel %vm85, %v944, -inf
    %949 = vmax.xlane.f32.xlu0 %v948
    %v950 = vpop.xlane.xlu0 %949
    %v951 = vsub.f32 %v943, %v947
    %v952 = vsub.f32 %v944, %v950
    %v953 = vmul.f32 %v951, 1.442695
    %v954 = vpow.pop %v953
    %v955 = vmul.f32 %v952, 1.442695
    %v956 = vpow.pop %v955
    %v957 = vsel %vm85, %v954, 0.0
    %958 = vadd.xlane.f32.xlu0 %v957
    %v959 = vpop.xlane.xlu0 %958
    %v960 = vsel %vm85, %v956, 0.0
    %961 = vadd.xlane.f32.xlu0 %v960
    %v962 = vpop.xlane.xlu0 %961
    %v963 = vrcp.pop %v959
    %v964 = vrcp.pop %v962
    %v965 = vmul.f32 %v954, %v963
    %v966 = vmul.f32 %v956, %v964
    %968 = vrot.lane.b32.xlu0 %v454, 112
    %v969 = vpop.permute.xlu0 %968
    %v972 = vsel %vm85, %v965, 0
    %974 = vmatprep.subr.mxu0 0.0
    %975 = vmatpush1.msra.mxu0 0.0
    %976 = vmatprep.subr.mxu0 0.0
    %977 = vmatpush1.msra.mxu0 0.0
    %978 = vmatprep.subr.mxu0 0.0
    %979 = vmatpush1.msra.mxu0 0.0
    %980 = vmatprep.subr.mxu0 0.0
    %981 = vmatpush1.msra.mxu0 0.0
    %982 = vmatprep.subr.mxu0 0.0
    %983 = vmatpush1.msra.mxu0 0.0
    %984 = vmatprep.subr.mxu0 0.0
    %985 = vmatpush1.msra.mxu0 0.0
    %986 = vmatprep.subr.mxu0 0.0
    %987 = vmatpush1.msra.mxu0 0.0
    %988 = vmatprep.subr.mxu0 0.0
    %989 = vmatpush1.msra.mxu0 0.0
    %990 = vmatprep.subr.mxu0 0.0
    %991 = vmatpush1.msra.mxu0 0.0
    %992 = vmatprep.subr.mxu0 0.0
    %993 = vmatpush1.msra.mxu0 0.0
    %994 = vmatprep.subr.mxu0 0.0
    %995 = vmatpush1.msra.mxu0 0.0
    %996 = vmatprep.subr.mxu0 0.0
    %997 = vmatpush1.msra.mxu0 0.0
    %998 = vmatprep.subr.mxu0 0.0
    %999 = vmatpush1.msra.mxu0 0.0
    %1000 = vmatprep.subr.mxu0 0.0
    %1001 = vmatpush1.msra.mxu0 0.0
    %1002 = vmatprep.subr.mxu0 0.0
    %1003 = vmatpush1.msra.mxu0 0.0
    %1004 = vmatprep.subr.mxu0 0.0
    %1005 = vmatpush1.msra.mxu0 %v969
    %1006 = vmatprep.subr.mxu0 0.0
    %1007 = vmatpush2.msra.mxu0 0.0
    %1008 = vmatprep.subr.mxu0 0.0
    %1009 = vmatpush2.msra.mxu0 0.0
    %1010 = vmatprep.subr.mxu0 0.0
    %1011 = vmatpush2.msra.mxu0 0.0
    %1012 = vmatprep.subr.mxu0 0.0
    %1013 = vmatpush2.msra.mxu0 0.0
    %1014 = vmatprep.subr.mxu0 0.0
    %1015 = vmatpush2.msra.mxu0 0.0
    %1016 = vmatprep.subr.mxu0 0.0
    %1017 = vmatpush2.msra.mxu0 0.0
    %1018 = vmatprep.subr.mxu0 0.0
    %1019 = vmatpush2.msra.mxu0 0.0
    %1020 = vmatprep.subr.mxu0 0.0
    %1021 = vmatpush2.msra.mxu0 0.0
    %1022 = vmatprep.subr.mxu0 0.0
    %1023 = vmatpush2.msra.mxu0 0.0
    %1024 = vmatprep.subr.mxu0 0.0
    %1025 = vmatpush2.msra.mxu0 0.0
    %1026 = vmatprep.subr.mxu0 0.0
    %1027 = vmatpush2.msra.mxu0 0.0
    %1028 = vmatprep.subr.mxu0 0.0
    %1029 = vmatpush2.msra.mxu0 0.0
    %1030 = vmatprep.subr.mxu0 0.0
    %1031 = vmatpush2.msra.mxu0 0.0
    %1032 = vmatprep.subr.mxu0 0.0
    %1033 = vmatpush2.msra.mxu0 0.0
    %1034 = vmatprep.subr.mxu0 0.0
    %1035 = vmatpush2.msra.mxu0 0.0
    %1036 = vmatprep.subr.mxu0 0.0
    %1037 = vmatpush2.msra.mxu0 0.0
    %1038 = vmatprep.mubr.f32.mxu0 0.0
    %1039 = vmatmul.mubr.f32.gmra.mxu0 %v972
    %v1040 = vpop.f32.mrf.mxu0
    %v1041 = vadd.f32 0.0, %v1040
    %v1042 = vpop.f32.mrf.mxu0
    %1043 = vdwg.mxu0
    %1045 = vrot.lane.b32.xlu0 %v460, 112
    %v1046 = vpop.permute.xlu0 %1045
    %v1049 = vsel %vm85, %v966, 0
    %1051 = vmatprep.subr.mxu0 0.0
    %1052 = vmatpush1.msra.mxu0 0.0
    %1053 = vmatprep.subr.mxu0 0.0
    %1054 = vmatpush1.msra.mxu0 0.0
    %1055 = vmatprep.subr.mxu0 0.0
    %1056 = vmatpush1.msra.mxu0 0.0
    %1057 = vmatprep.subr.mxu0 0.0
    %1058 = vmatpush1.msra.mxu0 0.0
    %1059 = vmatprep.subr.mxu0 0.0
    %1060 = vmatpush1.msra.mxu0 0.0
    %1061 = vmatprep.subr.mxu0 0.0
    %1062 = vmatpush1.msra.mxu0 0.0
    %1063 = vmatprep.subr.mxu0 0.0
    %1064 = vmatpush1.msra.mxu0 0.0
    %1065 = vmatprep.subr.mxu0 0.0
    %1066 = vmatpush1.msra.mxu0 0.0
    %1067 = vmatprep.subr.mxu0 0.0
    %1068 = vmatpush1.msra.mxu0 0.0
    %1069 = vmatprep.subr.mxu0 0.0
    %1070 = vmatpush1.msra.mxu0 0.0
    %1071 = vmatprep.subr.mxu0 0.0
    %1072 = vmatpush1.msra.mxu0 0.0
    %1073 = vmatprep.subr.mxu0 0.0
    %1074 = vmatpush1.msra.mxu0 0.0
    %1075 = vmatprep.subr.mxu0 0.0
    %1076 = vmatpush1.msra.mxu0 0.0
    %1077 = vmatprep.subr.mxu0 0.0
    %1078 = vmatpush1.msra.mxu0 0.0
    %1079 = vmatprep.subr.mxu0 0.0
    %1080 = vmatpush1.msra.mxu0 0.0
    %1081 = vmatprep.subr.mxu0 0.0
    %1082 = vmatpush1.msra.mxu0 %v1046
    %1083 = vmatprep.subr.mxu0 0.0
    %1084 = vmatpush2.msra.mxu0 0.0
    %1085 = vmatprep.subr.mxu0 0.0
    %1086 = vmatpush2.msra.mxu0 0.0
    %1087 = vmatprep.subr.mxu0 0.0
    %1088 = vmatpush2.msra.mxu0 0.0
    %1089 = vmatprep.subr.mxu0 0.0
    %1090 = vmatpush2.msra.mxu0 0.0
    %1091 = vmatprep.subr.mxu0 0.0
    %1092 = vmatpush2.msra.mxu0 0.0
    %1093 = vmatprep.subr.mxu0 0.0
    %1094 = vmatpush2.msra.mxu0 0.0
    %1095 = vmatprep.subr.mxu0 0.0
    %1096 = vmatpush2.msra.mxu0 0.0
    %1097 = vmatprep.subr.mxu0 0.0
    %1098 = vmatpush2.msra.mxu0 0.0
    %1099 = vmatprep.subr.mxu0 0.0
    %1100 = vmatpush2.msra.mxu0 0.0
    %1101 = vmatprep.subr.mxu0 0.0
    %1102 = vmatpush2.msra.mxu0 0.0
    %1103 = vmatprep.subr.mxu0 0.0
    %1104 = vmatpush2.msra.mxu0 0.0
    %1105 = vmatprep.subr.mxu0 0.0
    %1106 = vmatpush2.msra.mxu0 0.0
    %1107 = vmatprep.subr.mxu0 0.0
    %1108 = vmatpush2.msra.mxu0 0.0
    %1109 = vmatprep.subr.mxu0 0.0
    %1110 = vmatpush2.msra.mxu0 0.0
    %1111 = vmatprep.subr.mxu0 0.0
    %1112 = vmatpush2.msra.mxu0 0.0
    %1113 = vmatprep.subr.mxu0 0.0
    %1114 = vmatpush2.msra.mxu0 0.0
    %1115 = vmatprep.mubr.f32.mxu0 0.0
    %1116 = vmatmul.mubr.f32.gmra.mxu0 %v1049
    %v1117 = vpop.f32.mrf.mxu0
    %v1118 = vadd.f32 0.0, %v1117
    %v1119 = vpop.f32.mrf.mxu0
    %1120 = vdwg.mxu0
    %1121 = vrot.lane.b32.xlu0 %v452, 96
    %v1122 = vpop.permute.xlu0 %1121
    %1123 = vrot.lane.b32.xlu0 %v452, 32
    %v1124 = vpop.permute.xlu0 %1123
    %v1125 = vsel %vm465, %v1122, 0
    %v1127 = vsel %vm465, %v1124, 0
    %1129 = vmatprep.subr.mxu0 0.0
    %1130 = vmatpush1.xpose.msra.mxu0 0.0
    %1131 = vmatprep.subr.mxu0 0.0
    %1132 = vmatpush1.xpose.msra.mxu0 0.0
    %1133 = vmatprep.subr.mxu0 0.0
    %1134 = vmatpush1.xpose.msra.mxu0 0.0
    %1135 = vmatprep.subr.mxu0 0.0
    %1136 = vmatpush1.xpose.msra.mxu0 0.0
    %1137 = vmatprep.subr.mxu0 0.0
    %1138 = vmatpush1.xpose.msra.mxu0 0.0
    %1139 = vmatprep.subr.mxu0 0.0
    %1140 = vmatpush1.xpose.msra.mxu0 0.0
    %1141 = vmatprep.subr.mxu0 0.0
    %1142 = vmatpush1.xpose.msra.mxu0 0.0
    %1143 = vmatprep.subr.mxu0 0.0
    %1144 = vmatpush1.xpose.msra.mxu0 0.0
    %1145 = vmatprep.subr.mxu0 0.0
    %1146 = vmatpush1.xpose.msra.mxu0 0.0
    %1147 = vmatprep.subr.mxu0 0.0
    %1148 = vmatpush1.xpose.msra.mxu0 0.0
    %1149 = vmatprep.subr.mxu0 0.0
    %1150 = vmatpush1.xpose.msra.mxu0 0.0
    %1151 = vmatprep.subr.mxu0 0.0
    %1152 = vmatpush1.xpose.msra.mxu0 0.0
    %1153 = vmatprep.subr.mxu0 0.0
    %1154 = vmatpush1.xpose.msra.mxu0 0.0
    %1155 = vmatprep.subr.mxu0 0.0
    %1156 = vmatpush1.xpose.msra.mxu0 0.0
    %1157 = vmatprep.subr.mxu0 0.0
    %1158 = vmatpush1.xpose.msra.mxu0 0.0
    %1159 = vmatprep.subr.mxu0 0.0
    %1160 = vmatpush1.xpose.msra.mxu0 %v1127
    %1161 = vmatprep.subr.mxu0 0.0
    %1162 = vmatpush2.xpose.msra.mxu0 0.0
    %1163 = vmatprep.subr.mxu0 0.0
    %1164 = vmatpush2.xpose.msra.mxu0 0.0
    %1165 = vmatprep.subr.mxu0 0.0
    %1166 = vmatpush2.xpose.msra.mxu0 0.0
    %1167 = vmatprep.subr.mxu0 0.0
    %1168 = vmatpush2.xpose.msra.mxu0 0.0
    %1169 = vmatprep.subr.mxu0 0.0
    %1170 = vmatpush2.xpose.msra.mxu0 0.0
    %1171 = vmatprep.subr.mxu0 0.0
    %1172 = vmatpush2.xpose.msra.mxu0 0.0
    %1173 = vmatprep.subr.mxu0 0.0
    %1174 = vmatpush2.xpose.msra.mxu0 0.0
    %1175 = vmatprep.subr.mxu0 0.0
    %1176 = vmatpush2.xpose.msra.mxu0 0.0
    %1177 = vmatprep.subr.mxu0 0.0
    %1178 = vmatpush2.xpose.msra.mxu0 0.0
    %1179 = vmatprep.subr.mxu0 0.0
    %1180 = vmatpush2.xpose.msra.mxu0 0.0
    %1181 = vmatprep.subr.mxu0 0.0
    %1182 = vmatpush2.xpose.msra.mxu0 0.0
    %1183 = vmatprep.subr.mxu0 0.0
    %1184 = vmatpush2.xpose.msra.mxu0 0.0
    %1185 = vmatprep.subr.mxu0 0.0
    %1186 = vmatpush2.xpose.msra.mxu0 0.0
    %1187 = vmatprep.subr.mxu0 0.0
    %1188 = vmatpush2.xpose.msra.mxu0 0.0
    %1189 = vmatprep.subr.mxu0 0.0
    %1190 = vmatpush2.xpose.msra.mxu0 0.0
    %1191 = vmatprep.subr.mxu0 0.0
    %1192 = vmatpush2.xpose.msra.mxu0 0.0
    %1193 = vmatprep.mubr.f32.mxu0 0.0
    %1194 = vmatmul.mubr.f32.gmra.mxu0 %v1125
    %v1195 = vpop.f32.mrf.mxu0
    %v1196 = vadd.f32 0.0, %v1195
    %v1197 = vpop.f32.mrf.mxu0
    %1198 = vdwg.mxu0
    %1199 = vrot.lane.b32.xlu0 %v458, 96
    %v1200 = vpop.permute.xlu0 %1199
    %1201 = vrot.lane.b32.xlu0 %v458, 32
    %v1202 = vpop.permute.xlu0 %1201
    %v1203 = vsel %vm465, %v1200, 0
    %v1205 = vsel %vm465, %v1202, 0
    %1207 = vmatprep.subr.mxu0 0.0
    %1208 = vmatpush1.xpose.msra.mxu0 0.0
    %1209 = vmatprep.subr.mxu0 0.0
    %1210 = vmatpush1.xpose.msra.mxu0 0.0
    %1211 = vmatprep.subr.mxu0 0.0
    %1212 = vmatpush1.xpose.msra.mxu0 0.0
    %1213 = vmatprep.subr.mxu0 0.0
    %1214 = vmatpush1.xpose.msra.mxu0 0.0
    %1215 = vmatprep.subr.mxu0 0.0
    %1216 = vmatpush1.xpose.msra.mxu0 0.0
    %1217 = vmatprep.subr.mxu0 0.0
    %1218 = vmatpush1.xpose.msra.mxu0 0.0
    %1219 = vmatprep.subr.mxu0 0.0
    %1220 = vmatpush1.xpose.msra.mxu0 0.0
    %1221 = vmatprep.subr.mxu0 0.0
    %1222 = vmatpush1.xpose.msra.mxu0 0.0
    %1223 = vmatprep.subr.mxu0 0.0
    %1224 = vmatpush1.xpose.msra.mxu0 0.0
    %1225 = vmatprep.subr.mxu0 0.0
    %1226 = vmatpush1.xpose.msra.mxu0 0.0
    %1227 = vmatprep.subr.mxu0 0.0
    %1228 = vmatpush1.xpose.msra.mxu0 0.0
    %1229 = vmatprep.subr.mxu0 0.0
    %1230 = vmatpush1.xpose.msra.mxu0 0.0
    %1231 = vmatprep.subr.mxu0 0.0
    %1232 = vmatpush1.xpose.msra.mxu0 0.0
    %1233 = vmatprep.subr.mxu0 0.0
    %1234 = vmatpush1.xpose.msra.mxu0 0.0
    %1235 = vmatprep.subr.mxu0 0.0
    %1236 = vmatpush1.xpose.msra.mxu0 0.0
    %1237 = vmatprep.subr.mxu0 0.0
    %1238 = vmatpush1.xpose.msra.mxu0 %v1205
    %1239 = vmatprep.subr.mxu0 0.0
    %1240 = vmatpush2.xpose.msra.mxu0 0.0
    %1241 = vmatprep.subr.mxu0 0.0
    %1242 = vmatpush2.xpose.msra.mxu0 0.0
    %1243 = vmatprep.subr.mxu0 0.0
    %1244 = vmatpush2.xpose.msra.mxu0 0.0
    %1245 = vmatprep.subr.mxu0 0.0
    %1246 = vmatpush2.xpose.msra.mxu0 0.0
    %1247 = vmatprep.subr.mxu0 0.0
    %1248 = vmatpush2.xpose.msra.mxu0 0.0
    %1249 = vmatprep.subr.mxu0 0.0
    %1250 = vmatpush2.xpose.msra.mxu0 0.0
    %1251 = vmatprep.subr.mxu0 0.0
    %1252 = vmatpush2.xpose.msra.mxu0 0.0
    %1253 = vmatprep.subr.mxu0 0.0
    %1254 = vmatpush2.xpose.msra.mxu0 0.0
    %1255 = vmatprep.subr.mxu0 0.0
    %1256 = vmatpush2.xpose.msra.mxu0 0.0
    %1257 = vmatprep.subr.mxu0 0.0
    %1258 = vmatpush2.xpose.msra.mxu0 0.0
    %1259 = vmatprep.subr.mxu0 0.0
    %1260 = vmatpush2.xpose.msra.mxu0 0.0
    %1261 = vmatprep.subr.mxu0 0.0
    %1262 = vmatpush2.xpose.msra.mxu0 0.0
    %1263 = vmatprep.subr.mxu0 0.0
    %1264 = vmatpush2.xpose.msra.mxu0 0.0
    %1265 = vmatprep.subr.mxu0 0.0
    %1266 = vmatpush2.xpose.msra.mxu0 0.0
    %1267 = vmatprep.subr.mxu0 0.0
    %1268 = vmatpush2.xpose.msra.mxu0 0.0
    %1269 = vmatprep.subr.mxu0 0.0
    %1270 = vmatpush2.xpose.msra.mxu0 0.0
    %1271 = vmatprep.mubr.f32.mxu0 0.0
    %1272 = vmatmul.mubr.f32.gmra.mxu0 %v1203
    %v1273 = vpop.f32.mrf.mxu0
    %v1274 = vadd.f32 0.0, %v1273
    %v1275 = vpop.f32.mrf.mxu0
    %1276 = vdwg.mxu0
    %v1277 = vmul.f32 %v1196, 0.25
    %v1278 = vmul.f32 %v1274, 0.25
    %v1279 = vsel %vm85, %v1277, -inf
    %1280 = vmax.xlane.f32.xlu0 %v1279
    %v1281 = vpop.xlane.xlu0 %1280
    %v1282 = vsel %vm85, %v1278, -inf
    %1283 = vmax.xlane.f32.xlu0 %v1282
    %v1284 = vpop.xlane.xlu0 %1283
    %v1285 = vsub.f32 %v1277, %v1281
    %v1286 = vsub.f32 %v1278, %v1284
    %v1287 = vmul.f32 %v1285, 1.442695
    %v1288 = vpow.pop %v1287
    %v1289 = vmul.f32 %v1286, 1.442695
    %v1290 = vpow.pop %v1289
    %v1291 = vsel %vm85, %v1288, 0.0
    %1292 = vadd.xlane.f32.xlu0 %v1291
    %v1293 = vpop.xlane.xlu0 %1292
    %v1294 = vsel %vm85, %v1290, 0.0
    %1295 = vadd.xlane.f32.xlu0 %v1294
    %v1296 = vpop.xlane.xlu0 %1295
    %v1297 = vrcp.pop %v1293
    %v1298 = vrcp.pop %v1296
    %v1299 = vmul.f32 %v1288, %v1297
    %v1300 = vmul.f32 %v1290, %v1298
    %1301 = vrot.lane.b32.xlu0 %v454, 96
    %v1302 = vpop.permute.xlu0 %1301
    %v1305 = vsel %vm85, %v1299, 0
    %1307 = vmatprep.subr.mxu0 0.0
    %1308 = vmatpush1.msra.mxu0 0.0
    %1309 = vmatprep.subr.mxu0 0.0
    %1310 = vmatpush1.msra.mxu0 0.0
    %1311 = vmatprep.subr.mxu0 0.0
    %1312 = vmatpush1.msra.mxu0 0.0
    %1313 = vmatprep.subr.mxu0 0.0
    %1314 = vmatpush1.msra.mxu0 0.0
    %1315 = vmatprep.subr.mxu0 0.0
    %1316 = vmatpush1.msra.mxu0 0.0
    %1317 = vmatprep.subr.mxu0 0.0
    %1318 = vmatpush1.msra.mxu0 0.0
    %1319 = vmatprep.subr.mxu0 0.0
    %1320 = vmatpush1.msra.mxu0 0.0
    %1321 = vmatprep.subr.mxu0 0.0
    %1322 = vmatpush1.msra.mxu0 0.0
    %1323 = vmatprep.subr.mxu0 0.0
    %1324 = vmatpush1.msra.mxu0 0.0
    %1325 = vmatprep.subr.mxu0 0.0
    %1326 = vmatpush1.msra.mxu0 0.0
    %1327 = vmatprep.subr.mxu0 0.0
    %1328 = vmatpush1.msra.mxu0 0.0
    %1329 = vmatprep.subr.mxu0 0.0
    %1330 = vmatpush1.msra.mxu0 0.0
    %1331 = vmatprep.subr.mxu0 0.0
    %1332 = vmatpush1.msra.mxu0 0.0
    %1333 = vmatprep.subr.mxu0 0.0
    %1334 = vmatpush1.msra.mxu0 0.0
    %1335 = vmatprep.subr.mxu0 0.0
    %1336 = vmatpush1.msra.mxu0 0.0
    %1337 = vmatprep.subr.mxu0 0.0
    %1338 = vmatpush1.msra.mxu0 %v1302
    %1339 = vmatprep.subr.mxu0 0.0
    %1340 = vmatpush2.msra.mxu0 0.0
    %1341 = vmatprep.subr.mxu0 0.0
    %1342 = vmatpush2.msra.mxu0 0.0
    %1343 = vmatprep.subr.mxu0 0.0
    %1344 = vmatpush2.msra.mxu0 0.0
    %1345 = vmatprep.subr.mxu0 0.0
    %1346 = vmatpush2.msra.mxu0 0.0
    %1347 = vmatprep.subr.mxu0 0.0
    %1348 = vmatpush2.msra.mxu0 0.0
    %1349 = vmatprep.subr.mxu0 0.0
    %1350 = vmatpush2.msra.mxu0 0.0
    %1351 = vmatprep.subr.mxu0 0.0
    %1352 = vmatpush2.msra.mxu0 0.0
    %1353 = vmatprep.subr.mxu0 0.0
    %1354 = vmatpush2.msra.mxu0 0.0
    %1355 = vmatprep.subr.mxu0 0.0
    %1356 = vmatpush2.msra.mxu0 0.0
    %1357 = vmatprep.subr.mxu0 0.0
    %1358 = vmatpush2.msra.mxu0 0.0
    %1359 = vmatprep.subr.mxu0 0.0
    %1360 = vmatpush2.msra.mxu0 0.0
    %1361 = vmatprep.subr.mxu0 0.0
    %1362 = vmatpush2.msra.mxu0 0.0
    %1363 = vmatprep.subr.mxu0 0.0
    %1364 = vmatpush2.msra.mxu0 0.0
    %1365 = vmatprep.subr.mxu0 0.0
    %1366 = vmatpush2.msra.mxu0 0.0
    %1367 = vmatprep.subr.mxu0 0.0
    %1368 = vmatpush2.msra.mxu0 0.0
    %1369 = vmatprep.subr.mxu0 0.0
    %1370 = vmatpush2.msra.mxu0 0.0
    %1371 = vmatprep.mubr.f32.mxu0 0.0
    %1372 = vmatmul.mubr.f32.gmra.mxu0 %v1305
    %v1373 = vpop.f32.mrf.mxu0
    %v1374 = vadd.f32 0.0, %v1373
    %v1375 = vpop.f32.mrf.mxu0
    %1376 = vdwg.mxu0
    %1377 = vrot.lane.b32.xlu0 %v460, 96
    %v1378 = vpop.permute.xlu0 %1377
    %v1381 = vsel %vm85, %v1300, 0
    %1383 = vmatprep.subr.mxu0 0.0
    %1384 = vmatpush1.msra.mxu0 0.0
    %1385 = vmatprep.subr.mxu0 0.0
    %1386 = vmatpush1.msra.mxu0 0.0
    %1387 = vmatprep.subr.mxu0 0.0
    %1388 = vmatpush1.msra.mxu0 0.0
    %1389 = vmatprep.subr.mxu0 0.0
    %1390 = vmatpush1.msra.mxu0 0.0
    %1391 = vmatprep.subr.mxu0 0.0
    %1392 = vmatpush1.msra.mxu0 0.0
    %1393 = vmatprep.subr.mxu0 0.0
    %1394 = vmatpush1.msra.mxu0 0.0
    %1395 = vmatprep.subr.mxu0 0.0
    %1396 = vmatpush1.msra.mxu0 0.0
    %1397 = vmatprep.subr.mxu0 0.0
    %1398 = vmatpush1.msra.mxu0 0.0
    %1399 = vmatprep.subr.mxu0 0.0
    %1400 = vmatpush1.msra.mxu0 0.0
    %1401 = vmatprep.subr.mxu0 0.0
    %1402 = vmatpush1.msra.mxu0 0.0
    %1403 = vmatprep.subr.mxu0 0.0
    %1404 = vmatpush1.msra.mxu0 0.0
    %1405 = vmatprep.subr.mxu0 0.0
    %1406 = vmatpush1.msra.mxu0 0.0
    %1407 = vmatprep.subr.mxu0 0.0
    %1408 = vmatpush1.msra.mxu0 0.0
    %1409 = vmatprep.subr.mxu0 0.0
    %1410 = vmatpush1.msra.mxu0 0.0
    %1411 = vmatprep.subr.mxu0 0.0
    %1412 = vmatpush1.msra.mxu0 0.0
    %1413 = vmatprep.subr.mxu0 0.0
    %1414 = vmatpush1.msra.mxu0 %v1378
    %1415 = vmatprep.subr.mxu0 0.0
    %1416 = vmatpush2.msra.mxu0 0.0
    %1417 = vmatprep.subr.mxu0 0.0
    %1418 = vmatpush2.msra.mxu0 0.0
    %1419 = vmatprep.subr.mxu0 0.0
    %1420 = vmatpush2.msra.mxu0 0.0
    %1421 = vmatprep.subr.mxu0 0.0
    %1422 = vmatpush2.msra.mxu0 0.0
    %1423 = vmatprep.subr.mxu0 0.0
    %1424 = vmatpush2.msra.mxu0 0.0
    %1425 = vmatprep.subr.mxu0 0.0
    %1426 = vmatpush2.msra.mxu0 0.0
    %1427 = vmatprep.subr.mxu0 0.0
    %1428 = vmatpush2.msra.mxu0 0.0
    %1429 = vmatprep.subr.mxu0 0.0
    %1430 = vmatpush2.msra.mxu0 0.0
    %1431 = vmatprep.subr.mxu0 0.0
    %1432 = vmatpush2.msra.mxu0 0.0
    %1433 = vmatprep.subr.mxu0 0.0
    %1434 = vmatpush2.msra.mxu0 0.0
    %1435 = vmatprep.subr.mxu0 0.0
    %1436 = vmatpush2.msra.mxu0 0.0
    %1437 = vmatprep.subr.mxu0 0.0
    %1438 = vmatpush2.msra.mxu0 0.0
    %1439 = vmatprep.subr.mxu0 0.0
    %1440 = vmatpush2.msra.mxu0 0.0
    %1441 = vmatprep.subr.mxu0 0.0
    %1442 = vmatpush2.msra.mxu0 0.0
    %1443 = vmatprep.subr.mxu0 0.0
    %1444 = vmatpush2.msra.mxu0 0.0
    %1445 = vmatprep.subr.mxu0 0.0
    %1446 = vmatpush2.msra.mxu0 0.0
    %1447 = vmatprep.mubr.f32.mxu0 0.0
    %1448 = vmatmul.mubr.f32.gmra.mxu0 %v1381
    %v1449 = vpop.f32.mrf.mxu0
    %v1450 = vadd.f32 0.0, %v1449
    %v1451 = vpop.f32.mrf.mxu0
    %1452 = vdwg.mxu0
    %1453 = vrot.lane.b32.xlu0 %v452, 80
    %v1454 = vpop.permute.xlu0 %1453
    %1455 = vrot.lane.b32.xlu0 %v452, 16
    %v1456 = vpop.permute.xlu0 %1455
    %v1457 = vsel %vm465, %v1454, 0
    %v1459 = vsel %vm465, %v1456, 0
    %1461 = vmatprep.subr.mxu0 0.0
    %1462 = vmatpush1.xpose.msra.mxu0 0.0
    %1463 = vmatprep.subr.mxu0 0.0
    %1464 = vmatpush1.xpose.msra.mxu0 0.0
    %1465 = vmatprep.subr.mxu0 0.0
    %1466 = vmatpush1.xpose.msra.mxu0 0.0
    %1467 = vmatprep.subr.mxu0 0.0
    %1468 = vmatpush1.xpose.msra.mxu0 0.0
    %1469 = vmatprep.subr.mxu0 0.0
    %1470 = vmatpush1.xpose.msra.mxu0 0.0
    %1471 = vmatprep.subr.mxu0 0.0
    %1472 = vmatpush1.xpose.msra.mxu0 0.0
    %1473 = vmatprep.subr.mxu0 0.0
    %1474 = vmatpush1.xpose.msra.mxu0 0.0
    %1475 = vmatprep.subr.mxu0 0.0
    %1476 = vmatpush1.xpose.msra.mxu0 0.0
    %1477 = vmatprep.subr.mxu0 0.0
    %1478 = vmatpush1.xpose.msra.mxu0 0.0
    %1479 = vmatprep.subr.mxu0 0.0
    %1480 = vmatpush1.xpose.msra.mxu0 0.0
    %1481 = vmatprep.subr.mxu0 0.0
    %1482 = vmatpush1.xpose.msra.mxu0 0.0
    %1483 = vmatprep.subr.mxu0 0.0
    %1484 = vmatpush1.xpose.msra.mxu0 0.0
    %1485 = vmatprep.subr.mxu0 0.0
    %1486 = vmatpush1.xpose.msra.mxu0 0.0
    %1487 = vmatprep.subr.mxu0 0.0
    %1488 = vmatpush1.xpose.msra.mxu0 0.0
    %1489 = vmatprep.subr.mxu0 0.0
    %1490 = vmatpush1.xpose.msra.mxu0 0.0
    %1491 = vmatprep.subr.mxu0 0.0
    %1492 = vmatpush1.xpose.msra.mxu0 %v1459
    %1493 = vmatprep.subr.mxu0 0.0
    %1494 = vmatpush2.xpose.msra.mxu0 0.0
    %1495 = vmatprep.subr.mxu0 0.0
    %1496 = vmatpush2.xpose.msra.mxu0 0.0
    %1497 = vmatprep.subr.mxu0 0.0
    %1498 = vmatpush2.xpose.msra.mxu0 0.0
    %1499 = vmatprep.subr.mxu0 0.0
    %1500 = vmatpush2.xpose.msra.mxu0 0.0
    %1501 = vmatprep.subr.mxu0 0.0
    %1502 = vmatpush2.xpose.msra.mxu0 0.0
    %1503 = vmatprep.subr.mxu0 0.0
    %1504 = vmatpush2.xpose.msra.mxu0 0.0
    %1505 = vmatprep.subr.mxu0 0.0
    %1506 = vmatpush2.xpose.msra.mxu0 0.0
    %1507 = vmatprep.subr.mxu0 0.0
    %1508 = vmatpush2.xpose.msra.mxu0 0.0
    %1509 = vmatprep.subr.mxu0 0.0
    %1510 = vmatpush2.xpose.msra.mxu0 0.0
    %1511 = vmatprep.subr.mxu0 0.0
    %1512 = vmatpush2.xpose.msra.mxu0 0.0
    %1513 = vmatprep.subr.mxu0 0.0
    %1514 = vmatpush2.xpose.msra.mxu0 0.0
    %1515 = vmatprep.subr.mxu0 0.0
    %1516 = vmatpush2.xpose.msra.mxu0 0.0
    %1517 = vmatprep.subr.mxu0 0.0
    %1518 = vmatpush2.xpose.msra.mxu0 0.0
    %1519 = vmatprep.subr.mxu0 0.0
    %1520 = vmatpush2.xpose.msra.mxu0 0.0
    %1521 = vmatprep.subr.mxu0 0.0
    %1522 = vmatpush2.xpose.msra.mxu0 0.0
    %1523 = vmatprep.subr.mxu0 0.0
    %1524 = vmatpush2.xpose.msra.mxu0 0.0
    %1525 = vmatprep.mubr.f32.mxu0 0.0
    %1526 = vmatmul.mubr.f32.gmra.mxu0 %v1457
    %v1527 = vpop.f32.mrf.mxu0
    %v1528 = vadd.f32 0.0, %v1527
    %v1529 = vpop.f32.mrf.mxu0
    %1530 = vdwg.mxu0
    %1531 = vrot.lane.b32.xlu0 %v458, 80
    %v1532 = vpop.permute.xlu0 %1531
    %1533 = vrot.lane.b32.xlu0 %v458, 16
    %v1534 = vpop.permute.xlu0 %1533
    %v1535 = vsel %vm465, %v1532, 0
    %v1537 = vsel %vm465, %v1534, 0
    %1539 = vmatprep.subr.mxu0 0.0
    %1540 = vmatpush1.xpose.msra.mxu0 0.0
    %1541 = vmatprep.subr.mxu0 0.0
    %1542 = vmatpush1.xpose.msra.mxu0 0.0
    %1543 = vmatprep.subr.mxu0 0.0
    %1544 = vmatpush1.xpose.msra.mxu0 0.0
    %1545 = vmatprep.subr.mxu0 0.0
    %1546 = vmatpush1.xpose.msra.mxu0 0.0
    %1547 = vmatprep.subr.mxu0 0.0
    %1548 = vmatpush1.xpose.msra.mxu0 0.0
    %1549 = vmatprep.subr.mxu0 0.0
    %1550 = vmatpush1.xpose.msra.mxu0 0.0
    %1551 = vmatprep.subr.mxu0 0.0
    %1552 = vmatpush1.xpose.msra.mxu0 0.0
    %1553 = vmatprep.subr.mxu0 0.0
    %1554 = vmatpush1.xpose.msra.mxu0 0.0
    %1555 = vmatprep.subr.mxu0 0.0
    %1556 = vmatpush1.xpose.msra.mxu0 0.0
    %1557 = vmatprep.subr.mxu0 0.0
    %1558 = vmatpush1.xpose.msra.mxu0 0.0
    %1559 = vmatprep.subr.mxu0 0.0
    %1560 = vmatpush1.xpose.msra.mxu0 0.0
    %1561 = vmatprep.subr.mxu0 0.0
    %1562 = vmatpush1.xpose.msra.mxu0 0.0
    %1563 = vmatprep.subr.mxu0 0.0
    %1564 = vmatpush1.xpose.msra.mxu0 0.0
    %1565 = vmatprep.subr.mxu0 0.0
    %1566 = vmatpush1.xpose.msra.mxu0 0.0
    %1567 = vmatprep.subr.mxu0 0.0
    %1568 = vmatpush1.xpose.msra.mxu0 0.0
    %1569 = vmatprep.subr.mxu0 0.0
    %1570 = vmatpush1.xpose.msra.mxu0 %v1537
    %1571 = vmatprep.subr.mxu0 0.0
    %1572 = vmatpush2.xpose.msra.mxu0 0.0
    %1573 = vmatprep.subr.mxu0 0.0
    %1574 = vmatpush2.xpose.msra.mxu0 0.0
    %1575 = vmatprep.subr.mxu0 0.0
    %1576 = vmatpush2.xpose.msra.mxu0 0.0
    %1577 = vmatprep.subr.mxu0 0.0
    %1578 = vmatpush2.xpose.msra.mxu0 0.0
    %1579 = vmatprep.subr.mxu0 0.0
    %1580 = vmatpush2.xpose.msra.mxu0 0.0
    %1581 = vmatprep.subr.mxu0 0.0
    %1582 = vmatpush2.xpose.msra.mxu0 0.0
    %1583 = vmatprep.subr.mxu0 0.0
    %1584 = vmatpush2.xpose.msra.mxu0 0.0
    %1585 = vmatprep.subr.mxu0 0.0
    %1586 = vmatpush2.xpose.msra.mxu0 0.0
    %1587 = vmatprep.subr.mxu0 0.0
    %1588 = vmatpush2.xpose.msra.mxu0 0.0
    %1589 = vmatprep.subr.mxu0 0.0
    %1590 = vmatpush2.xpose.msra.mxu0 0.0
    %1591 = vmatprep.subr.mxu0 0.0
    %1592 = vmatpush2.xpose.msra.mxu0 0.0
    %1593 = vmatprep.subr.mxu0 0.0
    %1594 = vmatpush2.xpose.msra.mxu0 0.0
    %1595 = vmatprep.subr.mxu0 0.0
    %1596 = vmatpush2.xpose.msra.mxu0 0.0
    %1597 = vmatprep.subr.mxu0 0.0
    %1598 = vmatpush2.xpose.msra.mxu0 0.0
    %1599 = vmatprep.subr.mxu0 0.0
    %1600 = vmatpush2.xpose.msra.mxu0 0.0
    %1601 = vmatprep.subr.mxu0 0.0
    %1602 = vmatpush2.xpose.msra.mxu0 0.0
    %1603 = vmatprep.mubr.f32.mxu0 0.0
    %1604 = vmatmul.mubr.f32.gmra.mxu0 %v1535
    %v1605 = vpop.f32.mrf.mxu0
    %v1606 = vadd.f32 0.0, %v1605
    %v1607 = vpop.f32.mrf.mxu0
    %1608 = vdwg.mxu0
    %v1609 = vmul.f32 %v1528, 0.25
    %v1610 = vmul.f32 %v1606, 0.25
    %v1611 = vsel %vm85, %v1609, -inf
    %1612 = vmax.xlane.f32.xlu0 %v1611
    %v1613 = vpop.xlane.xlu0 %1612
    %v1614 = vsel %vm85, %v1610, -inf
    %1615 = vmax.xlane.f32.xlu0 %v1614
    %v1616 = vpop.xlane.xlu0 %1615
    %v1617 = vsub.f32 %v1609, %v1613
    %v1618 = vsub.f32 %v1610, %v1616
    %v1619 = vmul.f32 %v1617, 1.442695
    %v1620 = vpow.pop %v1619
    %v1621 = vmul.f32 %v1618, 1.442695
    %v1622 = vpow.pop %v1621
    %v1623 = vsel %vm85, %v1620, 0.0
    %1624 = vadd.xlane.f32.xlu0 %v1623
    %v1625 = vpop.xlane.xlu0 %1624
    %v1626 = vsel %vm85, %v1622, 0.0
    %1627 = vadd.xlane.f32.xlu0 %v1626
    %v1628 = vpop.xlane.xlu0 %1627
    %v1629 = vrcp.pop %v1625
    %v1630 = vrcp.pop %v1628
    %v1631 = vmul.f32 %v1620, %v1629
    %v1632 = vmul.f32 %v1622, %v1630
    %1633 = vrot.lane.b32.xlu0 %v454, 80
    %v1634 = vpop.permute.xlu0 %1633
    %v1637 = vsel %vm85, %v1631, 0
    %1639 = vmatprep.subr.mxu0 0.0
    %1640 = vmatpush1.msra.mxu0 0.0
    %1641 = vmatprep.subr.mxu0 0.0
    %1642 = vmatpush1.msra.mxu0 0.0
    %1643 = vmatprep.subr.mxu0 0.0
    %1644 = vmatpush1.msra.mxu0 0.0
    %1645 = vmatprep.subr.mxu0 0.0
    %1646 = vmatpush1.msra.mxu0 0.0
    %1647 = vmatprep.subr.mxu0 0.0
    %1648 = vmatpush1.msra.mxu0 0.0
    %1649 = vmatprep.subr.mxu0 0.0
    %1650 = vmatpush1.msra.mxu0 0.0
    %1651 = vmatprep.subr.mxu0 0.0
    %1652 = vmatpush1.msra.mxu0 0.0
    %1653 = vmatprep.subr.mxu0 0.0
    %1654 = vmatpush1.msra.mxu0 0.0
    %1655 = vmatprep.subr.mxu0 0.0
    %1656 = vmatpush1.msra.mxu0 0.0
    %1657 = vmatprep.subr.mxu0 0.0
    %1658 = vmatpush1.msra.mxu0 0.0
    %1659 = vmatprep.subr.mxu0 0.0
    %1660 = vmatpush1.msra.mxu0 0.0
    %1661 = vmatprep.subr.mxu0 0.0
    %1662 = vmatpush1.msra.mxu0 0.0
    %1663 = vmatprep.subr.mxu0 0.0
    %1664 = vmatpush1.msra.mxu0 0.0
    %1665 = vmatprep.subr.mxu0 0.0
    %1666 = vmatpush1.msra.mxu0 0.0
    %1667 = vmatprep.subr.mxu0 0.0
    %1668 = vmatpush1.msra.mxu0 0.0
    %1669 = vmatprep.subr.mxu0 0.0
    %1670 = vmatpush1.msra.mxu0 %v1634
    %1671 = vmatprep.subr.mxu0 0.0
    %1672 = vmatpush2.msra.mxu0 0.0
    %1673 = vmatprep.subr.mxu0 0.0
    %1674 = vmatpush2.msra.mxu0 0.0
    %1675 = vmatprep.subr.mxu0 0.0
    %1676 = vmatpush2.msra.mxu0 0.0
    %1677 = vmatprep.subr.mxu0 0.0
    %1678 = vmatpush2.msra.mxu0 0.0
    %1679 = vmatprep.subr.mxu0 0.0
    %1680 = vmatpush2.msra.mxu0 0.0
    %1681 = vmatprep.subr.mxu0 0.0
    %1682 = vmatpush2.msra.mxu0 0.0
    %1683 = vmatprep.subr.mxu0 0.0
    %1684 = vmatpush2.msra.mxu0 0.0
    %1685 = vmatprep.subr.mxu0 0.0
    %1686 = vmatpush2.msra.mxu0 0.0
    %1687 = vmatprep.subr.mxu0 0.0
    %1688 = vmatpush2.msra.mxu0 0.0
    %1689 = vmatprep.subr.mxu0 0.0
    %1690 = vmatpush2.msra.mxu0 0.0
    %1691 = vmatprep.subr.mxu0 0.0
    %1692 = vmatpush2.msra.mxu0 0.0
    %1693 = vmatprep.subr.mxu0 0.0
    %1694 = vmatpush2.msra.mxu0 0.0
    %1695 = vmatprep.subr.mxu0 0.0
    %1696 = vmatpush2.msra.mxu0 0.0
    %1697 = vmatprep.subr.mxu0 0.0
    %1698 = vmatpush2.msra.mxu0 0.0
    %1699 = vmatprep.subr.mxu0 0.0
    %1700 = vmatpush2.msra.mxu0 0.0
    %1701 = vmatprep.subr.mxu0 0.0
    %1702 = vmatpush2.msra.mxu0 0.0
    %1703 = vmatprep.mubr.f32.mxu0 0.0
    %1704 = vmatmul.mubr.f32.gmra.mxu0 %v1637
    %v1705 = vpop.f32.mrf.mxu0
    %v1706 = vadd.f32 0.0, %v1705
    %v1707 = vpop.f32.mrf.mxu0
    %1708 = vdwg.mxu0
    %1709 = vrot.lane.b32.xlu0 %v460, 80
    %v1710 = vpop.permute.xlu0 %1709
    %v1713 = vsel %vm85, %v1632, 0
    %1715 = vmatprep.subr.mxu0 0.0
    %1716 = vmatpush1.msra.mxu0 0.0
    %1717 = vmatprep.subr.mxu0 0.0
    %1718 = vmatpush1.msra.mxu0 0.0
    %1719 = vmatprep.subr.mxu0 0.0
    %1720 = vmatpush1.msra.mxu0 0.0
    %1721 = vmatprep.subr.mxu0 0.0
    %1722 = vmatpush1.msra.mxu0 0.0
    %1723 = vmatprep.subr.mxu0 0.0
    %1724 = vmatpush1.msra.mxu0 0.0
    %1725 = vmatprep.subr.mxu0 0.0
    %1726 = vmatpush1.msra.mxu0 0.0
    %1727 = vmatprep.subr.mxu0 0.0
    %1728 = vmatpush1.msra.mxu0 0.0
    %1729 = vmatprep.subr.mxu0 0.0
    %1730 = vmatpush1.msra.mxu0 0.0
    %1731 = vmatprep.subr.mxu0 0.0
    %1732 = vmatpush1.msra.mxu0 0.0
    %1733 = vmatprep.subr.mxu0 0.0
    %1734 = vmatpush1.msra.mxu0 0.0
    %1735 = vmatprep.subr.mxu0 0.0
    %1736 = vmatpush1.msra.mxu0 0.0
    %1737 = vmatprep.subr.mxu0 0.0
    %1738 = vmatpush1.msra.mxu0 0.0
    %1739 = vmatprep.subr.mxu0 0.0
    %1740 = vmatpush1.msra.mxu0 0.0
    %1741 = vmatprep.subr.mxu0 0.0
    %1742 = vmatpush1.msra.mxu0 0.0
    %1743 = vmatprep.subr.mxu0 0.0
    %1744 = vmatpush1.msra.mxu0 0.0
    %1745 = vmatprep.subr.mxu0 0.0
    %1746 = vmatpush1.msra.mxu0 %v1710
    %1747 = vmatprep.subr.mxu0 0.0
    %1748 = vmatpush2.msra.mxu0 0.0
    %1749 = vmatprep.subr.mxu0 0.0
    %1750 = vmatpush2.msra.mxu0 0.0
    %1751 = vmatprep.subr.mxu0 0.0
    %1752 = vmatpush2.msra.mxu0 0.0
    %1753 = vmatprep.subr.mxu0 0.0
    %1754 = vmatpush2.msra.mxu0 0.0
    %1755 = vmatprep.subr.mxu0 0.0
    %1756 = vmatpush2.msra.mxu0 0.0
    %1757 = vmatprep.subr.mxu0 0.0
    %1758 = vmatpush2.msra.mxu0 0.0
    %1759 = vmatprep.subr.mxu0 0.0
    %1760 = vmatpush2.msra.mxu0 0.0
    %1761 = vmatprep.subr.mxu0 0.0
    %1762 = vmatpush2.msra.mxu0 0.0
    %1763 = vmatprep.subr.mxu0 0.0
    %1764 = vmatpush2.msra.mxu0 0.0
    %1765 = vmatprep.subr.mxu0 0.0
    %1766 = vmatpush2.msra.mxu0 0.0
    %1767 = vmatprep.subr.mxu0 0.0
    %1768 = vmatpush2.msra.mxu0 0.0
    %1769 = vmatprep.subr.mxu0 0.0
    %1770 = vmatpush2.msra.mxu0 0.0
    %1771 = vmatprep.subr.mxu0 0.0
    %1772 = vmatpush2.msra.mxu0 0.0
    %1773 = vmatprep.subr.mxu0 0.0
    %1774 = vmatpush2.msra.mxu0 0.0
    %1775 = vmatprep.subr.mxu0 0.0
    %1776 = vmatpush2.msra.mxu0 0.0
    %1777 = vmatprep.subr.mxu0 0.0
    %1778 = vmatpush2.msra.mxu0 0.0
    %1779 = vmatprep.mubr.f32.mxu0 0.0
    %1780 = vmatmul.mubr.f32.gmra.mxu0 %v1713
    %v1781 = vpop.f32.mrf.mxu0
    %v1782 = vadd.f32 0.0, %v1781
    %v1783 = vpop.f32.mrf.mxu0
    %1784 = vdwg.mxu0
    %1787 = vrot.lane.b32.xlu0 %v1041, 16
    %v1788 = vpop.permute.xlu0 %1787
    %1789 = vrot.lane.b32.xlu0 %v1118, 16
    %v1790 = vpop.permute.xlu0 %1789
    %1795 = vrot.lane.b32.xlu0 %v1374, 32
    %v1796 = vpop.permute.xlu0 %1795
    %1797 = vrot.lane.b32.xlu0 %v1450, 32
    %v1798 = vpop.permute.xlu0 %1797
    %1803 = vrot.lane.b32.xlu0 %v1706, 48
    %v1804 = vpop.permute.xlu0 %1803
    %1805 = vrot.lane.b32.xlu0 %v1782, 48
    %v1806 = vpop.permute.xlu0 %1805
    %v1809 = vsel %vm465, %v711, %v1788
    %v1810 = vsel %vm465, %v784, %v1790
    %v1811 = vsel %vm251, %v1809, %v1796
    %v1812 = vsel %vm251, %v1810, %v1798
    %vm1813 = vcmask 392192
    %v1814 = vsel %vm1813, %v1811, %v1804
    %v1815 = vsel %vm1813, %v1812, %v1806
    %v1816 = vld [vmem:[#allocation4] sm:$0xff]
    %v1817 = vld [vmem:[#allocation4 + $0x8] sm:$0xff]
    %v1818 = vld [vmem:[#allocation4 + $0x10] sm:$0xff]
    %v1819 = vld [vmem:[#allocation4 + $0x18] sm:$0xff]
    %v1820 = vld [vmem:[#allocation4 + $0x20] sm:$0xff]
    %v1821 = vld [vmem:[#allocation4 + $0x28] sm:$0xff]
    %v1822 = vld [vmem:[#allocation4 + $0x30] sm:$0xff]
    %v1823 = vld [vmem:[#allocation4 + $0x38] sm:$0xff]
    %v1824 = vld [vmem:[%s9] sm:$0x1]
    %v1826 = vlaneseq
    %v1827 = vshrl.u32 %v1826, 7
    %v1828 = vsub.s32 0, %v1827
    %v1829 = vrot.slane %v1824, %v1828
    %vm1831 = vcmask 523264
    %v1833 = vsel %vm1831, %v1814, 0
    %v1836 = vsel %vm1831, %v1815, 0
    %1838 = vmatprep.subr.mxu0 0.0
    %1839 = vmatpush1.msra.mxu0 0.0
    %1840 = vmatprep.subr.mxu0 0.0
    %1841 = vmatpush1.msra.mxu0 0.0
    %1842 = vmatprep.subr.mxu0 0.0
    %1843 = vmatpush1.msra.mxu0 0.0
    %1844 = vmatprep.subr.mxu0 0.0
    %1845 = vmatpush1.msra.mxu0 0.0
    %1846 = vmatprep.subr.mxu0 0.0
    %1847 = vmatpush1.msra.mxu0 0.0
    %1848 = vmatprep.subr.mxu0 0.0
    %1849 = vmatpush1.msra.mxu0 0.0
    %1850 = vmatprep.subr.mxu0 0.0
    %1851 = vmatpush1.msra.mxu0 0.0
    %1852 = vmatprep.subr.mxu0 0.0
    %1853 = vmatpush1.msra.mxu0 0.0
    %1854 = vmatprep.subr.mxu0 0.0
    %1855 = vmatpush1.msra.mxu0 %v1823
    %1856 = vmatprep.subr.mxu0 0.0
    %1857 = vmatpush1.msra.mxu0 %v1822
    %1858 = vmatprep.subr.mxu0 0.0
    %1859 = vmatpush1.msra.mxu0 %v1821
    %1860 = vmatprep.subr.mxu0 0.0
    %1861 = vmatpush1.msra.mxu0 %v1820
    %1862 = vmatprep.subr.mxu0 0.0
    %1863 = vmatpush1.msra.mxu0 %v1819
    %1864 = vmatprep.subr.mxu0 0.0
    %1865 = vmatpush1.msra.mxu0 %v1818
    %1866 = vmatprep.subr.mxu0 0.0
    %1867 = vmatpush1.msra.mxu0 %v1817
    %1868 = vmatprep.subr.mxu0 0.0
    %1869 = vmatpush1.msra.mxu0 %v1816
    %1870 = vmatprep.subr.mxu0 0.0
    %1871 = vmatpush2.msra.mxu0 0.0
    %1872 = vmatprep.subr.mxu0 0.0
    %1873 = vmatpush2.msra.mxu0 0.0
    %1874 = vmatprep.subr.mxu0 0.0
    %1875 = vmatpush2.msra.mxu0 0.0
    %1876 = vmatprep.subr.mxu0 0.0
    %1877 = vmatpush2.msra.mxu0 0.0
    %1878 = vmatprep.subr.mxu0 0.0
    %1879 = vmatpush2.msra.mxu0 0.0
    %1880 = vmatprep.subr.mxu0 0.0
    %1881 = vmatpush2.msra.mxu0 0.0
    %1882 = vmatprep.subr.mxu0 0.0
    %1883 = vmatpush2.msra.mxu0 0.0
    %1884 = vmatprep.subr.mxu0 0.0
    %1885 = vmatpush2.msra.mxu0 0.0
    %1886 = vmatprep.subr.mxu0 0.0
    %1887 = vmatpush2.msra.mxu0 0.0
    %1888 = vmatprep.subr.mxu0 0.0
    %1889 = vmatpush2.msra.mxu0 0.0
    %1890 = vmatprep.subr.mxu0 0.0
    %1891 = vmatpush2.msra.mxu0 0.0
    %1892 = vmatprep.subr.mxu0 0.0
    %1893 = vmatpush2.msra.mxu0 0.0
    %1894 = vmatprep.subr.mxu0 0.0
    %1895 = vmatpush2.msra.mxu0 0.0
    %1896 = vmatprep.subr.mxu0 0.0
    %1897 = vmatpush2.msra.mxu0 0.0
    %1898 = vmatprep.subr.mxu0 0.0
    %1899 = vmatpush2.msra.mxu0 0.0
    %1900 = vmatprep.subr.mxu0 0.0
    %1901 = vmatpush2.msra.mxu0 0.0
    %1902 = vmatprep.mubr.f32.mxu0 0.0
    %1903 = vmatmul.mubr.f32.gmra.mxu0 %v1833
    %v1904 = vpop.f32.mrf.mxu0
    %v1905 = vadd.f32 %v1829, %v1904
    %v1906 = vpop.f32.mrf.mxu0
    %1907 = vmatprep.mubr.f32.mxu0 0.0
    %1908 = vmatmul.mubr.f32.gmra.mxu0 %v1836
    %v1909 = vpop.f32.mrf.mxu0
    %v1910 = vadd.f32 %v1829, %v1909
    %v1911 = vpop.f32.mrf.mxu0
    %1912 = vdwg.mxu0
    %v1913 = vmul.f32 %v1905, 0.5
    %v1914 = vmul.f32 %v1910, 0.5
    %v1915 = vmul.f32 %v1905, 0.70710677
    %v1916 = vmul.f32 %v1910, 0.70710677
    %v1917 = vand.u32 2147483647, %v1915
    %v1918 = vand.u32 2147483647, %v1916
    %v1919 = vmul.f32 %v1917, 0.3275911
    %v1920 = vmul.f32 %v1918, 0.3275911
    %v1921 = vadd.f32 %v1919, 1.0
    %v1922 = vadd.f32 %v1920, 1.0
    %v1923 = vrcp.pop %v1921
    %v1924 = vmul.f32 1.0, %v1923
    %v1925 = vrcp.pop %v1922
    %v1926 = vmul.f32 1.0, %v1925
    %v1927 = vmul.f32 %v1924, 1.0614054
    %v1928 = vmul.f32 %v1926, 1.0614054
    %v1929 = vadd.f32 %v1927, -1.4531521
    %v1930 = vadd.f32 %v1928, -1.4531521
    %v1931 = vmul.f32 %v1929, %v1924
    %v1932 = vmul.f32 %v1930, %v1926
    %v1933 = vadd.f32 %v1931, 1.4214138
    %v1934 = vadd.f32 %v1932, 1.4214138
    %v1935 = vmul.f32 %v1933, %v1924
    %v1936 = vmul.f32 %v1934, %v1926
    %v1937 = vadd.f32 %v1935, -0.28449672
    %v1938 = vadd.f32 %v1936, -0.28449672
    %v1939 = vmul.f32 %v1937, %v1924
    %v1940 = vmul.f32 %v1938, %v1926
    %v1941 = vadd.f32 %v1939, 0.2548296
    %v1942 = vadd.f32 %v1940, 0.2548296
    %v1943 = vmul.f32 %v1941, %v1924
    %v1944 = vmul.f32 %v1942, %v1926
    %v1945 = vsub.f32 0.0, %v1917
    %v1946 = vsub.f32 0.0, %v1918
    %v1947 = vmul.f32 %v1945, %v1917
    %v1948 = vmul.f32 %v1946, %v1918
    %v1949 = vmul.f32 %v1947, 1.442695
    %v1950 = vpow.pop %v1949
    %v1951 = vmul.f32 %v1948, 1.442695
    %v1952 = vpow.pop %v1951
    %v1953 = vmul.f32 %v1943, %v1950
    %v1954 = vmul.f32 %v1944, %v1952
    %v1955 = vsub.f32 1.0, %v1953
    %v1956 = vsub.f32 1.0, %v1954
    %vm1957 = vcmp.lt.f32.partialorder %v1915, 0.0
    %vm1958 = vcmp.lt.f32.partialorder %v1916, 0.0
    %v1959 = vsub.f32 0.0, %v1955
    %v1960 = vsub.f32 0.0, %v1956
    %v1961 = vsel %vm1957, %v1959, %v1955
    %v1962 = vsel %vm1958, %v1960, %v1956
    %v1963 = vadd.f32 %v1961, 1.0
    %v1964 = vadd.f32 %v1962, 1.0
    %v1965 = vmul.f32 %v1913, %v1963
    %v1966 = vmul.f32 %v1914, %v1964
    %v1967 = vadd.f32 %v219, %v1965
    %v1968 = vadd.f32 %v220, %v1966
    %v1969 = vmul.f32 %v1967, 0.70710677
    %v1970 = vmul.f32 %v1968, 0.70710677
    %v1971 = vadd.f32 %v1965, 0.0
    %v1972 = vadd.f32 %v1966, 0.0
    %1973 = vrot.lane.b32.xlu0 %v350, 96
    %v1974 = vpop.permute.xlu0 %1973
    %1975 = vrot.lane.b32.xlu0 %v354, 96
    %v1976 = vpop.permute.xlu0 %1975
    %v1979 = vadd.f32 %v1969, %v1974
    %v1980 = vadd.f32 %v1970, %v1976
    %s1981 = scalar_lea.vmem [#allocation2], 64
    %v1982 = vld [vmem:[%s1981] sm:$0xff]
    %v1983 = vld [vmem:[%s1981 + $0x8] sm:$0xff]
    %v1984 = vld [vmem:[%s1981 + $0x10] sm:$0xff]
    %v1985 = vld [vmem:[%s1981 + $0x18] sm:$0xff]
    %v1986 = vld [vmem:[%s1981 + $0x20] sm:$0xff]
    %v1987 = vld [vmem:[%s1981 + $0x28] sm:$0xff]
    %v1988 = vld [vmem:[%s1981 + $0x30] sm:$0xff]
    %v1989 = vld [vmem:[%s1981 + $0x38] sm:$0xff]
    %s1990 = scalar_lea.vmem %s7, 2
    %v1991 = vld [vmem:[%s1990] sm:$0x3]
    %v1993 = vlaneseq
    %v1994 = vshrl.u32 %v1993, 7
    %v1995 = vsub.s32 0, %v1994
    %v1996 = vrot.slane %v1991, %v1995
    %v1997 = vlaneseq
    %v1998 = vshrl.u32 %v1997, 7
    %v1999 = vsub.s32 1, %v1998
    %v2000 = vrot.slane %v1991, %v1999
    %v2004 = vsel %vm251, %v1979, 0
    %v2007 = vsel %vm251, %v1980, 0
    %2009 = vmatprep.subr.mxu0 0.0
    %2010 = vmatpush1.msra.mxu0 0.0
    %2011 = vmatprep.subr.mxu0 0.0
    %2012 = vmatpush1.msra.mxu0 0.0
    %2013 = vmatprep.subr.mxu0 0.0
    %2014 = vmatpush1.msra.mxu0 0.0
    %2015 = vmatprep.subr.mxu0 0.0
    %2016 = vmatpush1.msra.mxu0 0.0
    %2017 = vmatprep.subr.mxu0 0.0
    %2018 = vmatpush1.msra.mxu0 0.0
    %2019 = vmatprep.subr.mxu0 0.0
    %2020 = vmatpush1.msra.mxu0 0.0
    %2021 = vmatprep.subr.mxu0 0.0
    %2022 = vmatpush1.msra.mxu0 0.0
    %2023 = vmatprep.subr.mxu0 0.0
    %2024 = vmatpush1.msra.mxu0 0.0
    %2025 = vmatprep.subr.mxu0 0.0
    %2026 = vmatpush1.msra.mxu0 0.0
    %2027 = vmatprep.subr.mxu0 0.0
    %2028 = vmatpush1.msra.mxu0 0.0
    %2029 = vmatprep.subr.mxu0 0.0
    %2030 = vmatpush1.msra.mxu0 0.0
    %2031 = vmatprep.subr.mxu0 0.0
    %2032 = vmatpush1.msra.mxu0 0.0
    %2033 = vmatprep.subr.mxu0 %v1989
    %2034 = vmatpush1.msra.mxu0 %v1988
    %2035 = vmatprep.subr.mxu0 %v1987
    %2036 = vmatpush1.msra.mxu0 %v1986
    %2037 = vmatprep.subr.mxu0 %v1985
    %2038 = vmatpush1.msra.mxu0 %v1984
    %2039 = vmatprep.subr.mxu0 %v1983
    %2040 = vmatpush1.msra.mxu0 %v1982
    %2041 = vmatprep.subr.mxu0 0.0
    %2042 = vmatpush2.msra.mxu0 0.0
    %2043 = vmatprep.subr.mxu0 0.0
    %2044 = vmatpush2.msra.mxu0 0.0
    %2045 = vmatprep.subr.mxu0 0.0
    %2046 = vmatpush2.msra.mxu0 0.0
    %2047 = vmatprep.subr.mxu0 0.0
    %2048 = vmatpush2.msra.mxu0 0.0
    %2049 = vmatprep.subr.mxu0 0.0
    %2050 = vmatpush2.msra.mxu0 0.0
    %2051 = vmatprep.subr.mxu0 0.0
    %2052 = vmatpush2.msra.mxu0 0.0
    %2053 = vmatprep.subr.mxu0 0.0
    %2054 = vmatpush2.msra.mxu0 0.0
    %2055 = vmatprep.subr.mxu0 0.0
    %2056 = vmatpush2.msra.mxu0 0.0
    %2057 = vmatprep.subr.mxu0 0.0
    %2058 = vmatpush2.msra.mxu0 0.0
    %2059 = vmatprep.subr.mxu0 0.0
    %2060 = vmatpush2.msra.mxu0 0.0
    %2061 = vmatprep.subr.mxu0 0.0
    %2062 = vmatpush2.msra.mxu0 0.0
    %2063 = vmatprep.subr.mxu0 0.0
    %2064 = vmatpush2.msra.mxu0 0.0
    %2065 = vmatprep.subr.mxu0 0.0
    %2066 = vmatpush2.msra.mxu0 0.0
    %2067 = vmatprep.subr.mxu0 0.0
    %2068 = vmatpush2.msra.mxu0 0.0
    %2069 = vmatprep.subr.mxu0 0.0
    %2070 = vmatpush2.msra.mxu0 0.0
    %2071 = vmatprep.subr.mxu0 0.0
    %2072 = vmatpush2.msra.mxu0 0.0
    %2073 = vmatprep.mubr.f32.mxu0 0.0
    %2074 = vmatmul.mubr.f32.gmra.mxu0 %v2004
    %v2075 = vpop.f32.mrf.mxu0
    %v2076 = vadd.f32 %v1996, %v2075
    %v2077 = vpop.f32.mrf.mxu0
    %v2078 = vadd.f32 %v2000, %v2077
    %2079 = vmatprep.mubr.f32.mxu0 0.0
    %2080 = vmatmul.mubr.f32.gmra.mxu0 %v2007
    %v2081 = vpop.f32.mrf.mxu0
    %v2082 = vadd.f32 %v1996, %v2081
    %v2083 = vpop.f32.mrf.mxu0
    %v2084 = vadd.f32 %v2000, %v2083
    %2085 = vdwg.mxu0
    %2087 = vrot.lane.b32.xlu0 %v2076, 64
    %v2088 = vpop.permute.xlu0 %2087
    %v2089 = vsel %vm465, %v2076, 0
    %v2091 = vsel %vm465, %v2088, 0
    %2093 = vmatprep.subr.mxu0 0.0
    %2094 = vmatpush1.xpose.msra.mxu0 0.0
    %2095 = vmatprep.subr.mxu0 0.0
    %2096 = vmatpush1.xpose.msra.mxu0 0.0
    %2097 = vmatprep.subr.mxu0 0.0
    %2098 = vmatpush1.xpose.msra.mxu0 0.0
    %2099 = vmatprep.subr.mxu0 0.0
    %2100 = vmatpush1.xpose.msra.mxu0 0.0
    %2101 = vmatprep.subr.mxu0 0.0
    %2102 = vmatpush1.xpose.msra.mxu0 0.0
    %2103 = vmatprep.subr.mxu0 0.0
    %2104 = vmatpush1.xpose.msra.mxu0 0.0
    %2105 = vmatprep.subr.mxu0 0.0
    %2106 = vmatpush1.xpose.msra.mxu0 0.0
    %2107 = vmatprep.subr.mxu0 0.0
    %2108 = vmatpush1.xpose.msra.mxu0 0.0
    %2109 = vmatprep.subr.mxu0 0.0
    %2110 = vmatpush1.xpose.msra.mxu0 0.0
    %2111 = vmatprep.subr.mxu0 0.0
    %2112 = vmatpush1.xpose.msra.mxu0 0.0
    %2113 = vmatprep.subr.mxu0 0.0
    %2114 = vmatpush1.xpose.msra.mxu0 0.0
    %2115 = vmatprep.subr.mxu0 0.0
    %2116 = vmatpush1.xpose.msra.mxu0 0.0
    %2117 = vmatprep.subr.mxu0 0.0
    %2118 = vmatpush1.xpose.msra.mxu0 0.0
    %2119 = vmatprep.subr.mxu0 0.0
    %2120 = vmatpush1.xpose.msra.mxu0 0.0
    %2121 = vmatprep.subr.mxu0 0.0
    %2122 = vmatpush1.xpose.msra.mxu0 0.0
    %2123 = vmatprep.subr.mxu0 0.0
    %2124 = vmatpush1.xpose.msra.mxu0 %v2091
    %2125 = vmatprep.subr.mxu0 0.0
    %2126 = vmatpush2.xpose.msra.mxu0 0.0
    %2127 = vmatprep.subr.mxu0 0.0
    %2128 = vmatpush2.xpose.msra.mxu0 0.0
    %2129 = vmatprep.subr.mxu0 0.0
    %2130 = vmatpush2.xpose.msra.mxu0 0.0
    %2131 = vmatprep.subr.mxu0 0.0
    %2132 = vmatpush2.xpose.msra.mxu0 0.0
    %2133 = vmatprep.subr.mxu0 0.0
    %2134 = vmatpush2.xpose.msra.mxu0 0.0
    %2135 = vmatprep.subr.mxu0 0.0
    %2136 = vmatpush2.xpose.msra.mxu0 0.0
    %2137 = vmatprep.subr.mxu0 0.0
    %2138 = vmatpush2.xpose.msra.mxu0 0.0
    %2139 = vmatprep.subr.mxu0 0.0
    %2140 = vmatpush2.xpose.msra.mxu0 0.0
    %2141 = vmatprep.subr.mxu0 0.0
    %2142 = vmatpush2.xpose.msra.mxu0 0.0
    %2143 = vmatprep.subr.mxu0 0.0
    %2144 = vmatpush2.xpose.msra.mxu0 0.0
    %2145 = vmatprep.subr.mxu0 0.0
    %2146 = vmatpush2.xpose.msra.mxu0 0.0
    %2147 = vmatprep.subr.mxu0 0.0
    %2148 = vmatpush2.xpose.msra.mxu0 0.0
    %2149 = vmatprep.subr.mxu0 0.0
    %2150 = vmatpush2.xpose.msra.mxu0 0.0
    %2151 = vmatprep.subr.mxu0 0.0
    %2152 = vmatpush2.xpose.msra.mxu0 0.0
    %2153 = vmatprep.subr.mxu0 0.0
    %2154 = vmatpush2.xpose.msra.mxu0 0.0
    %2155 = vmatprep.subr.mxu0 0.0
    %2156 = vmatpush2.xpose.msra.mxu0 0.0
    %2157 = vmatprep.mubr.f32.mxu0 0.0
    %2158 = vmatmul.mubr.f32.gmra.mxu0 %v2089
    %v2159 = vpop.f32.mrf.mxu0
    %v2160 = vadd.f32 0.0, %v2159
    %v2161 = vpop.f32.mrf.mxu0
    %2162 = vdwg.mxu0
    %2164 = vrot.lane.b32.xlu0 %v2082, 64
    %v2165 = vpop.permute.xlu0 %2164
    %v2166 = vsel %vm465, %v2082, 0
    %v2168 = vsel %vm465, %v2165, 0
    %2170 = vmatprep.subr.mxu0 0.0
    %2171 = vmatpush1.xpose.msra.mxu0 0.0
    %2172 = vmatprep.subr.mxu0 0.0
    %2173 = vmatpush1.xpose.msra.mxu0 0.0
    %2174 = vmatprep.subr.mxu0 0.0
    %2175 = vmatpush1.xpose.msra.mxu0 0.0
    %2176 = vmatprep.subr.mxu0 0.0
    %2177 = vmatpush1.xpose.msra.mxu0 0.0
    %2178 = vmatprep.subr.mxu0 0.0
    %2179 = vmatpush1.xpose.msra.mxu0 0.0
    %2180 = vmatprep.subr.mxu0 0.0
    %2181 = vmatpush1.xpose.msra.mxu0 0.0
    %2182 = vmatprep.subr.mxu0 0.0
    %2183 = vmatpush1.xpose.msra.mxu0 0.0
    %2184 = vmatprep.subr.mxu0 0.0
    %2185 = vmatpush1.xpose.msra.mxu0 0.0
    %2186 = vmatprep.subr.mxu0 0.0
    %2187 = vmatpush1.xpose.msra.mxu0 0.0
    %2188 = vmatprep.subr.mxu0 0.0
    %2189 = vmatpush1.xpose.msra.mxu0 0.0
    %2190 = vmatprep.subr.mxu0 0.0
    %2191 = vmatpush1.xpose.msra.mxu0 0.0
    %2192 = vmatprep.subr.mxu0 0.0
    %2193 = vmatpush1.xpose.msra.mxu0 0.0
    %2194 = vmatprep.subr.mxu0 0.0
    %2195 = vmatpush1.xpose.msra.mxu0 0.0
    %2196 = vmatprep.subr.mxu0 0.0
    %2197 = vmatpush1.xpose.msra.mxu0 0.0
    %2198 = vmatprep.subr.mxu0 0.0
    %2199 = vmatpush1.xpose.msra.mxu0 0.0
    %2200 = vmatprep.subr.mxu0 0.0
    %2201 = vmatpush1.xpose.msra.mxu0 %v2168
    %2202 = vmatprep.subr.mxu0 0.0
    %2203 = vmatpush2.xpose.msra.mxu0 0.0
    %2204 = vmatprep.subr.mxu0 0.0
    %2205 = vmatpush2.xpose.msra.mxu0 0.0
    %2206 = vmatprep.subr.mxu0 0.0
    %2207 = vmatpush2.xpose.msra.mxu0 0.0
    %2208 = vmatprep.subr.mxu0 0.0
    %2209 = vmatpush2.xpose.msra.mxu0 0.0
    %2210 = vmatprep.subr.mxu0 0.0
    %2211 = vmatpush2.xpose.msra.mxu0 0.0
    %2212 = vmatprep.subr.mxu0 0.0
    %2213 = vmatpush2.xpose.msra.mxu0 0.0
    %2214 = vmatprep.subr.mxu0 0.0
    %2215 = vmatpush2.xpose.msra.mxu0 0.0
    %2216 = vmatprep.subr.mxu0 0.0
    %2217 = vmatpush2.xpose.msra.mxu0 0.0
    %2218 = vmatprep.subr.mxu0 0.0
    %2219 = vmatpush2.xpose.msra.mxu0 0.0
    %2220 = vmatprep.subr.mxu0 0.0
    %2221 = vmatpush2.xpose.msra.mxu0 0.0
    %2222 = vmatprep.subr.mxu0 0.0
    %2223 = vmatpush2.xpose.msra.mxu0 0.0
    %2224 = vmatprep.subr.mxu0 0.0
    %2225 = vmatpush2.xpose.msra.mxu0 0.0
    %2226 = vmatprep.subr.mxu0 0.0
    %2227 = vmatpush2.xpose.msra.mxu0 0.0
    %2228 = vmatprep.subr.mxu0 0.0
    %2229 = vmatpush2.xpose.msra.mxu0 0.0
    %2230 = vmatprep.subr.mxu0 0.0
    %2231 = vmatpush2.xpose.msra.mxu0 0.0
    %2232 = vmatprep.subr.mxu0 0.0
    %2233 = vmatpush2.xpose.msra.mxu0 0.0
    %2234 = vmatprep.mubr.f32.mxu0 0.0
    %2235 = vmatmul.mubr.f32.gmra.mxu0 %v2166
    %v2236 = vpop.f32.mrf.mxu0
    %v2237 = vadd.f32 0.0, %v2236
    %v2238 = vpop.f32.mrf.mxu0
    %2239 = vdwg.mxu0
    %v2240 = vmul.f32 %v2160, 0.25
    %v2241 = vmul.f32 %v2237, 0.25
    %v2242 = vsel %vm85, %v2240, -inf
    %2243 = vmax.xlane.f32.xlu0 %v2242
    %v2244 = vpop.xlane.xlu0 %2243
    %v2245 = vsel %vm85, %v2241, -inf
    %2246 = vmax.xlane.f32.xlu0 %v2245
    %v2247 = vpop.xlane.xlu0 %2246
    %v2248 = vsub.f32 %v2240, %v2244
    %v2249 = vsub.f32 %v2241, %v2247
    %v2250 = vmul.f32 %v2248, 1.442695
    %v2251 = vpow.pop %v2250
    %v2252 = vmul.f32 %v2249, 1.442695
    %v2253 = vpow.pop %v2252
    %v2254 = vsel %vm85, %v2251, 0.0
    %2255 = vadd.xlane.f32.xlu0 %v2254
    %v2256 = vpop.xlane.xlu0 %2255
    %v2257 = vsel %vm85, %v2253, 0.0
    %2258 = vadd.xlane.f32.xlu0 %v2257
    %v2259 = vpop.xlane.xlu0 %2258
    %v2260 = vrcp.pop %v2256
    %v2261 = vrcp.pop %v2259
    %v2262 = vmul.f32 %v2251, %v2260
    %v2263 = vmul.f32 %v2253, %v2261
    %v2265 = vsel %vm85, %v2262, 0
    %2267 = vmatprep.subr.mxu0 0.0
    %2268 = vmatpush1.msra.mxu0 0.0
    %2269 = vmatprep.subr.mxu0 0.0
    %2270 = vmatpush1.msra.mxu0 0.0
    %2271 = vmatprep.subr.mxu0 0.0
    %2272 = vmatpush1.msra.mxu0 0.0
    %2273 = vmatprep.subr.mxu0 0.0
    %2274 = vmatpush1.msra.mxu0 0.0
    %2275 = vmatprep.subr.mxu0 0.0
    %2276 = vmatpush1.msra.mxu0 0.0
    %2277 = vmatprep.subr.mxu0 0.0
    %2278 = vmatpush1.msra.mxu0 0.0
    %2279 = vmatprep.subr.mxu0 0.0
    %2280 = vmatpush1.msra.mxu0 0.0
    %2281 = vmatprep.subr.mxu0 0.0
    %2282 = vmatpush1.msra.mxu0 0.0
    %2283 = vmatprep.subr.mxu0 0.0
    %2284 = vmatpush1.msra.mxu0 0.0
    %2285 = vmatprep.subr.mxu0 0.0
    %2286 = vmatpush1.msra.mxu0 0.0
    %2287 = vmatprep.subr.mxu0 0.0
    %2288 = vmatpush1.msra.mxu0 0.0
    %2289 = vmatprep.subr.mxu0 0.0
    %2290 = vmatpush1.msra.mxu0 0.0
    %2291 = vmatprep.subr.mxu0 0.0
    %2292 = vmatpush1.msra.mxu0 0.0
    %2293 = vmatprep.subr.mxu0 0.0
    %2294 = vmatpush1.msra.mxu0 0.0
    %2295 = vmatprep.subr.mxu0 0.0
    %2296 = vmatpush1.msra.mxu0 0.0
    %2297 = vmatprep.subr.mxu0 0.0
    %2298 = vmatpush1.msra.mxu0 %v2078
    %2299 = vmatprep.subr.mxu0 0.0
    %2300 = vmatpush2.msra.mxu0 0.0
    %2301 = vmatprep.subr.mxu0 0.0
    %2302 = vmatpush2.msra.mxu0 0.0
    %2303 = vmatprep.subr.mxu0 0.0
    %2304 = vmatpush2.msra.mxu0 0.0
    %2305 = vmatprep.subr.mxu0 0.0
    %2306 = vmatpush2.msra.mxu0 0.0
    %2307 = vmatprep.subr.mxu0 0.0
    %2308 = vmatpush2.msra.mxu0 0.0
    %2309 = vmatprep.subr.mxu0 0.0
    %2310 = vmatpush2.msra.mxu0 0.0
    %2311 = vmatprep.subr.mxu0 0.0
    %2312 = vmatpush2.msra.mxu0 0.0
    %2313 = vmatprep.subr.mxu0 0.0
    %2314 = vmatpush2.msra.mxu0 0.0
    %2315 = vmatprep.subr.mxu0 0.0
    %2316 = vmatpush2.msra.mxu0 0.0
    %2317 = vmatprep.subr.mxu0 0.0
    %2318 = vmatpush2.msra.mxu0 0.0
    %2319 = vmatprep.subr.mxu0 0.0
    %2320 = vmatpush2.msra.mxu0 0.0
    %2321 = vmatprep.subr.mxu0 0.0
    %2322 = vmatpush2.msra.mxu0 0.0
    %2323 = vmatprep.subr.mxu0 0.0
    %2324 = vmatpush2.msra.mxu0 0.0
    %2325 = vmatprep.subr.mxu0 0.0
    %2326 = vmatpush2.msra.mxu0 0.0
    %2327 = vmatprep.subr.mxu0 0.0
    %2328 = vmatpush2.msra.mxu0 0.0
    %2329 = vmatprep.subr.mxu0 0.0
    %2330 = vmatpush2.msra.mxu0 0.0
    %2331 = vmatprep.mubr.f32.mxu0 0.0
    %2332 = vmatmul.mubr.f32.gmra.mxu0 %v2265
    %v2333 = vpop.f32.mrf.mxu0
    %v2334 = vadd.f32 0.0, %v2333
    %v2335 = vpop.f32.mrf.mxu0
    %2336 = vdwg.mxu0
    %v2338 = vsel %vm85, %v2263, 0
    %2340 = vmatprep.subr.mxu0 0.0
    %2341 = vmatpush1.msra.mxu0 0.0
    %2342 = vmatprep.subr.mxu0 0.0
    %2343 = vmatpush1.msra.mxu0 0.0
    %2344 = vmatprep.subr.mxu0 0.0
    %2345 = vmatpush1.msra.mxu0 0.0
    %2346 = vmatprep.subr.mxu0 0.0
    %2347 = vmatpush1.msra.mxu0 0.0
    %2348 = vmatprep.subr.mxu0 0.0
    %2349 = vmatpush1.msra.mxu0 0.0
    %2350 = vmatprep.subr.mxu0 0.0
    %2351 = vmatpush1.msra.mxu0 0.0
    %2352 = vmatprep.subr.mxu0 0.0
    %2353 = vmatpush1.msra.mxu0 0.0
    %2354 = vmatprep.subr.mxu0 0.0
    %2355 = vmatpush1.msra.mxu0 0.0
    %2356 = vmatprep.subr.mxu0 0.0
    %2357 = vmatpush1.msra.mxu0 0.0
    %2358 = vmatprep.subr.mxu0 0.0
    %2359 = vmatpush1.msra.mxu0 0.0
    %2360 = vmatprep.subr.mxu0 0.0
    %2361 = vmatpush1.msra.mxu0 0.0
    %2362 = vmatprep.subr.mxu0 0.0
    %2363 = vmatpush1.msra.mxu0 0.0
    %2364 = vmatprep.subr.mxu0 0.0
    %2365 = vmatpush1.msra.mxu0 0.0
    %2366 = vmatprep.subr.mxu0 0.0
    %2367 = vmatpush1.msra.mxu0 0.0
    %2368 = vmatprep.subr.mxu0 0.0
    %2369 = vmatpush1.msra.mxu0 0.0
    %2370 = vmatprep.subr.mxu0 0.0
    %2371 = vmatpush1.msra.mxu0 %v2084
    %2372 = vmatprep.subr.mxu0 0.0
    %2373 = vmatpush2.msra.mxu0 0.0
    %2374 = vmatprep.subr.mxu0 0.0
    %2375 = vmatpush2.msra.mxu0 0.0
    %2376 = vmatprep.subr.mxu0 0.0
    %2377 = vmatpush2.msra.mxu0 0.0
    %2378 = vmatprep.subr.mxu0 0.0
    %2379 = vmatpush2.msra.mxu0 0.0
    %2380 = vmatprep.subr.mxu0 0.0
    %2381 = vmatpush2.msra.mxu0 0.0
    %2382 = vmatprep.subr.mxu0 0.0
    %2383 = vmatpush2.msra.mxu0 0.0
    %2384 = vmatprep.subr.mxu0 0.0
    %2385 = vmatpush2.msra.mxu0 0.0
    %2386 = vmatprep.subr.mxu0 0.0
    %2387 = vmatpush2.msra.mxu0 0.0
    %2388 = vmatprep.subr.mxu0 0.0
    %2389 = vmatpush2.msra.mxu0 0.0
    %2390 = vmatprep.subr.mxu0 0.0
    %2391 = vmatpush2.msra.mxu0 0.0
    %2392 = vmatprep.subr.mxu0 0.0
    %2393 = vmatpush2.msra.mxu0 0.0
    %2394 = vmatprep.subr.mxu0 0.0
    %2395 = vmatpush2.msra.mxu0 0.0
    %2396 = vmatprep.subr.mxu0 0.0
    %2397 = vmatpush2.msra.mxu0 0.0
    %2398 = vmatprep.subr.mxu0 0.0
    %2399 = vmatpush2.msra.mxu0 0.0
    %2400 = vmatprep.subr.mxu0 0.0
    %2401 = vmatpush2.msra.mxu0 0.0
    %2402 = vmatprep.subr.mxu0 0.0
    %2403 = vmatpush2.msra.mxu0 0.0
    %2404 = vmatprep.mubr.f32.mxu0 0.0
    %2405 = vmatmul.mubr.f32.gmra.mxu0 %v2338
    %v2406 = vpop.f32.mrf.mxu0
    %v2407 = vadd.f32 0.0, %v2406
    %v2408 = vpop.f32.mrf.mxu0
    %2409 = vdwg.mxu0
    %2410 = vrot.lane.b32.xlu0 %v2076, 112
    %v2411 = vpop.permute.xlu0 %2410
    %2412 = vrot.lane.b32.xlu0 %v2076, 48
    %v2413 = vpop.permute.xlu0 %2412
    %v2414 = vsel %vm465, %v2411, 0
    %v2416 = vsel %vm465, %v2413, 0
    %2418 = vmatprep.subr.mxu0 0.0
    %2419 = vmatpush1.xpose.msra.mxu0 0.0
    %2420 = vmatprep.subr.mxu0 0.0
    %2421 = vmatpush1.xpose.msra.mxu0 0.0
    %2422 = vmatprep.subr.mxu0 0.0
    %2423 = vmatpush1.xpose.msra.mxu0 0.0
    %2424 = vmatprep.subr.mxu0 0.0
    %2425 = vmatpush1.xpose.msra.mxu0 0.0
    %2426 = vmatprep.subr.mxu0 0.0
    %2427 = vmatpush1.xpose.msra.mxu0 0.0
    %2428 = vmatprep.subr.mxu0 0.0
    %2429 = vmatpush1.xpose.msra.mxu0 0.0
    %2430 = vmatprep.subr.mxu0 0.0
    %2431 = vmatpush1.xpose.msra.mxu0 0.0
    %2432 = vmatprep.subr.mxu0 0.0
    %2433 = vmatpush1.xpose.msra.mxu0 0.0
    %2434 = vmatprep.subr.mxu0 0.0
    %2435 = vmatpush1.xpose.msra.mxu0 0.0
    %2436 = vmatprep.subr.mxu0 0.0
    %2437 = vmatpush1.xpose.msra.mxu0 0.0
    %2438 = vmatprep.subr.mxu0 0.0
    %2439 = vmatpush1.xpose.msra.mxu0 0.0
    %2440 = vmatprep.subr.mxu0 0.0
    %2441 = vmatpush1.xpose.msra.mxu0 0.0
    %2442 = vmatprep.subr.mxu0 0.0
    %2443 = vmatpush1.xpose.msra.mxu0 0.0
    %2444 = vmatprep.subr.mxu0 0.0
    %2445 = vmatpush1.xpose.msra.mxu0 0.0
    %2446 = vmatprep.subr.mxu0 0.0
    %2447 = vmatpush1.xpose.msra.mxu0 0.0
    %2448 = vmatprep.subr.mxu0 0.0
    %2449 = vmatpush1.xpose.msra.mxu0 %v2416
    %2450 = vmatprep.subr.mxu0 0.0
    %2451 = vmatpush2.xpose.msra.mxu0 0.0
    %2452 = vmatprep.subr.mxu0 0.0
    %2453 = vmatpush2.xpose.msra.mxu0 0.0
    %2454 = vmatprep.subr.mxu0 0.0
    %2455 = vmatpush2.xpose.msra.mxu0 0.0
    %2456 = vmatprep.subr.mxu0 0.0
    %2457 = vmatpush2.xpose.msra.mxu0 0.0
    %2458 = vmatprep.subr.mxu0 0.0
    %2459 = vmatpush2.xpose.msra.mxu0 0.0
    %2460 = vmatprep.subr.mxu0 0.0
    %2461 = vmatpush2.xpose.msra.mxu0 0.0
    %2462 = vmatprep.subr.mxu0 0.0
    %2463 = vmatpush2.xpose.msra.mxu0 0.0
    %2464 = vmatprep.subr.mxu0 0.0
    %2465 = vmatpush2.xpose.msra.mxu0 0.0
    %2466 = vmatprep.subr.mxu0 0.0
    %2467 = vmatpush2.xpose.msra.mxu0 0.0
    %2468 = vmatprep.subr.mxu0 0.0
    %2469 = vmatpush2.xpose.msra.mxu0 0.0
    %2470 = vmatprep.subr.mxu0 0.0
    %2471 = vmatpush2.xpose.msra.mxu0 0.0
    %2472 = vmatprep.subr.mxu0 0.0
    %2473 = vmatpush2.xpose.msra.mxu0 0.0
    %2474 = vmatprep.subr.mxu0 0.0
    %2475 = vmatpush2.xpose.msra.mxu0 0.0
    %2476 = vmatprep.subr.mxu0 0.0
    %2477 = vmatpush2.xpose.msra.mxu0 0.0
    %2478 = vmatprep.subr.mxu0 0.0
    %2479 = vmatpush2.xpose.msra.mxu0 0.0
    %2480 = vmatprep.subr.mxu0 0.0
    %2481 = vmatpush2.xpose.msra.mxu0 0.0
    %2482 = vmatprep.mubr.f32.mxu0 0.0
    %2483 = vmatmul.mubr.f32.gmra.mxu0 %v2414
    %v2484 = vpop.f32.mrf.mxu0
    %v2485 = vadd.f32 0.0, %v2484
    %v2486 = vpop.f32.mrf.mxu0
    %2487 = vdwg.mxu0
    %2488 = vrot.lane.b32.xlu0 %v2082, 112
    %v2489 = vpop.permute.xlu0 %2488
    %2490 = vrot.lane.b32.xlu0 %v2082, 48
    %v2491 = vpop.permute.xlu0 %2490
    %v2492 = vsel %vm465, %v2489, 0
    %v2494 = vsel %vm465, %v2491, 0
    %2496 = vmatprep.subr.mxu0 0.0
    %2497 = vmatpush1.xpose.msra.mxu0 0.0
    %2498 = vmatprep.subr.mxu0 0.0
    %2499 = vmatpush1.xpose.msra.mxu0 0.0
    %2500 = vmatprep.subr.mxu0 0.0
    %2501 = vmatpush1.xpose.msra.mxu0 0.0
    %2502 = vmatprep.subr.mxu0 0.0
    %2503 = vmatpush1.xpose.msra.mxu0 0.0
    %2504 = vmatprep.subr.mxu0 0.0
    %2505 = vmatpush1.xpose.msra.mxu0 0.0
    %2506 = vmatprep.subr.mxu0 0.0
    %2507 = vmatpush1.xpose.msra.mxu0 0.0
    %2508 = vmatprep.subr.mxu0 0.0
    %2509 = vmatpush1.xpose.msra.mxu0 0.0
    %2510 = vmatprep.subr.mxu0 0.0
    %2511 = vmatpush1.xpose.msra.mxu0 0.0
    %2512 = vmatprep.subr.mxu0 0.0
    %2513 = vmatpush1.xpose.msra.mxu0 0.0
    %2514 = vmatprep.subr.mxu0 0.0
    %2515 = vmatpush1.xpose.msra.mxu0 0.0
    %2516 = vmatprep.subr.mxu0 0.0
    %2517 = vmatpush1.xpose.msra.mxu0 0.0
    %2518 = vmatprep.subr.mxu0 0.0
    %2519 = vmatpush1.xpose.msra.mxu0 0.0
    %2520 = vmatprep.subr.mxu0 0.0
    %2521 = vmatpush1.xpose.msra.mxu0 0.0
    %2522 = vmatprep.subr.mxu0 0.0
    %2523 = vmatpush1.xpose.msra.mxu0 0.0
    %2524 = vmatprep.subr.mxu0 0.0
    %2525 = vmatpush1.xpose.msra.mxu0 0.0
    %2526 = vmatprep.subr.mxu0 0.0
    %2527 = vmatpush1.xpose.msra.mxu0 %v2494
    %2528 = vmatprep.subr.mxu0 0.0
    %2529 = vmatpush2.xpose.msra.mxu0 0.0
    %2530 = vmatprep.subr.mxu0 0.0
    %2531 = vmatpush2.xpose.msra.mxu0 0.0
    %2532 = vmatprep.subr.mxu0 0.0
    %2533 = vmatpush2.xpose.msra.mxu0 0.0
    %2534 = vmatprep.subr.mxu0 0.0
    %2535 = vmatpush2.xpose.msra.mxu0 0.0
    %2536 = vmatprep.subr.mxu0 0.0
    %2537 = vmatpush2.xpose.msra.mxu0 0.0
    %2538 = vmatprep.subr.mxu0 0.0
    %2539 = vmatpush2.xpose.msra.mxu0 0.0
    %2540 = vmatprep.subr.mxu0 0.0
    %2541 = vmatpush2.xpose.msra.mxu0 0.0
    %2542 = vmatprep.subr.mxu0 0.0
    %2543 = vmatpush2.xpose.msra.mxu0 0.0
    %2544 = vmatprep.subr.mxu0 0.0
    %2545 = vmatpush2.xpose.msra.mxu0 0.0
    %2546 = vmatprep.subr.mxu0 0.0
    %2547 = vmatpush2.xpose.msra.mxu0 0.0
    %2548 = vmatprep.subr.mxu0 0.0
    %2549 = vmatpush2.xpose.msra.mxu0 0.0
    %2550 = vmatprep.subr.mxu0 0.0
    %2551 = vmatpush2.xpose.msra.mxu0 0.0
    %2552 = vmatprep.subr.mxu0 0.0
    %2553 = vmatpush2.xpose.msra.mxu0 0.0
    %2554 = vmatprep.subr.mxu0 0.0
    %2555 = vmatpush2.xpose.msra.mxu0 0.0
    %2556 = vmatprep.subr.mxu0 0.0
    %2557 = vmatpush2.xpose.msra.mxu0 0.0
    %2558 = vmatprep.subr.mxu0 0.0
    %2559 = vmatpush2.xpose.msra.mxu0 0.0
    %2560 = vmatprep.mubr.f32.mxu0 0.0
    %2561 = vmatmul.mubr.f32.gmra.mxu0 %v2492
    %v2562 = vpop.f32.mrf.mxu0
    %v2563 = vadd.f32 0.0, %v2562
    %v2564 = vpop.f32.mrf.mxu0
    %2565 = vdwg.mxu0
    %v2566 = vmul.f32 %v2485, 0.25
    %v2567 = vmul.f32 %v2563, 0.25
    %v2568 = vsel %vm85, %v2566, -inf
    %2569 = vmax.xlane.f32.xlu0 %v2568
    %v2570 = vpop.xlane.xlu0 %2569
    %v2571 = vsel %vm85, %v2567, -inf
    %2572 = vmax.xlane.f32.xlu0 %v2571
    %v2573 = vpop.xlane.xlu0 %2572
    %v2574 = vsub.f32 %v2566, %v2570
    %v2575 = vsub.f32 %v2567, %v2573
    %v2576 = vmul.f32 %v2574, 1.442695
    %v2577 = vpow.pop %v2576
    %v2578 = vmul.f32 %v2575, 1.442695
    %v2579 = vpow.pop %v2578
    %v2580 = vsel %vm85, %v2577, 0.0
    %2581 = vadd.xlane.f32.xlu0 %v2580
    %v2582 = vpop.xlane.xlu0 %2581
    %v2583 = vsel %vm85, %v2579, 0.0
    %2584 = vadd.xlane.f32.xlu0 %v2583
    %v2585 = vpop.xlane.xlu0 %2584
    %v2586 = vrcp.pop %v2582
    %v2587 = vrcp.pop %v2585
    %v2588 = vmul.f32 %v2577, %v2586
    %v2589 = vmul.f32 %v2579, %v2587
    %2591 = vrot.lane.b32.xlu0 %v2078, 112
    %v2592 = vpop.permute.xlu0 %2591
    %v2595 = vsel %vm85, %v2588, 0
    %2597 = vmatprep.subr.mxu0 0.0
    %2598 = vmatpush1.msra.mxu0 0.0
    %2599 = vmatprep.subr.mxu0 0.0
    %2600 = vmatpush1.msra.mxu0 0.0
    %2601 = vmatprep.subr.mxu0 0.0
    %2602 = vmatpush1.msra.mxu0 0.0
    %2603 = vmatprep.subr.mxu0 0.0
    %2604 = vmatpush1.msra.mxu0 0.0
    %2605 = vmatprep.subr.mxu0 0.0
    %2606 = vmatpush1.msra.mxu0 0.0
    %2607 = vmatprep.subr.mxu0 0.0
    %2608 = vmatpush1.msra.mxu0 0.0
    %2609 = vmatprep.subr.mxu0 0.0
    %2610 = vmatpush1.msra.mxu0 0.0
    %2611 = vmatprep.subr.mxu0 0.0
    %2612 = vmatpush1.msra.mxu0 0.0
    %2613 = vmatprep.subr.mxu0 0.0
    %2614 = vmatpush1.msra.mxu0 0.0
    %2615 = vmatprep.subr.mxu0 0.0
    %2616 = vmatpush1.msra.mxu0 0.0
    %2617 = vmatprep.subr.mxu0 0.0
    %2618 = vmatpush1.msra.mxu0 0.0
    %2619 = vmatprep.subr.mxu0 0.0
    %2620 = vmatpush1.msra.mxu0 0.0
    %2621 = vmatprep.subr.mxu0 0.0
    %2622 = vmatpush1.msra.mxu0 0.0
    %2623 = vmatprep.subr.mxu0 0.0
    %2624 = vmatpush1.msra.mxu0 0.0
    %2625 = vmatprep.subr.mxu0 0.0
    %2626 = vmatpush1.msra.mxu0 0.0
    %2627 = vmatprep.subr.mxu0 0.0
    %2628 = vmatpush1.msra.mxu0 %v2592
    %2629 = vmatprep.subr.mxu0 0.0
    %2630 = vmatpush2.msra.mxu0 0.0
    %2631 = vmatprep.subr.mxu0 0.0
    %2632 = vmatpush2.msra.mxu0 0.0
    %2633 = vmatprep.subr.mxu0 0.0
    %2634 = vmatpush2.msra.mxu0 0.0
    %2635 = vmatprep.subr.mxu0 0.0
    %2636 = vmatpush2.msra.mxu0 0.0
    %2637 = vmatprep.subr.mxu0 0.0
    %2638 = vmatpush2.msra.mxu0 0.0
    %2639 = vmatprep.subr.mxu0 0.0
    %2640 = vmatpush2.msra.mxu0 0.0
    %2641 = vmatprep.subr.mxu0 0.0
    %2642 = vmatpush2.msra.mxu0 0.0
    %2643 = vmatprep.subr.mxu0 0.0
    %2644 = vmatpush2.msra.mxu0 0.0
    %2645 = vmatprep.subr.mxu0 0.0
    %2646 = vmatpush2.msra.mxu0 0.0
    %2647 = vmatprep.subr.mxu0 0.0
    %2648 = vmatpush2.msra.mxu0 0.0
    %2649 = vmatprep.subr.mxu0 0.0
    %2650 = vmatpush2.msra.mxu0 0.0
    %2651 = vmatprep.subr.mxu0 0.0
    %2652 = vmatpush2.msra.mxu0 0.0
    %2653 = vmatprep.subr.mxu0 0.0
    %2654 = vmatpush2.msra.mxu0 0.0
    %2655 = vmatprep.subr.mxu0 0.0
    %2656 = vmatpush2.msra.mxu0 0.0
    %2657 = vmatprep.subr.mxu0 0.0
    %2658 = vmatpush2.msra.mxu0 0.0
    %2659 = vmatprep.subr.mxu0 0.0
    %2660 = vmatpush2.msra.mxu0 0.0
    %2661 = vmatprep.mubr.f32.mxu0 0.0
    %2662 = vmatmul.mubr.f32.gmra.mxu0 %v2595
    %v2663 = vpop.f32.mrf.mxu0
    %v2664 = vadd.f32 0.0, %v2663
    %v2665 = vpop.f32.mrf.mxu0
    %2666 = vdwg.mxu0
    %2668 = vrot.lane.b32.xlu0 %v2084, 112
    %v2669 = vpop.permute.xlu0 %2668
    %v2672 = vsel %vm85, %v2589, 0
    %2674 = vmatprep.subr.mxu0 0.0
    %2675 = vmatpush1.msra.mxu0 0.0
    %2676 = vmatprep.subr.mxu0 0.0
    %2677 = vmatpush1.msra.mxu0 0.0
    %2678 = vmatprep.subr.mxu0 0.0
    %2679 = vmatpush1.msra.mxu0 0.0
    %2680 = vmatprep.subr.mxu0 0.0
    %2681 = vmatpush1.msra.mxu0 0.0
    %2682 = vmatprep.subr.mxu0 0.0
    %2683 = vmatpush1.msra.mxu0 0.0
    %2684 = vmatprep.subr.mxu0 0.0
    %2685 = vmatpush1.msra.mxu0 0.0
    %2686 = vmatprep.subr.mxu0 0.0
    %2687 = vmatpush1.msra.mxu0 0.0
    %2688 = vmatprep.subr.mxu0 0.0
    %2689 = vmatpush1.msra.mxu0 0.0
    %2690 = vmatprep.subr.mxu0 0.0
    %2691 = vmatpush1.msra.mxu0 0.0
    %2692 = vmatprep.subr.mxu0 0.0
    %2693 = vmatpush1.msra.mxu0 0.0
    %2694 = vmatprep.subr.mxu0 0.0
    %2695 = vmatpush1.msra.mxu0 0.0
    %2696 = vmatprep.subr.mxu0 0.0
    %2697 = vmatpush1.msra.mxu0 0.0
    %2698 = vmatprep.subr.mxu0 0.0
    %2699 = vmatpush1.msra.mxu0 0.0
    %2700 = vmatprep.subr.mxu0 0.0
    %2701 = vmatpush1.msra.mxu0 0.0
    %2702 = vmatprep.subr.mxu0 0.0
    %2703 = vmatpush1.msra.mxu0 0.0
    %2704 = vmatprep.subr.mxu0 0.0
    %2705 = vmatpush1.msra.mxu0 %v2669
    %2706 = vmatprep.subr.mxu0 0.0
    %2707 = vmatpush2.msra.mxu0 0.0
    %2708 = vmatprep.subr.mxu0 0.0
    %2709 = vmatpush2.msra.mxu0 0.0
    %2710 = vmatprep.subr.mxu0 0.0
    %2711 = vmatpush2.msra.mxu0 0.0
    %2712 = vmatprep.subr.mxu0 0.0
    %2713 = vmatpush2.msra.mxu0 0.0
    %2714 = vmatprep.subr.mxu0 0.0
    %2715 = vmatpush2.msra.mxu0 0.0
    %2716 = vmatprep.subr.mxu0 0.0
    %2717 = vmatpush2.msra.mxu0 0.0
    %2718 = vmatprep.subr.mxu0 0.0
    %2719 = vmatpush2.msra.mxu0 0.0
    %2720 = vmatprep.subr.mxu0 0.0
    %2721 = vmatpush2.msra.mxu0 0.0
    %2722 = vmatprep.subr.mxu0 0.0
    %2723 = vmatpush2.msra.mxu0 0.0
    %2724 = vmatprep.subr.mxu0 0.0
    %2725 = vmatpush2.msra.mxu0 0.0
    %2726 = vmatprep.subr.mxu0 0.0
    %2727 = vmatpush2.msra.mxu0 0.0
    %2728 = vmatprep.subr.mxu0 0.0
    %2729 = vmatpush2.msra.mxu0 0.0
    %2730 = vmatprep.subr.mxu0 0.0
    %2731 = vmatpush2.msra.mxu0 0.0
    %2732 = vmatprep.subr.mxu0 0.0
    %2733 = vmatpush2.msra.mxu0 0.0
    %2734 = vmatprep.subr.mxu0 0.0
    %2735 = vmatpush2.msra.mxu0 0.0
    %2736 = vmatprep.subr.mxu0 0.0
    %2737 = vmatpush2.msra.mxu0 0.0
    %2738 = vmatprep.mubr.f32.mxu0 0.0
    %2739 = vmatmul.mubr.f32.gmra.mxu0 %v2672
    %v2740 = vpop.f32.mrf.mxu0
    %v2741 = vadd.f32 0.0, %v2740
    %v2742 = vpop.f32.mrf.mxu0
    %2743 = vdwg.mxu0
    %2744 = vrot.lane.b32.xlu0 %v2076, 96
    %v2745 = vpop.permute.xlu0 %2744
    %2746 = vrot.lane.b32.xlu0 %v2076, 32
    %v2747 = vpop.permute.xlu0 %2746
    %v2748 = vsel %vm465, %v2745, 0
    %v2750 = vsel %vm465, %v2747, 0
    %2752 = vmatprep.subr.mxu0 0.0
    %2753 = vmatpush1.xpose.msra.mxu0 0.0
    %2754 = vmatprep.subr.mxu0 0.0
    %2755 = vmatpush1.xpose.msra.mxu0 0.0
    %2756 = vmatprep.subr.mxu0 0.0
    %2757 = vmatpush1.xpose.msra.mxu0 0.0
    %2758 = vmatprep.subr.mxu0 0.0
    %2759 = vmatpush1.xpose.msra.mxu0 0.0
    %2760 = vmatprep.subr.mxu0 0.0
    %2761 = vmatpush1.xpose.msra.mxu0 0.0
    %2762 = vmatprep.subr.mxu0 0.0
    %2763 = vmatpush1.xpose.msra.mxu0 0.0
    %2764 = vmatprep.subr.mxu0 0.0
    %2765 = vmatpush1.xpose.msra.mxu0 0.0
    %2766 = vmatprep.subr.mxu0 0.0
    %2767 = vmatpush1.xpose.msra.mxu0 0.0
    %2768 = vmatprep.subr.mxu0 0.0
    %2769 = vmatpush1.xpose.msra.mxu0 0.0
    %2770 = vmatprep.subr.mxu0 0.0
    %2771 = vmatpush1.xpose.msra.mxu0 0.0
    %2772 = vmatprep.subr.mxu0 0.0
    %2773 = vmatpush1.xpose.msra.mxu0 0.0
    %2774 = vmatprep.subr.mxu0 0.0
    %2775 = vmatpush1.xpose.msra.mxu0 0.0
    %2776 = vmatprep.subr.mxu0 0.0
    %2777 = vmatpush1.xpose.msra.mxu0 0.0
    %2778 = vmatprep.subr.mxu0 0.0
    %2779 = vmatpush1.xpose.msra.mxu0 0.0
    %2780 = vmatprep.subr.mxu0 0.0
    %2781 = vmatpush1.xpose.msra.mxu0 0.0
    %2782 = vmatprep.subr.mxu0 0.0
    %2783 = vmatpush1.xpose.msra.mxu0 %v2750
    %2784 = vmatprep.subr.mxu0 0.0
    %2785 = vmatpush2.xpose.msra.mxu0 0.0
    %2786 = vmatprep.subr.mxu0 0.0
    %2787 = vmatpush2.xpose.msra.mxu0 0.0
    %2788 = vmatprep.subr.mxu0 0.0
    %2789 = vmatpush2.xpose.msra.mxu0 0.0
    %2790 = vmatprep.subr.mxu0 0.0
    %2791 = vmatpush2.xpose.msra.mxu0 0.0
    %2792 = vmatprep.subr.mxu0 0.0
    %2793 = vmatpush2.xpose.msra.mxu0 0.0
    %2794 = vmatprep.subr.mxu0 0.0
    %2795 = vmatpush2.xpose.msra.mxu0 0.0
    %2796 = vmatprep.subr.mxu0 0.0
    %2797 = vmatpush2.xpose.msra.mxu0 0.0
    %2798 = vmatprep.subr.mxu0 0.0
    %2799 = vmatpush2.xpose.msra.mxu0 0.0
    %2800 = vmatprep.subr.mxu0 0.0
    %2801 = vmatpush2.xpose.msra.mxu0 0.0
    %2802 = vmatprep.subr.mxu0 0.0
    %2803 = vmatpush2.xpose.msra.mxu0 0.0
    %2804 = vmatprep.subr.mxu0 0.0
    %2805 = vmatpush2.xpose.msra.mxu0 0.0
    %2806 = vmatprep.subr.mxu0 0.0
    %2807 = vmatpush2.xpose.msra.mxu0 0.0
    %2808 = vmatprep.subr.mxu0 0.0
    %2809 = vmatpush2.xpose.msra.mxu0 0.0
    %2810 = vmatprep.subr.mxu0 0.0
    %2811 = vmatpush2.xpose.msra.mxu0 0.0
    %2812 = vmatprep.subr.mxu0 0.0
    %2813 = vmatpush2.xpose.msra.mxu0 0.0
    %2814 = vmatprep.subr.mxu0 0.0
    %2815 = vmatpush2.xpose.msra.mxu0 0.0
    %2816 = vmatprep.mubr.f32.mxu0 0.0
    %2817 = vmatmul.mubr.f32.gmra.mxu0 %v2748
    %v2818 = vpop.f32.mrf.mxu0
    %v2819 = vadd.f32 0.0, %v2818
    %v2820 = vpop.f32.mrf.mxu0
    %2821 = vdwg.mxu0
    %2822 = vrot.lane.b32.xlu0 %v2082, 96
    %v2823 = vpop.permute.xlu0 %2822
    %2824 = vrot.lane.b32.xlu0 %v2082, 32
    %v2825 = vpop.permute.xlu0 %2824
    %v2826 = vsel %vm465, %v2823, 0
    %v2828 = vsel %vm465, %v2825, 0
    %2830 = vmatprep.subr.mxu0 0.0
    %2831 = vmatpush1.xpose.msra.mxu0 0.0
    %2832 = vmatprep.subr.mxu0 0.0
    %2833 = vmatpush1.xpose.msra.mxu0 0.0
    %2834 = vmatprep.subr.mxu0 0.0
    %2835 = vmatpush1.xpose.msra.mxu0 0.0
    %2836 = vmatprep.subr.mxu0 0.0
    %2837 = vmatpush1.xpose.msra.mxu0 0.0
    %2838 = vmatprep.subr.mxu0 0.0
    %2839 = vmatpush1.xpose.msra.mxu0 0.0
    %2840 = vmatprep.subr.mxu0 0.0
    %2841 = vmatpush1.xpose.msra.mxu0 0.0
    %2842 = vmatprep.subr.mxu0 0.0
    %2843 = vmatpush1.xpose.msra.mxu0 0.0
    %2844 = vmatprep.subr.mxu0 0.0
    %2845 = vmatpush1.xpose.msra.mxu0 0.0
    %2846 = vmatprep.subr.mxu0 0.0
    %2847 = vmatpush1.xpose.msra.mxu0 0.0
    %2848 = vmatprep.subr.mxu0 0.0
    %2849 = vmatpush1.xpose.msra.mxu0 0.0
    %2850 = vmatprep.subr.mxu0 0.0
    %2851 = vmatpush1.xpose.msra.mxu0 0.0
    %2852 = vmatprep.subr.mxu0 0.0
    %2853 = vmatpush1.xpose.msra.mxu0 0.0
    %2854 = vmatprep.subr.mxu0 0.0
    %2855 = vmatpush1.xpose.msra.mxu0 0.0
    %2856 = vmatprep.subr.mxu0 0.0
    %2857 = vmatpush1.xpose.msra.mxu0 0.0
    %2858 = vmatprep.subr.mxu0 0.0
    %2859 = vmatpush1.xpose.msra.mxu0 0.0
    %2860 = vmatprep.subr.mxu0 0.0
    %2861 = vmatpush1.xpose.msra.mxu0 %v2828
    %2862 = vmatprep.subr.mxu0 0.0
    %2863 = vmatpush2.xpose.msra.mxu0 0.0
    %2864 = vmatprep.subr.mxu0 0.0
    %2865 = vmatpush2.xpose.msra.mxu0 0.0
    %2866 = vmatprep.subr.mxu0 0.0
    %2867 = vmatpush2.xpose.msra.mxu0 0.0
    %2868 = vmatprep.subr.mxu0 0.0
    %2869 = vmatpush2.xpose.msra.mxu0 0.0
    %2870 = vmatprep.subr.mxu0 0.0
    %2871 = vmatpush2.xpose.msra.mxu0 0.0
    %2872 = vmatprep.subr.mxu0 0.0
    %2873 = vmatpush2.xpose.msra.mxu0 0.0
    %2874 = vmatprep.subr.mxu0 0.0
    %2875 = vmatpush2.xpose.msra.mxu0 0.0
    %2876 = vmatprep.subr.mxu0 0.0
    %2877 = vmatpush2.xpose.msra.mxu0 0.0
    %2878 = vmatprep.subr.mxu0 0.0
    %2879 = vmatpush2.xpose.msra.mxu0 0.0
    %2880 = vmatprep.subr.mxu0 0.0
    %2881 = vmatpush2.xpose.msra.mxu0 0.0
    %2882 = vmatprep.subr.mxu0 0.0
    %2883 = vmatpush2.xpose.msra.mxu0 0.0
    %2884 = vmatprep.subr.mxu0 0.0
    %2885 = vmatpush2.xpose.msra.mxu0 0.0
    %2886 = vmatprep.subr.mxu0 0.0
    %2887 = vmatpush2.xpose.msra.mxu0 0.0
    %2888 = vmatprep.subr.mxu0 0.0
    %2889 = vmatpush2.xpose.msra.mxu0 0.0
    %2890 = vmatprep.subr.mxu0 0.0
    %2891 = vmatpush2.xpose.msra.mxu0 0.0
    %2892 = vmatprep.subr.mxu0 0.0
    %2893 = vmatpush2.xpose.msra.mxu0 0.0
    %2894 = vmatprep.mubr.f32.mxu0 0.0
    %2895 = vmatmul.mubr.f32.gmra.mxu0 %v2826
    %v2896 = vpop.f32.mrf.mxu0
    %v2897 = vadd.f32 0.0, %v2896
    %v2898 = vpop.f32.mrf.mxu0
    %2899 = vdwg.mxu0
    %v2900 = vmul.f32 %v2819, 0.25
    %v2901 = vmul.f32 %v2897, 0.25
    %v2902 = vsel %vm85, %v2900, -inf
    %2903 = vmax.xlane.f32.xlu0 %v2902
    %v2904 = vpop.xlane.xlu0 %2903
    %v2905 = vsel %vm85, %v2901, -inf
    %2906 = vmax.xlane.f32.xlu0 %v2905
    %v2907 = vpop.xlane.xlu0 %2906
    %v2908 = vsub.f32 %v2900, %v2904
    %v2909 = vsub.f32 %v2901, %v2907
    %v2910 = vmul.f32 %v2908, 1.442695
    %v2911 = vpow.pop %v2910
    %v2912 = vmul.f32 %v2909, 1.442695
    %v2913 = vpow.pop %v2912
    %v2914 = vsel %vm85, %v2911, 0.0
    %2915 = vadd.xlane.f32.xlu0 %v2914
    %v2916 = vpop.xlane.xlu0 %2915
    %v2917 = vsel %vm85, %v2913, 0.0
    %2918 = vadd.xlane.f32.xlu0 %v2917
    %v2919 = vpop.xlane.xlu0 %2918
    %v2920 = vrcp.pop %v2916
    %v2921 = vrcp.pop %v2919
    %v2922 = vmul.f32 %v2911, %v2920
    %v2923 = vmul.f32 %v2913, %v2921
    %2924 = vrot.lane.b32.xlu0 %v2078, 96
    %v2925 = vpop.permute.xlu0 %2924
    %v2928 = vsel %vm85, %v2922, 0
    %2930 = vmatprep.subr.mxu0 0.0
    %2931 = vmatpush1.msra.mxu0 0.0
    %2932 = vmatprep.subr.mxu0 0.0
    %2933 = vmatpush1.msra.mxu0 0.0
    %2934 = vmatprep.subr.mxu0 0.0
    %2935 = vmatpush1.msra.mxu0 0.0
    %2936 = vmatprep.subr.mxu0 0.0
    %2937 = vmatpush1.msra.mxu0 0.0
    %2938 = vmatprep.subr.mxu0 0.0
    %2939 = vmatpush1.msra.mxu0 0.0
    %2940 = vmatprep.subr.mxu0 0.0
    %2941 = vmatpush1.msra.mxu0 0.0
    %2942 = vmatprep.subr.mxu0 0.0
    %2943 = vmatpush1.msra.mxu0 0.0
    %2944 = vmatprep.subr.mxu0 0.0
    %2945 = vmatpush1.msra.mxu0 0.0
    %2946 = vmatprep.subr.mxu0 0.0
    %2947 = vmatpush1.msra.mxu0 0.0
    %2948 = vmatprep.subr.mxu0 0.0
    %2949 = vmatpush1.msra.mxu0 0.0
    %2950 = vmatprep.subr.mxu0 0.0
    %2951 = vmatpush1.msra.mxu0 0.0
    %2952 = vmatprep.subr.mxu0 0.0
    %2953 = vmatpush1.msra.mxu0 0.0
    %2954 = vmatprep.subr.mxu0 0.0
    %2955 = vmatpush1.msra.mxu0 0.0
    %2956 = vmatprep.subr.mxu0 0.0
    %2957 = vmatpush1.msra.mxu0 0.0
    %2958 = vmatprep.subr.mxu0 0.0
    %2959 = vmatpush1.msra.mxu0 0.0
    %2960 = vmatprep.subr.mxu0 0.0
    %2961 = vmatpush1.msra.mxu0 %v2925
    %2962 = vmatprep.subr.mxu0 0.0
    %2963 = vmatpush2.msra.mxu0 0.0
    %2964 = vmatprep.subr.mxu0 0.0
    %2965 = vmatpush2.msra.mxu0 0.0
    %2966 = vmatprep.subr.mxu0 0.0
    %2967 = vmatpush2.msra.mxu0 0.0
    %2968 = vmatprep.subr.mxu0 0.0
    %2969 = vmatpush2.msra.mxu0 0.0
    %2970 = vmatprep.subr.mxu0 0.0
    %2971 = vmatpush2.msra.mxu0 0.0
    %2972 = vmatprep.subr.mxu0 0.0
    %2973 = vmatpush2.msra.mxu0 0.0
    %2974 = vmatprep.subr.mxu0 0.0
    %2975 = vmatpush2.msra.mxu0 0.0
    %2976 = vmatprep.subr.mxu0 0.0
    %2977 = vmatpush2.msra.mxu0 0.0
    %2978 = vmatprep.subr.mxu0 0.0
    %2979 = vmatpush2.msra.mxu0 0.0
    %2980 = vmatprep.subr.mxu0 0.0
    %2981 = vmatpush2.msra.mxu0 0.0
    %2982 = vmatprep.subr.mxu0 0.0
    %2983 = vmatpush2.msra.mxu0 0.0
    %2984 = vmatprep.subr.mxu0 0.0
    %2985 = vmatpush2.msra.mxu0 0.0
    %2986 = vmatprep.subr.mxu0 0.0
    %2987 = vmatpush2.msra.mxu0 0.0
    %2988 = vmatprep.subr.mxu0 0.0
    %2989 = vmatpush2.msra.mxu0 0.0
    %2990 = vmatprep.subr.mxu0 0.0
    %2991 = vmatpush2.msra.mxu0 0.0
    %2992 = vmatprep.subr.mxu0 0.0
    %2993 = vmatpush2.msra.mxu0 0.0
    %2994 = vmatprep.mubr.f32.mxu0 0.0
    %2995 = vmatmul.mubr.f32.gmra.mxu0 %v2928
    %v2996 = vpop.f32.mrf.mxu0
    %v2997 = vadd.f32 0.0, %v2996
    %v2998 = vpop.f32.mrf.mxu0
    %2999 = vdwg.mxu0
    %3000 = vrot.lane.b32.xlu0 %v2084, 96
    %v3001 = vpop.permute.xlu0 %3000
    %v3004 = vsel %vm85, %v2923, 0
    %3006 = vmatprep.subr.mxu0 0.0
    %3007 = vmatpush1.msra.mxu0 0.0
    %3008 = vmatprep.subr.mxu0 0.0
    %3009 = vmatpush1.msra.mxu0 0.0
    %3010 = vmatprep.subr.mxu0 0.0
    %3011 = vmatpush1.msra.mxu0 0.0
    %3012 = vmatprep.subr.mxu0 0.0
    %3013 = vmatpush1.msra.mxu0 0.0
    %3014 = vmatprep.subr.mxu0 0.0
    %3015 = vmatpush1.msra.mxu0 0.0
    %3016 = vmatprep.subr.mxu0 0.0
    %3017 = vmatpush1.msra.mxu0 0.0
    %3018 = vmatprep.subr.mxu0 0.0
    %3019 = vmatpush1.msra.mxu0 0.0
    %3020 = vmatprep.subr.mxu0 0.0
    %3021 = vmatpush1.msra.mxu0 0.0
    %3022 = vmatprep.subr.mxu0 0.0
    %3023 = vmatpush1.msra.mxu0 0.0
    %3024 = vmatprep.subr.mxu0 0.0
    %3025 = vmatpush1.msra.mxu0 0.0
    %3026 = vmatprep.subr.mxu0 0.0
    %3027 = vmatpush1.msra.mxu0 0.0
    %3028 = vmatprep.subr.mxu0 0.0
    %3029 = vmatpush1.msra.mxu0 0.0
    %3030 = vmatprep.subr.mxu0 0.0
    %3031 = vmatpush1.msra.mxu0 0.0
    %3032 = vmatprep.subr.mxu0 0.0
    %3033 = vmatpush1.msra.mxu0 0.0
    %3034 = vmatprep.subr.mxu0 0.0
    %3035 = vmatpush1.msra.mxu0 0.0
    %3036 = vmatprep.subr.mxu0 0.0
    %3037 = vmatpush1.msra.mxu0 %v3001
    %3038 = vmatprep.subr.mxu0 0.0
    %3039 = vmatpush2.msra.mxu0 0.0
    %3040 = vmatprep.subr.mxu0 0.0
    %3041 = vmatpush2.msra.mxu0 0.0
    %3042 = vmatprep.subr.mxu0 0.0
    %3043 = vmatpush2.msra.mxu0 0.0
    %3044 = vmatprep.subr.mxu0 0.0
    %3045 = vmatpush2.msra.mxu0 0.0
    %3046 = vmatprep.subr.mxu0 0.0
    %3047 = vmatpush2.msra.mxu0 0.0
    %3048 = vmatprep.subr.mxu0 0.0
    %3049 = vmatpush2.msra.mxu0 0.0
    %3050 = vmatprep.subr.mxu0 0.0
    %3051 = vmatpush2.msra.mxu0 0.0
    %3052 = vmatprep.subr.mxu0 0.0
    %3053 = vmatpush2.msra.mxu0 0.0
    %3054 = vmatprep.subr.mxu0 0.0
    %3055 = vmatpush2.msra.mxu0 0.0
    %3056 = vmatprep.subr.mxu0 0.0
    %3057 = vmatpush2.msra.mxu0 0.0
    %3058 = vmatprep.subr.mxu0 0.0
    %3059 = vmatpush2.msra.mxu0 0.0
    %3060 = vmatprep.subr.mxu0 0.0
    %3061 = vmatpush2.msra.mxu0 0.0
    %3062 = vmatprep.subr.mxu0 0.0
    %3063 = vmatpush2.msra.mxu0 0.0
    %3064 = vmatprep.subr.mxu0 0.0
    %3065 = vmatpush2.msra.mxu0 0.0
    %3066 = vmatprep.subr.mxu0 0.0
    %3067 = vmatpush2.msra.mxu0 0.0
    %3068 = vmatprep.subr.mxu0 0.0
    %3069 = vmatpush2.msra.mxu0 0.0
    %3070 = vmatprep.mubr.f32.mxu0 0.0
    %3071 = vmatmul.mubr.f32.gmra.mxu0 %v3004
    %v3072 = vpop.f32.mrf.mxu0
    %v3073 = vadd.f32 0.0, %v3072
    %v3074 = vpop.f32.mrf.mxu0
    %3075 = vdwg.mxu0
    %3076 = vrot.lane.b32.xlu0 %v2076, 80
    %v3077 = vpop.permute.xlu0 %3076
    %3078 = vrot.lane.b32.xlu0 %v2076, 16
    %v3079 = vpop.permute.xlu0 %3078
    %v3080 = vsel %vm465, %v3077, 0
    %v3082 = vsel %vm465, %v3079, 0
    %3084 = vmatprep.subr.mxu0 0.0
    %3085 = vmatpush1.xpose.msra.mxu0 0.0
    %3086 = vmatprep.subr.mxu0 0.0
    %3087 = vmatpush1.xpose.msra.mxu0 0.0
    %3088 = vmatprep.subr.mxu0 0.0
    %3089 = vmatpush1.xpose.msra.mxu0 0.0
    %3090 = vmatprep.subr.mxu0 0.0
    %3091 = vmatpush1.xpose.msra.mxu0 0.0
    %3092 = vmatprep.subr.mxu0 0.0
    %3093 = vmatpush1.xpose.msra.mxu0 0.0
    %3094 = vmatprep.subr.mxu0 0.0
    %3095 = vmatpush1.xpose.msra.mxu0 0.0
    %3096 = vmatprep.subr.mxu0 0.0
    %3097 = vmatpush1.xpose.msra.mxu0 0.0
    %3098 = vmatprep.subr.mxu0 0.0
    %3099 = vmatpush1.xpose.msra.mxu0 0.0
    %3100 = vmatprep.subr.mxu0 0.0
    %3101 = vmatpush1.xpose.msra.mxu0 0.0
    %3102 = vmatprep.subr.mxu0 0.0
    %3103 = vmatpush1.xpose.msra.mxu0 0.0
    %3104 = vmatprep.subr.mxu0 0.0
    %3105 = vmatpush1.xpose.msra.mxu0 0.0
    %3106 = vmatprep.subr.mxu0 0.0
    %3107 = vmatpush1.xpose.msra.mxu0 0.0
    %3108 = vmatprep.subr.mxu0 0.0
    %3109 = vmatpush1.xpose.msra.mxu0 0.0
    %3110 = vmatprep.subr.mxu0 0.0
    %3111 = vmatpush1.xpose.msra.mxu0 0.0
    %3112 = vmatprep.subr.mxu0 0.0
    %3113 = vmatpush1.xpose.msra.mxu0 0.0
    %3114 = vmatprep.subr.mxu0 0.0
    %3115 = vmatpush1.xpose.msra.mxu0 %v3082
    %3116 = vmatprep.subr.mxu0 0.0
    %3117 = vmatpush2.xpose.msra.mxu0 0.0
    %3118 = vmatprep.subr.mxu0 0.0
    %3119 = vmatpush2.xpose.msra.mxu0 0.0
    %3120 = vmatprep.subr.mxu0 0.0
    %3121 = vmatpush2.xpose.msra.mxu0 0.0
    %3122 = vmatprep.subr.mxu0 0.0
    %3123 = vmatpush2.xpose.msra.mxu0 0.0
    %3124 = vmatprep.subr.mxu0 0.0
    %3125 = vmatpush2.xpose.msra.mxu0 0.0
    %3126 = vmatprep.subr.mxu0 0.0
    %3127 = vmatpush2.xpose.msra.mxu0 0.0
    %3128 = vmatprep.subr.mxu0 0.0
    %3129 = vmatpush2.xpose.msra.mxu0 0.0
    %3130 = vmatprep.subr.mxu0 0.0
    %3131 = vmatpush2.xpose.msra.mxu0 0.0
    %3132 = vmatprep.subr.mxu0 0.0
    %3133 = vmatpush2.xpose.msra.mxu0 0.0
    %3134 = vmatprep.subr.mxu0 0.0
    %3135 = vmatpush2.xpose.msra.mxu0 0.0
    %3136 = vmatprep.subr.mxu0 0.0
    %3137 = vmatpush2.xpose.msra.mxu0 0.0
    %3138 = vmatprep.subr.mxu0 0.0
    %3139 = vmatpush2.xpose.msra.mxu0 0.0
    %3140 = vmatprep.subr.mxu0 0.0
    %3141 = vmatpush2.xpose.msra.mxu0 0.0
    %3142 = vmatprep.subr.mxu0 0.0
    %3143 = vmatpush2.xpose.msra.mxu0 0.0
    %3144 = vmatprep.subr.mxu0 0.0
    %3145 = vmatpush2.xpose.msra.mxu0 0.0
    %3146 = vmatprep.subr.mxu0 0.0
    %3147 = vmatpush2.xpose.msra.mxu0 0.0
    %3148 = vmatprep.mubr.f32.mxu0 0.0
    %3149 = vmatmul.mubr.f32.gmra.mxu0 %v3080
    %v3150 = vpop.f32.mrf.mxu0
    %v3151 = vadd.f32 0.0, %v3150
    %v3152 = vpop.f32.mrf.mxu0
    %3153 = vdwg.mxu0
    %3154 = vrot.lane.b32.xlu0 %v2082, 80
    %v3155 = vpop.permute.xlu0 %3154
    %3156 = vrot.lane.b32.xlu0 %v2082, 16
    %v3157 = vpop.permute.xlu0 %3156
    %v3158 = vsel %vm465, %v3155, 0
    %v3160 = vsel %vm465, %v3157, 0
    %3162 = vmatprep.subr.mxu0 0.0
    %3163 = vmatpush1.xpose.msra.mxu0 0.0
    %3164 = vmatprep.subr.mxu0 0.0
    %3165 = vmatpush1.xpose.msra.mxu0 0.0
    %3166 = vmatprep.subr.mxu0 0.0
    %3167 = vmatpush1.xpose.msra.mxu0 0.0
    %3168 = vmatprep.subr.mxu0 0.0
    %3169 = vmatpush1.xpose.msra.mxu0 0.0
    %3170 = vmatprep.subr.mxu0 0.0
    %3171 = vmatpush1.xpose.msra.mxu0 0.0
    %3172 = vmatprep.subr.mxu0 0.0
    %3173 = vmatpush1.xpose.msra.mxu0 0.0
    %3174 = vmatprep.subr.mxu0 0.0
    %3175 = vmatpush1.xpose.msra.mxu0 0.0
    %3176 = vmatprep.subr.mxu0 0.0
    %3177 = vmatpush1.xpose.msra.mxu0 0.0
    %3178 = vmatprep.subr.mxu0 0.0
    %3179 = vmatpush1.xpose.msra.mxu0 0.0
    %3180 = vmatprep.subr.mxu0 0.0
    %3181 = vmatpush1.xpose.msra.mxu0 0.0
    %3182 = vmatprep.subr.mxu0 0.0
    %3183 = vmatpush1.xpose.msra.mxu0 0.0
    %3184 = vmatprep.subr.mxu0 0.0
    %3185 = vmatpush1.xpose.msra.mxu0 0.0
    %3186 = vmatprep.subr.mxu0 0.0
    %3187 = vmatpush1.xpose.msra.mxu0 0.0
    %3188 = vmatprep.subr.mxu0 0.0
    %3189 = vmatpush1.xpose.msra.mxu0 0.0
    %3190 = vmatprep.subr.mxu0 0.0
    %3191 = vmatpush1.xpose.msra.mxu0 0.0
    %3192 = vmatprep.subr.mxu0 0.0
    %3193 = vmatpush1.xpose.msra.mxu0 %v3160
    %3194 = vmatprep.subr.mxu0 0.0
    %3195 = vmatpush2.xpose.msra.mxu0 0.0
    %3196 = vmatprep.subr.mxu0 0.0
    %3197 = vmatpush2.xpose.msra.mxu0 0.0
    %3198 = vmatprep.subr.mxu0 0.0
    %3199 = vmatpush2.xpose.msra.mxu0 0.0
    %3200 = vmatprep.subr.mxu0 0.0
    %3201 = vmatpush2.xpose.msra.mxu0 0.0
    %3202 = vmatprep.subr.mxu0 0.0
    %3203 = vmatpush2.xpose.msra.mxu0 0.0
    %3204 = vmatprep.subr.mxu0 0.0
    %3205 = vmatpush2.xpose.msra.mxu0 0.0
    %3206 = vmatprep.subr.mxu0 0.0
    %3207 = vmatpush2.xpose.msra.mxu0 0.0
    %3208 = vmatprep.subr.mxu0 0.0
    %3209 = vmatpush2.xpose.msra.mxu0 0.0
    %3210 = vmatprep.subr.mxu0 0.0
    %3211 = vmatpush2.xpose.msra.mxu0 0.0
    %3212 = vmatprep.subr.mxu0 0.0
    %3213 = vmatpush2.xpose.msra.mxu0 0.0
    %3214 = vmatprep.subr.mxu0 0.0
    %3215 = vmatpush2.xpose.msra.mxu0 0.0
    %3216 = vmatprep.subr.mxu0 0.0
    %3217 = vmatpush2.xpose.msra.mxu0 0.0
    %3218 = vmatprep.subr.mxu0 0.0
    %3219 = vmatpush2.xpose.msra.mxu0 0.0
    %3220 = vmatprep.subr.mxu0 0.0
    %3221 = vmatpush2.xpose.msra.mxu0 0.0
    %3222 = vmatprep.subr.mxu0 0.0
    %3223 = vmatpush2.xpose.msra.mxu0 0.0
    %3224 = vmatprep.subr.mxu0 0.0
    %3225 = vmatpush2.xpose.msra.mxu0 0.0
    %3226 = vmatprep.mubr.f32.mxu0 0.0
    %3227 = vmatmul.mubr.f32.gmra.mxu0 %v3158
    %v3228 = vpop.f32.mrf.mxu0
    %v3229 = vadd.f32 0.0, %v3228
    %v3230 = vpop.f32.mrf.mxu0
    %3231 = vdwg.mxu0
    %v3232 = vmul.f32 %v3151, 0.25
    %v3233 = vmul.f32 %v3229, 0.25
    %v3234 = vsel %vm85, %v3232, -inf
    %3235 = vmax.xlane.f32.xlu0 %v3234
    %v3236 = vpop.xlane.xlu0 %3235
    %v3237 = vsel %vm85, %v3233, -inf
    %3238 = vmax.xlane.f32.xlu0 %v3237
    %v3239 = vpop.xlane.xlu0 %3238
    %v3240 = vsub.f32 %v3232, %v3236
    %v3241 = vsub.f32 %v3233, %v3239
    %v3242 = vmul.f32 %v3240, 1.442695
    %v3243 = vpow.pop %v3242
    %v3244 = vmul.f32 %v3241, 1.442695
    %v3245 = vpow.pop %v3244
    %v3246 = vsel %vm85, %v3243, 0.0
    %3247 = vadd.xlane.f32.xlu0 %v3246
    %v3248 = vpop.xlane.xlu0 %3247
    %v3249 = vsel %vm85, %v3245, 0.0
    %3250 = vadd.xlane.f32.xlu0 %v3249
    %v3251 = vpop.xlane.xlu0 %3250
    %v3252 = vrcp.pop %v3248
    %v3253 = vrcp.pop %v3251
    %v3254 = vmul.f32 %v3243, %v3252
    %v3255 = vmul.f32 %v3245, %v3253
    %3256 = vrot.lane.b32.xlu0 %v2078, 80
    %v3257 = vpop.permute.xlu0 %3256
    %v3260 = vsel %vm85, %v3254, 0
    %3262 = vmatprep.subr.mxu0 0.0
    %3263 = vmatpush1.msra.mxu0 0.0
    %3264 = vmatprep.subr.mxu0 0.0
    %3265 = vmatpush1.msra.mxu0 0.0
    %3266 = vmatprep.subr.mxu0 0.0
    %3267 = vmatpush1.msra.mxu0 0.0
    %3268 = vmatprep.subr.mxu0 0.0
    %3269 = vmatpush1.msra.mxu0 0.0
    %3270 = vmatprep.subr.mxu0 0.0
    %3271 = vmatpush1.msra.mxu0 0.0
    %3272 = vmatprep.subr.mxu0 0.0
    %3273 = vmatpush1.msra.mxu0 0.0
    %3274 = vmatprep.subr.mxu0 0.0
    %3275 = vmatpush1.msra.mxu0 0.0
    %3276 = vmatprep.subr.mxu0 0.0
    %3277 = vmatpush1.msra.mxu0 0.0
    %3278 = vmatprep.subr.mxu0 0.0
    %3279 = vmatpush1.msra.mxu0 0.0
    %3280 = vmatprep.subr.mxu0 0.0
    %3281 = vmatpush1.msra.mxu0 0.0
    %3282 = vmatprep.subr.mxu0 0.0
    %3283 = vmatpush1.msra.mxu0 0.0
    %3284 = vmatprep.subr.mxu0 0.0
    %3285 = vmatpush1.msra.mxu0 0.0
    %3286 = vmatprep.subr.mxu0 0.0
    %3287 = vmatpush1.msra.mxu0 0.0
    %3288 = vmatprep.subr.mxu0 0.0
    %3289 = vmatpush1.msra.mxu0 0.0
    %3290 = vmatprep.subr.mxu0 0.0
    %3291 = vmatpush1.msra.mxu0 0.0
    %3292 = vmatprep.subr.mxu0 0.0
    %3293 = vmatpush1.msra.mxu0 %v3257
    %3294 = vmatprep.subr.mxu0 0.0
    %3295 = vmatpush2.msra.mxu0 0.0
    %3296 = vmatprep.subr.mxu0 0.0
    %3297 = vmatpush2.msra.mxu0 0.0
    %3298 = vmatprep.subr.mxu0 0.0
    %3299 = vmatpush2.msra.mxu0 0.0
    %3300 = vmatprep.subr.mxu0 0.0
    %3301 = vmatpush2.msra.mxu0 0.0
    %3302 = vmatprep.subr.mxu0 0.0
    %3303 = vmatpush2.msra.mxu0 0.0
    %3304 = vmatprep.subr.mxu0 0.0
    %3305 = vmatpush2.msra.mxu0 0.0
    %3306 = vmatprep.subr.mxu0 0.0
    %3307 = vmatpush2.msra.mxu0 0.0
    %3308 = vmatprep.subr.mxu0 0.0
    %3309 = vmatpush2.msra.mxu0 0.0
    %3310 = vmatprep.subr.mxu0 0.0
    %3311 = vmatpush2.msra.mxu0 0.0
    %3312 = vmatprep.subr.mxu0 0.0
    %3313 = vmatpush2.msra.mxu0 0.0
    %3314 = vmatprep.subr.mxu0 0.0
    %3315 = vmatpush2.msra.mxu0 0.0
    %3316 = vmatprep.subr.mxu0 0.0
    %3317 = vmatpush2.msra.mxu0 0.0
    %3318 = vmatprep.subr.mxu0 0.0
    %3319 = vmatpush2.msra.mxu0 0.0
    %3320 = vmatprep.subr.mxu0 0.0
    %3321 = vmatpush2.msra.mxu0 0.0
    %3322 = vmatprep.subr.mxu0 0.0
    %3323 = vmatpush2.msra.mxu0 0.0
    %3324 = vmatprep.subr.mxu0 0.0
    %3325 = vmatpush2.msra.mxu0 0.0
    %3326 = vmatprep.mubr.f32.mxu0 0.0
    %3327 = vmatmul.mubr.f32.gmra.mxu0 %v3260
    %v3328 = vpop.f32.mrf.mxu0
    %v3329 = vadd.f32 0.0, %v3328
    %v3330 = vpop.f32.mrf.mxu0
    %3331 = vdwg.mxu0
    %3332 = vrot.lane.b32.xlu0 %v2084, 80
    %v3333 = vpop.permute.xlu0 %3332
    %v3336 = vsel %vm85, %v3255, 0
    %3338 = vmatprep.subr.mxu0 0.0
    %3339 = vmatpush1.msra.mxu0 0.0
    %3340 = vmatprep.subr.mxu0 0.0
    %3341 = vmatpush1.msra.mxu0 0.0
    %3342 = vmatprep.subr.mxu0 0.0
    %3343 = vmatpush1.msra.mxu0 0.0
    %3344 = vmatprep.subr.mxu0 0.0
    %3345 = vmatpush1.msra.mxu0 0.0
    %3346 = vmatprep.subr.mxu0 0.0
    %3347 = vmatpush1.msra.mxu0 0.0
    %3348 = vmatprep.subr.mxu0 0.0
    %3349 = vmatpush1.msra.mxu0 0.0
    %3350 = vmatprep.subr.mxu0 0.0
    %3351 = vmatpush1.msra.mxu0 0.0
    %3352 = vmatprep.subr.mxu0 0.0
    %3353 = vmatpush1.msra.mxu0 0.0
    %3354 = vmatprep.subr.mxu0 0.0
    %3355 = vmatpush1.msra.mxu0 0.0
    %3356 = vmatprep.subr.mxu0 0.0
    %3357 = vmatpush1.msra.mxu0 0.0
    %3358 = vmatprep.subr.mxu0 0.0
    %3359 = vmatpush1.msra.mxu0 0.0
    %3360 = vmatprep.subr.mxu0 0.0
    %3361 = vmatpush1.msra.mxu0 0.0
    %3362 = vmatprep.subr.mxu0 0.0
    %3363 = vmatpush1.msra.mxu0 0.0
    %3364 = vmatprep.subr.mxu0 0.0
    %3365 = vmatpush1.msra.mxu0 0.0
    %3366 = vmatprep.subr.mxu0 0.0
    %3367 = vmatpush1.msra.mxu0 0.0
    %3368 = vmatprep.subr.mxu0 0.0
    %3369 = vmatpush1.msra.mxu0 %v3333
    %3370 = vmatprep.subr.mxu0 0.0
    %3371 = vmatpush2.msra.mxu0 0.0
    %3372 = vmatprep.subr.mxu0 0.0
    %3373 = vmatpush2.msra.mxu0 0.0
    %3374 = vmatprep.subr.mxu0 0.0
    %3375 = vmatpush2.msra.mxu0 0.0
    %3376 = vmatprep.subr.mxu0 0.0
    %3377 = vmatpush2.msra.mxu0 0.0
    %3378 = vmatprep.subr.mxu0 0.0
    %3379 = vmatpush2.msra.mxu0 0.0
    %3380 = vmatprep.subr.mxu0 0.0
    %3381 = vmatpush2.msra.mxu0 0.0
    %3382 = vmatprep.subr.mxu0 0.0
    %3383 = vmatpush2.msra.mxu0 0.0
    %3384 = vmatprep.subr.mxu0 0.0
    %3385 = vmatpush2.msra.mxu0 0.0
    %3386 = vmatprep.subr.mxu0 0.0
    %3387 = vmatpush2.msra.mxu0 0.0
    %3388 = vmatprep.subr.mxu0 0.0
    %3389 = vmatpush2.msra.mxu0 0.0
    %3390 = vmatprep.subr.mxu0 0.0
    %3391 = vmatpush2.msra.mxu0 0.0
    %3392 = vmatprep.subr.mxu0 0.0
    %3393 = vmatpush2.msra.mxu0 0.0
    %3394 = vmatprep.subr.mxu0 0.0
    %3395 = vmatpush2.msra.mxu0 0.0
    %3396 = vmatprep.subr.mxu0 0.0
    %3397 = vmatpush2.msra.mxu0 0.0
    %3398 = vmatprep.subr.mxu0 0.0
    %3399 = vmatpush2.msra.mxu0 0.0
    %3400 = vmatprep.subr.mxu0 0.0
    %3401 = vmatpush2.msra.mxu0 0.0
    %3402 = vmatprep.mubr.f32.mxu0 0.0
    %3403 = vmatmul.mubr.f32.gmra.mxu0 %v3336
    %v3404 = vpop.f32.mrf.mxu0
    %v3405 = vadd.f32 0.0, %v3404
    %v3406 = vpop.f32.mrf.mxu0
    %3407 = vdwg.mxu0
    %3410 = vrot.lane.b32.xlu0 %v2664, 16
    %v3411 = vpop.permute.xlu0 %3410
    %3412 = vrot.lane.b32.xlu0 %v2741, 16
    %v3413 = vpop.permute.xlu0 %3412
    %3418 = vrot.lane.b32.xlu0 %v2997, 32
    %v3419 = vpop.permute.xlu0 %3418
    %3420 = vrot.lane.b32.xlu0 %v3073, 32
    %v3421 = vpop.permute.xlu0 %3420
    %3426 = vrot.lane.b32.xlu0 %v3329, 48
    %v3427 = vpop.permute.xlu0 %3426
    %3428 = vrot.lane.b32.xlu0 %v3405, 48
    %v3429 = vpop.permute.xlu0 %3428
    %v3432 = vsel %vm465, %v2334, %v3411
    %v3433 = vsel %vm465, %v2407, %v3413
    %v3434 = vsel %vm251, %v3432, %v3419
    %v3435 = vsel %vm251, %v3433, %v3421
    %v3436 = vsel %vm1813, %v3434, %v3427
    %v3437 = vsel %vm1813, %v3435, %v3429
    %s3438 = scalar_lea.vmem [#allocation4], 64
    %v3439 = vld [vmem:[%s3438] sm:$0xff]
    %v3440 = vld [vmem:[%s3438 + $0x8] sm:$0xff]
    %v3441 = vld [vmem:[%s3438 + $0x10] sm:$0xff]
    %v3442 = vld [vmem:[%s3438 + $0x18] sm:$0xff]
    %v3443 = vld [vmem:[%s3438 + $0x20] sm:$0xff]
    %v3444 = vld [vmem:[%s3438 + $0x28] sm:$0xff]
    %v3445 = vld [vmem:[%s3438 + $0x30] sm:$0xff]
    %v3446 = vld [vmem:[%s3438 + $0x38] sm:$0xff]
    %s3447 = scalar_lea.vmem %s9, 1
    %v3448 = vld [vmem:[%s3447] sm:$0x1]
    %v3450 = vlaneseq
    %v3451 = vshrl.u32 %v3450, 7
    %v3452 = vsub.s32 0, %v3451
    %v3453 = vrot.slane %v3448, %v3452
    %v3456 = vsel %vm1831, %v3436, 0
    %v3459 = vsel %vm1831, %v3437, 0
    %3461 = vmatprep.subr.mxu0 0.0
    %3462 = vmatpush1.msra.mxu0 0.0
    %3463 = vmatprep.subr.mxu0 0.0
    %3464 = vmatpush1.msra.mxu0 0.0
    %3465 = vmatprep.subr.mxu0 0.0
    %3466 = vmatpush1.msra.mxu0 0.0
    %3467 = vmatprep.subr.mxu0 0.0
    %3468 = vmatpush1.msra.mxu0 0.0
    %3469 = vmatprep.subr.mxu0 0.0
    %3470 = vmatpush1.msra.mxu0 0.0
    %3471 = vmatprep.subr.mxu0 0.0
    %3472 = vmatpush1.msra.mxu0 0.0
    %3473 = vmatprep.subr.mxu0 0.0
    %3474 = vmatpush1.msra.mxu0 0.0
    %3475 = vmatprep.subr.mxu0 0.0
    %3476 = vmatpush1.msra.mxu0 0.0
    %3477 = vmatprep.subr.mxu0 0.0
    %3478 = vmatpush1.msra.mxu0 %v3446
    %3479 = vmatprep.subr.mxu0 0.0
    %3480 = vmatpush1.msra.mxu0 %v3445
    %3481 = vmatprep.subr.mxu0 0.0
    %3482 = vmatpush1.msra.mxu0 %v3444
    %3483 = vmatprep.subr.mxu0 0.0
    %3484 = vmatpush1.msra.mxu0 %v3443
    %3485 = vmatprep.subr.mxu0 0.0
    %3486 = vmatpush1.msra.mxu0 %v3442
    %3487 = vmatprep.subr.mxu0 0.0
    %3488 = vmatpush1.msra.mxu0 %v3441
    %3489 = vmatprep.subr.mxu0 0.0
    %3490 = vmatpush1.msra.mxu0 %v3440
    %3491 = vmatprep.subr.mxu0 0.0
    %3492 = vmatpush1.msra.mxu0 %v3439
    %3493 = vmatprep.subr.mxu0 0.0
    %3494 = vmatpush2.msra.mxu0 0.0
    %3495 = vmatprep.subr.mxu0 0.0
    %3496 = vmatpush2.msra.mxu0 0.0
    %3497 = vmatprep.subr.mxu0 0.0
    %3498 = vmatpush2.msra.mxu0 0.0
    %3499 = vmatprep.subr.mxu0 0.0
    %3500 = vmatpush2.msra.mxu0 0.0
    %3501 = vmatprep.subr.mxu0 0.0
    %3502 = vmatpush2.msra.mxu0 0.0
    %3503 = vmatprep.subr.mxu0 0.0
    %3504 = vmatpush2.msra.mxu0 0.0
    %3505 = vmatprep.subr.mxu0 0.0
    %3506 = vmatpush2.msra.mxu0 0.0
    %3507 = vmatprep.subr.mxu0 0.0
    %3508 = vmatpush2.msra.mxu0 0.0
    %3509 = vmatprep.subr.mxu0 0.0
    %3510 = vmatpush2.msra.mxu0 0.0
    %3511 = vmatprep.subr.mxu0 0.0
    %3512 = vmatpush2.msra.mxu0 0.0
    %3513 = vmatprep.subr.mxu0 0.0
    %3514 = vmatpush2.msra.mxu0 0.0
    %3515 = vmatprep.subr.mxu0 0.0
    %3516 = vmatpush2.msra.mxu0 0.0
    %3517 = vmatprep.subr.mxu0 0.0
    %3518 = vmatpush2.msra.mxu0 0.0
    %3519 = vmatprep.subr.mxu0 0.0
    %3520 = vmatpush2.msra.mxu0 0.0
    %3521 = vmatprep.subr.mxu0 0.0
    %3522 = vmatpush2.msra.mxu0 0.0
    %3523 = vmatprep.subr.mxu0 0.0
    %3524 = vmatpush2.msra.mxu0 0.0
    %3525 = vmatprep.mubr.f32.mxu0 0.0
    %3526 = vmatmul.mubr.f32.gmra.mxu0 %v3456
    %v3527 = vpop.f32.mrf.mxu0
    %v3528 = vadd.f32 %v3453, %v3527
    %v3529 = vpop.f32.mrf.mxu0
    %3530 = vmatprep.mubr.f32.mxu0 0.0
    %3531 = vmatmul.mubr.f32.gmra.mxu0 %v3459
    %v3532 = vpop.f32.mrf.mxu0
    %v3533 = vadd.f32 %v3453, %v3532
    %v3534 = vpop.f32.mrf.mxu0
    %3535 = vdwg.mxu0
    %v3536 = vmul.f32 %v3528, 0.5
    %v3537 = vmul.f32 %v3533, 0.5
    %v3538 = vmul.f32 %v3528, 0.70710677
    %v3539 = vmul.f32 %v3533, 0.70710677
    %v3540 = vand.u32 2147483647, %v3538
    %v3541 = vand.u32 2147483647, %v3539
    %v3542 = vmul.f32 %v3540, 0.3275911
    %v3543 = vmul.f32 %v3541, 0.3275911
    %v3544 = vadd.f32 %v3542, 1.0
    %v3545 = vadd.f32 %v3543, 1.0
    %v3546 = vrcp.pop %v3544
    %v3547 = vmul.f32 1.0, %v3546
    %v3548 = vrcp.pop %v3545
    %v3549 = vmul.f32 1.0, %v3548
    %v3550 = vmul.f32 %v3547, 1.0614054
    %v3551 = vmul.f32 %v3549, 1.0614054
    %v3552 = vadd.f32 %v3550, -1.4531521
    %v3553 = vadd.f32 %v3551, -1.4531521
    %v3554 = vmul.f32 %v3552, %v3547
    %v3555 = vmul.f32 %v3553, %v3549
    %v3556 = vadd.f32 %v3554, 1.4214138
    %v3557 = vadd.f32 %v3555, 1.4214138
    %v3558 = vmul.f32 %v3556, %v3547
    %v3559 = vmul.f32 %v3557, %v3549
    %v3560 = vadd.f32 %v3558, -0.28449672
    %v3561 = vadd.f32 %v3559, -0.28449672
    %v3562 = vmul.f32 %v3560, %v3547
    %v3563 = vmul.f32 %v3561, %v3549
    %v3564 = vadd.f32 %v3562, 0.2548296
    %v3565 = vadd.f32 %v3563, 0.2548296
    %v3566 = vmul.f32 %v3564, %v3547
    %v3567 = vmul.f32 %v3565, %v3549
    %v3568 = vsub.f32 0.0, %v3540
    %v3569 = vsub.f32 0.0, %v3541
    %v3570 = vmul.f32 %v3568, %v3540
    %v3571 = vmul.f32 %v3569, %v3541
    %v3572 = vmul.f32 %v3570, 1.442695
    %v3573 = vpow.pop %v3572
    %v3574 = vmul.f32 %v3571, 1.442695
    %v3575 = vpow.pop %v3574
    %v3576 = vmul.f32 %v3566, %v3573
    %v3577 = vmul.f32 %v3567, %v3575
    %v3578 = vsub.f32 1.0, %v3576
    %v3579 = vsub.f32 1.0, %v3577
    %vm3580 = vcmp.lt.f32.partialorder %v3538, 0.0
    %vm3581 = vcmp.lt.f32.partialorder %v3539, 0.0
    %v3582 = vsub.f32 0.0, %v3578
    %v3583 = vsub.f32 0.0, %v3579
    %v3584 = vsel %vm3580, %v3582, %v3578
    %v3585 = vsel %vm3581, %v3583, %v3579
    %v3586 = vadd.f32 %v3584, 1.0
    %v3587 = vadd.f32 %v3585, 1.0
    %v3588 = vmul.f32 %v3536, %v3586
    %v3589 = vmul.f32 %v3537, %v3587
    %v3590 = vadd.f32 %v1971, %v3588
    %v3591 = vadd.f32 %v1972, %v3589
    %v3592 = vmul.f32 %v3590, 0.70710677
    %v3593 = vmul.f32 %v3591, 0.70710677
    %v3594 = vld [vmem:[%s10] sm:$0xff]
    %v3595 = vld [vmem:[%s10 + $0x8] sm:$0xff]
    %v3596 = vld [vmem:[%s10 + $0x10] sm:$0xff]
    %v3597 = vld [vmem:[%s10 + $0x18] sm:$0xff]
    %v3598 = vld [vmem:[%s11] sm:$0x1]
    %v3600 = vlaneseq
    %v3601 = vshrl.u32 %v3600, 7
    %v3602 = vsub.s32 0, %v3601
    %v3603 = vrot.slane %v3598, %v3602
    %3607 = vrot.lane.b32.xlu0 %v3592, 96
    %v3608 = vpop.permute.xlu0 %3607
    %3609 = vrot.lane.b32.xlu0 %v3593, 96
    %v3610 = vpop.permute.xlu0 %3609
    %v3611 = vsel %vm251, %v3608, 0
    %v3613 = vsel %vm251, %v3610, 0
    %3615 = vmatprep.subr.mxu0 0.0
    %3616 = vmatpush1.msra.mxu0 0.0
    %3617 = vmatprep.subr.mxu0 0.0
    %3618 = vmatpush1.msra.mxu0 0.0
    %3619 = vmatprep.subr.mxu0 0.0
    %3620 = vmatpush1.msra.mxu0 0.0
    %3621 = vmatprep.subr.mxu0 0.0
    %3622 = vmatpush1.msra.mxu0 0.0
    %3623 = vmatprep.subr.mxu0 0.0
    %3624 = vmatpush1.msra.mxu0 0.0
    %3625 = vmatprep.subr.mxu0 0.0
    %3626 = vmatpush1.msra.mxu0 0.0
    %3627 = vmatprep.subr.mxu0 0.0
    %3628 = vmatpush1.msra.mxu0 0.0
    %3629 = vmatprep.subr.mxu0 0.0
    %3630 = vmatpush1.msra.mxu0 0.0
    %3631 = vmatprep.subr.mxu0 0.0
    %3632 = vmatpush1.msra.mxu0 0.0
    %3633 = vmatprep.subr.mxu0 0.0
    %3634 = vmatpush1.msra.mxu0 0.0
    %3635 = vmatprep.subr.mxu0 0.0
    %3636 = vmatpush1.msra.mxu0 0.0
    %3637 = vmatprep.subr.mxu0 0.0
    %3638 = vmatpush1.msra.mxu0 0.0
    %3639 = vmatprep.subr.mxu0 0.0
    %3640 = vmatpush1.msra.mxu0 %v3597
    %3641 = vmatprep.subr.mxu0 0.0
    %3642 = vmatpush1.msra.mxu0 %v3596
    %3643 = vmatprep.subr.mxu0 0.0
    %3644 = vmatpush1.msra.mxu0 %v3595
    %3645 = vmatprep.subr.mxu0 0.0
    %3646 = vmatpush1.msra.mxu0 %v3594
    %3647 = vmatprep.subr.mxu0 0.0
    %3648 = vmatpush2.msra.mxu0 0.0
    %3649 = vmatprep.subr.mxu0 0.0
    %3650 = vmatpush2.msra.mxu0 0.0
    %3651 = vmatprep.subr.mxu0 0.0
    %3652 = vmatpush2.msra.mxu0 0.0
    %3653 = vmatprep.subr.mxu0 0.0
    %3654 = vmatpush2.msra.mxu0 0.0
    %3655 = vmatprep.subr.mxu0 0.0
    %3656 = vmatpush2.msra.mxu0 0.0
    %3657 = vmatprep.subr.mxu0 0.0
    %3658 = vmatpush2.msra.mxu0 0.0
    %3659 = vmatprep.subr.mxu0 0.0
    %3660 = vmatpush2.msra.mxu0 0.0
    %3661 = vmatprep.subr.mxu0 0.0
    %3662 = vmatpush2.msra.mxu0 0.0
    %3663 = vmatprep.subr.mxu0 0.0
    %3664 = vmatpush2.msra.mxu0 0.0
    %3665 = vmatprep.subr.mxu0 0.0
    %3666 = vmatpush2.msra.mxu0 0.0
    %3667 = vmatprep.subr.mxu0 0.0
    %3668 = vmatpush2.msra.mxu0 0.0
    %3669 = vmatprep.subr.mxu0 0.0
    %3670 = vmatpush2.msra.mxu0 0.0
    %3671 = vmatprep.subr.mxu0 0.0
    %3672 = vmatpush2.msra.mxu0 0.0
    %3673 = vmatprep.subr.mxu0 0.0
    %3674 = vmatpush2.msra.mxu0 0.0
    %3675 = vmatprep.subr.mxu0 0.0
    %3676 = vmatpush2.msra.mxu0 0.0
    %3677 = vmatprep.subr.mxu0 0.0
    %3678 = vmatpush2.msra.mxu0 0.0
    %3679 = vmatprep.mubr.f32.mxu0 0.0
    %3680 = vmatmul.mubr.f32.gmra.mxu0 %v3611
    %v3681 = vpop.f32.mrf.mxu0
    %v3682 = vadd.f32 %v3603, %v3681
    %v3683 = vpop.f32.mrf.mxu0
    %3684 = vmatprep.mubr.f32.mxu0 0.0
    %3685 = vmatmul.mubr.f32.gmra.mxu0 %v3613
    %v3686 = vpop.f32.mrf.mxu0
    %v3687 = vadd.f32 %v3603, %v3686
    %v3688 = vpop.f32.mrf.mxu0
    %3689 = vdwg.mxu0
    %v3690 = vmul.f32 %v3682, 0.5
    %v3691 = vmul.f32 %v3687, 0.5
    %v3692 = vmul.f32 %v3682, 0.70710677
    %v3693 = vmul.f32 %v3687, 0.70710677
    %v3694 = vand.u32 2147483647, %v3692
    %v3695 = vand.u32 2147483647, %v3693
    %v3696 = vmul.f32 %v3694, 0.3275911
    %v3697 = vmul.f32 %v3695, 0.3275911
    %v3698 = vadd.f32 %v3696, 1.0
    %v3699 = vadd.f32 %v3697, 1.0
    %v3700 = vrcp.pop %v3698
    %v3701 = vmul.f32 1.0, %v3700
    %v3702 = vrcp.pop %v3699
    %v3703 = vmul.f32 1.0, %v3702
    %v3704 = vmul.f32 %v3701, 1.0614054
    %v3705 = vmul.f32 %v3703, 1.0614054
    %v3706 = vadd.f32 %v3704, -1.4531521
    %v3707 = vadd.f32 %v3705, -1.4531521
    %v3708 = vmul.f32 %v3706, %v3701
    %v3709 = vmul.f32 %v3707, %v3703
    %v3710 = vadd.f32 %v3708, 1.4214138
    %v3711 = vadd.f32 %v3709, 1.4214138
    %v3712 = vmul.f32 %v3710, %v3701
    %v3713 = vmul.f32 %v3711, %v3703
    %v3714 = vadd.f32 %v3712, -0.28449672
    %v3715 = vadd.f32 %v3713, -0.28449672
    %v3716 = vmul.f32 %v3714, %v3701
    %v3717 = vmul.f32 %v3715, %v3703
    %v3718 = vadd.f32 %v3716, 0.2548296
    %v3719 = vadd.f32 %v3717, 0.2548296
    %v3720 = vmul.f32 %v3718, %v3701
    %v3721 = vmul.f32 %v3719, %v3703
    %v3722 = vsub.f32 0.0, %v3694
    %v3723 = vsub.f32 0.0, %v3695
    %v3724 = vmul.f32 %v3722, %v3694
    %v3725 = vmul.f32 %v3723, %v3695
    %v3726 = vmul.f32 %v3724, 1.442695
    %v3727 = vpow.pop %v3726
    %v3728 = vmul.f32 %v3725, 1.442695
    %v3729 = vpow.pop %v3728
    %v3730 = vmul.f32 %v3720, %v3727
    %v3731 = vmul.f32 %v3721, %v3729
    %v3732 = vsub.f32 1.0, %v3730
    %v3733 = vsub.f32 1.0, %v3731
    %vm3734 = vcmp.lt.f32.partialorder %v3692, 0.0
    %vm3735 = vcmp.lt.f32.partialorder %v3693, 0.0
    %v3736 = vsub.f32 0.0, %v3732
    %v3737 = vsub.f32 0.0, %v3733
    %v3738 = vsel %vm3734, %v3736, %v3732
    %v3739 = vsel %vm3735, %v3737, %v3733
    %v3740 = vadd.f32 %v3738, 1.0
    %v3741 = vadd.f32 %v3739, 1.0
    %v3742 = vmul.f32 %v3690, %v3740
    %v3743 = vmul.f32 %v3691, %v3741
    %v3744 = vld [vmem:[%s12] sm:$0xff]
    %v3745 = vld [vmem:[%s13] sm:$0xff]
    %3747 = vset.pattern.permute.xlu0 0
    %3748 = vperm.xlu0 %3747, %v3745
    %v3749 = vpop.permute.xlu0 %3748
    %v3752 = vsel %vm251, %v3744, 0
    %v3755 = vsel %vm251, %v3742, 0
    %v3758 = vsel %vm251, %v3743, 0
    %3760 = vmatprep.subr.mxu0 0.0
    %3761 = vmatpush1.xpose.msra.mxu0 0.0
    %3762 = vmatprep.subr.mxu0 0.0
    %3763 = vmatpush1.xpose.msra.mxu0 0.0
    %3764 = vmatprep.subr.mxu0 0.0
    %3765 = vmatpush1.xpose.msra.mxu0 0.0
    %3766 = vmatprep.subr.mxu0 0.0
    %3767 = vmatpush1.xpose.msra.mxu0 0.0
    %3768 = vmatprep.subr.mxu0 0.0
    %3769 = vmatpush1.xpose.msra.mxu0 0.0
    %3770 = vmatprep.subr.mxu0 0.0
    %3771 = vmatpush1.xpose.msra.mxu0 0.0
    %3772 = vmatprep.subr.mxu0 0.0
    %3773 = vmatpush1.xpose.msra.mxu0 0.0
    %3774 = vmatprep.subr.mxu0 0.0
    %3775 = vmatpush1.xpose.msra.mxu0 0.0
    %3776 = vmatprep.subr.mxu0 0.0
    %3777 = vmatpush1.xpose.msra.mxu0 0.0
    %3778 = vmatprep.subr.mxu0 0.0
    %3779 = vmatpush1.xpose.msra.mxu0 0.0
    %3780 = vmatprep.subr.mxu0 0.0
    %3781 = vmatpush1.xpose.msra.mxu0 0.0
    %3782 = vmatprep.subr.mxu0 0.0
    %3783 = vmatpush1.xpose.msra.mxu0 0.0
    %3784 = vmatprep.subr.mxu0 0.0
    %3785 = vmatpush1.xpose.msra.mxu0 0.0
    %3786 = vmatprep.subr.mxu0 0.0
    %3787 = vmatpush1.xpose.msra.mxu0 0.0
    %3788 = vmatprep.subr.mxu0 0.0
    %3789 = vmatpush1.xpose.msra.mxu0 %v3758
    %3790 = vmatprep.subr.mxu0 0.0
    %3791 = vmatpush1.xpose.msra.mxu0 %v3755
    %3792 = vmatprep.subr.mxu0 0.0
    %3793 = vmatpush2.xpose.msra.mxu0 0.0
    %3794 = vmatprep.subr.mxu0 0.0
    %3795 = vmatpush2.xpose.msra.mxu0 0.0
    %3796 = vmatprep.subr.mxu0 0.0
    %3797 = vmatpush2.xpose.msra.mxu0 0.0
    %3798 = vmatprep.subr.mxu0 0.0
    %3799 = vmatpush2.xpose.msra.mxu0 0.0
    %3800 = vmatprep.subr.mxu0 0.0
    %3801 = vmatpush2.xpose.msra.mxu0 0.0
    %3802 = vmatprep.subr.mxu0 0.0
    %3803 = vmatpush2.xpose.msra.mxu0 0.0
    %3804 = vmatprep.subr.mxu0 0.0
    %3805 = vmatpush2.xpose.msra.mxu0 0.0
    %3806 = vmatprep.subr.mxu0 0.0
    %3807 = vmatpush2.xpose.msra.mxu0 0.0
    %3808 = vmatprep.subr.mxu0 0.0
    %3809 = vmatpush2.xpose.msra.mxu0 0.0
    %3810 = vmatprep.subr.mxu0 0.0
    %3811 = vmatpush2.xpose.msra.mxu0 0.0
    %3812 = vmatprep.subr.mxu0 0.0
    %3813 = vmatpush2.xpose.msra.mxu0 0.0
    %3814 = vmatprep.subr.mxu0 0.0
    %3815 = vmatpush2.xpose.msra.mxu0 0.0
    %3816 = vmatprep.subr.mxu0 0.0
    %3817 = vmatpush2.xpose.msra.mxu0 0.0
    %3818 = vmatprep.subr.mxu0 0.0
    %3819 = vmatpush2.xpose.msra.mxu0 0.0
    %3820 = vmatprep.subr.mxu0 0.0
    %3821 = vmatpush2.xpose.msra.mxu0 0.0
    %3822 = vmatprep.subr.mxu0 0.0
    %3823 = vmatpush2.xpose.msra.mxu0 0.0
    %3824 = vmatprep.mubr.f32.mxu0 0.0
    %3825 = vmatmul.mubr.f32.gmra.mxu0 %v3752
    %v3826 = vpop.f32.mrf.mxu0
    %v3827 = vadd.f32 %v3749, %v3826
    %v3828 = vpop.f32.mrf.mxu0
    %3829 = vdwg.mxu0
    %3830 = vst.msk [vmem:[%s14] sm:$0xff] %vm465, %v3827
    // Predicated region
    $region66: #{new_attention_model_forward.1} parent=1 // pred_check
      _
    $region67: #{new_attention_model_forward.1} parent=1 // pred_check_branch
      %3832 = sbr.rel (0) target = $region69
    $region68: #{new_attention_model_forward.1} parent=1 // pred_region
      _
    $region69: #{new_attention_model_forward.1} parent=1 // pred_fallthru
      _
    // Predicated region
    $region70: #{new_attention_model_forward.1} parent=1 // pred_check
      _
    $region71: #{new_attention_model_forward.1} parent=1 // pred_check_branch
      %3834 = sbr.rel (0) target = $region73
    $region72: #{new_attention_model_forward.1} parent=1 // pred_region
      _
    $region73: #{new_attention_model_forward.1} parent=1 // pred_fallthru
      _
    %3835 = vsyncpa [#allocation3], 1
    %3836 = vsyncpa [#allocation5], 1

</llo_original>
